<compile_context>
chip_gen: v7x
topology: tpu7x:2x2x1
jax: 0.10.0
libtpu: 0.0.40
codegen_flags: <defaults>
</compile_context>

<pallas_src>
import functools

import jax
import jax.numpy as jnp
import numpy as np
from jax import lax
from jax.experimental import pallas as pl
from jax.experimental.pallas import tpu as pltpu


def _coord_maxpool_kernel(x_ref, sel_ref, base_ref, o_ref, *, k, L, with_r,
                          cy, cx):
    # x_ref:    (TN, H*W)      input planes, flat & lane-dense
    # sel_ref:  (k*k, H*W, L)  one-hot gather matrices, j = kh*k + kw
    # base_ref: (2, L)         row 0: ph*s, row 1: pw*s per flat output pos
    # o_ref:    (TN, OC*L)     [pooled | y | x | (r)] lane-concatenated
    xv = x_ref[...].astype(jnp.float32)               # (TN, HW)
    hp = lax.Precision.HIGHEST                        # exact one-hot selection

    best = bkh = bkw = None
    for kh in range(k):
        for kw in range(k):
            j = kh * k + kw
            cand = jnp.dot(xv, sel_ref[j], precision=hp,
                           preferred_element_type=jnp.float32)   # (TN, L)
            if j == 0:
                best = cand
                bkh = jnp.zeros_like(cand)
                bkw = jnp.zeros_like(cand)
            else:
                gt = cand > best          # strict: first (row-major) max wins
                best = jnp.where(gt, cand, best)
                if kh > 0:                # bkh is already 0 everywhere on row 0
                    bkh = jnp.where(gt, jnp.float32(kh), bkh)
                bkw = jnp.where(gt, jnp.float32(kw), bkw)

    yb = base_ref[0:1, :]                 # (1, L): ph*s
    xb = base_ref[1:2, :]                 # (1, L): pw*s
    yc = (yb + bkh) * cy - 1.0
    xc = (xb + bkw) * cx - 1.0

    o_ref[:, 0 * L:1 * L] = best
    o_ref[:, 1 * L:2 * L] = yc
    o_ref[:, 2 * L:3 * L] = xc
    if with_r:
        o_ref[:, 3 * L:4 * L] = jnp.sqrt(yc * yc + xc * xc)


def coord_max_pool_2d_per_channel(x, kernel_size, stride=None, with_r=False):
    """Pallas implementation of CoordMaxPool2dPerChannel.forward (NCHW input)."""
    if stride is None:
        stride = kernel_size
    k, s = int(kernel_size), int(stride)
    B, C, H, W = x.shape
    PH = (H - k) // s + 1
    PW = (W - k) // s + 1
    L = PH * PW
    HW = H * W
    N = B * C
    OC = 4 if with_r else 3
    KK = k * k

    # Flat planes; the reshape is free (contiguous).  Cast happens in-kernel.
    xf = x.reshape(N, HW)
    itemsize = np.dtype(xf.dtype).itemsize

    # Tiny constant one-hot gather matrices and coordinate bases (host-built).
    ph = np.arange(PH)
    pw = np.arange(PW)
    lidx = (ph[:, None] * PW + pw[None, :]).reshape(-1)          # == arange(L)
    sel = np.zeros((KK, HW, L), np.float32)
    for kh in range(k):
        for kw in range(k):
            src = ((ph[:, None] * s + kh) * W +
                   (pw[None, :] * s + kw)).reshape(-1)           # (L,)
            sel[kh * k + kw, src, lidx] = 1.0
    base = np.stack([np.repeat(ph * s, PW), np.tile(pw * s, PH)]
                    ).astype(np.float32)                         # (2, L)
    sel = jnp.asarray(sel)
    base = jnp.asarray(base)

    # --- tile size: big blocks, bounded by a conservative VMEM budget -------
    fixed = 2 * (KK * HW * L * 4 + 2 * L * 4)          # selectors + bases (2x buffered)
    per_plane = 2 * (HW * itemsize + OC * L * 4)       # double-buffered in + out
    budget = 12 * 1024 * 1024                          # < scoped default on all gens
    cap = (budget - fixed) // per_plane if budget > fixed else 8
    cap = max(8, min(512, int(cap)))
    cap = (cap // 8) * 8 or 8
    num_blocks = max(1, -(-N // cap))
    TN = -(-(-(-N // num_blocks)) // 8) * 8            # ceil(N/blocks) -> mult of 8
    N_pad = TN * num_blocks
    if N_pad > N:
        xf = jnp.pad(xf, ((0, N_pad - N), (0, 0)))
    grid = (N_pad // TN,)

    # Normalization constants (precomputed reciprocals -> multiplies in-kernel).
    cy = 2.0 / (H - 1) if H > 1 else 0.0
    cx = 2.0 / (W - 1) if W > 1 else 0.0

    kernel = functools.partial(_coord_maxpool_kernel, k=k, L=L, with_r=with_r,
                               cy=cy, cx=cx)

    out = pl.pallas_call(
        kernel,
        out_shape=jax.ShapeDtypeStruct((N_pad, OC * L), jnp.float32),
        grid_spec=pltpu.PrefetchScalarGridSpec(
            num_scalar_prefetch=0,
            grid=grid,
            in_specs=[
                pl.BlockSpec((TN, HW), lambda n: (n, 0)),
                pl.BlockSpec((KK, HW, L), lambda n: (0, 0, 0)),
                pl.BlockSpec((2, L), lambda n: (0, 0)),
            ],
            out_specs=pl.BlockSpec((TN, OC * L), lambda n: (n, 0)),
        ),
        compiler_params=pltpu.CompilerParams(
            dimension_semantics=("parallel",)),
    )(xf, sel, base)

    if N_pad > N:
        out = out[:N]
    # Free reshape to the module's (B, C, OC, PH*PW) layout.
    return out.reshape(B, C, OC, L)


def _reference(x, kernel_size, stride=None, with_r=False):
    """Pure-JAX reference mirroring the PyTorch module semantics."""
    if stride is None:
        stride = kernel_size
    k, s = kernel_size, stride
    B, C, H, W = x.shape
    PH = (H - k) // s + 1
    PW = (W - k) // s + 1
    vals, idxs = [], []
    for kh in range(k):
        for kw in range(k):
            sl = x[:, :, kh:kh + (PH - 1) * s + 1:s, kw:kw + (PW - 1) * s + 1:s]
            vals.append(sl.astype(jnp.float32))
            ph = jnp.arange(PH) * s + kh
            pw = jnp.arange(PW) * s + kw
            flat = ph[:, None] * W + pw[None, :]
            idxs.append(jnp.broadcast_to(flat, sl.shape))
    V = jnp.stack(vals, axis=0)   # (KK, B, C, PH, PW), row-major window order
    I = jnp.stack(idxs, axis=0)
    j = jnp.argmax(V, axis=0)     # first max -> PyTorch tie-break
    pooled = jnp.max(V, axis=0)
    flat_idx = jnp.take_along_axis(I, j[None], axis=0)[0]
    yc = (flat_idx // W).astype(jnp.float32) / (H - 1) * 2.0 - 1.0
    xc = (flat_idx % W).astype(jnp.float32) / (W - 1) * 2.0 - 1.0
    chans = [pooled, yc, xc]
    if with_r:
        chans.append(jnp.sqrt(yc * yc + xc * xc))
    res = jnp.stack(chans, axis=2)  # (B, C, OC, PH, PW)
    return res.reshape(B, C, len(chans), -1)


if __name__ == "__main__":
    key = jax.random.PRNGKey(0)
    B, C, H, W = 2, 4, 16, 16
    x = jax.random.normal(key, (B, C, H, W), dtype=jnp.float32)

    # kernel = stride = 2, with radius channel (OC = 4)
    out = jax.block_until_ready(
        coord_max_pool_2d_per_channel(x, kernel_size=2, stride=2, with_r=True))
    ref = _reference(x, 2, 2, True)
    assert out.shape == (B, C, 4, (H // 2) * (W // 2))
    np.testing.assert_allclose(np.asarray(out), np.asarray(ref),
                               rtol=1e-5, atol=1e-5)

    # kernel = 4, default stride, no radius channel (OC = 3)
    out = jax.block_until_ready(
        coord_max_pool_2d_per_channel(x, kernel_size=4, with_r=False))
    ref = _reference(x, 4, None, False)
    assert out.shape == (B, C, 3, (H // 4) * (W // 4))
    np.testing.assert_allclose(np.asarray(out), np.asarray(ref),
                               rtol=1e-5, atol=1e-5)

    # overlapping windows: kernel = 3, stride = 2
    out = jax.block_until_ready(
        coord_max_pool_2d_per_channel(x, kernel_size=3, stride=2, with_r=False))
    ref = _reference(x, 3, 2, False)
    assert out.shape == (B, C, 3, 7 * 7)
    np.testing.assert_allclose(np.asarray(out), np.asarray(ref),
                               rtol=1e-5, atol=1e-5)

    print("KERNEL_OK")
</pallas_src>

<mosaic_0001>
module attributes {stable_mosaic.version = 11 : i64} {
  func.func @_coord_maxpool_kernel(%arg0: i32, %arg1: memref<8x256xf32, #tpu.memory_space<vmem>>, %arg2: memref<4x256x64xf32, #tpu.memory_space<vmem>>, %arg3: memref<2x64xf32, #tpu.memory_space<vmem>>, %arg4: memref<8x256xf32, #tpu.memory_space<vmem>>) attributes {dimension_semantics = [#tpu.dimension_semantics<parallel>], iteration_bounds = array<i64: 1>, scalar_prefetch = 0 : i64, scratch_operands = 0 : i64, tpu.core_type = #tpu.core_type<tc>, window_params = [{transform_indices = @transform_0, window_bounds = array<i64: 8, 256>}, {pipeline_mode = #tpu.pipeline_mode<synchronous>, transform_indices = @transform_1, window_bounds = array<i64: 4, 256, 64>}, {pipeline_mode = #tpu.pipeline_mode<synchronous>, transform_indices = @transform_2, window_bounds = array<i64: 2, 64>}, {transform_indices = @transform_3, window_bounds = array<i64: 8, 256>}]} {
    %c0 = arith.constant 0 : index
    %c0_0 = arith.constant 0 : index
    %0 = vector.load %arg1[%c0, %c0_0] : memref<8x256xf32, #tpu.memory_space<vmem>>, vector<8x256xf32>
    %c0_1 = arith.constant 0 : index
    %c0_2 = arith.constant 0 : index
    %c0_3 = arith.constant 0 : index
    %1 = vector.load %arg2[%c0_1, %c0_2, %c0_3] : memref<4x256x64xf32, #tpu.memory_space<vmem>>, vector<1x256x64xf32>
    %2 = vector.shape_cast %1 : vector<1x256x64xf32> to vector<256x64xf32>
    %cst = arith.constant dense<0.000000e+00> : vector<8x64xf32>
    %3 = tpu.matmul %0, %2, %cst {dimension_numbers = #tpu.dot_dimension_numbers<[1], [0], [0], [1], [0, 0, 1, 1], [], []>, precision = #tpu.contract_precision<fp32>} : vector<8x256xf32>, vector<256x64xf32>, vector<8x64xf32> -> vector<8x64xf32>
    %cst_4 = arith.constant 0.000000e+00 : f32
    %4 = vector.broadcast %cst_4 : f32 to vector<8x64xf32>
    %cst_5 = arith.constant 0.000000e+00 : f32
    %5 = vector.broadcast %cst_5 : f32 to vector<8x64xf32>
    %c1 = arith.constant 1 : index
    %c0_6 = arith.constant 0 : index
    %c0_7 = arith.constant 0 : index
    %6 = vector.load %arg2[%c1, %c0_6, %c0_7] : memref<4x256x64xf32, #tpu.memory_space<vmem>>, vector<1x256x64xf32>
    %7 = vector.shape_cast %6 : vector<1x256x64xf32> to vector<256x64xf32>
    %cst_8 = arith.constant dense<0.000000e+00> : vector<8x64xf32>
    %8 = tpu.matmul %0, %7, %cst_8 {dimension_numbers = #tpu.dot_dimension_numbers<[1], [0], [0], [1], [0, 0, 1, 1], [], []>, precision = #tpu.contract_precision<fp32>} : vector<8x256xf32>, vector<256x64xf32>, vector<8x64xf32> -> vector<8x64xf32>
    %9 = arith.cmpf ogt, %8, %3 : vector<8x64xf32>
    %10 = arith.select %9, %8, %3 : vector<8x64xi1>, vector<8x64xf32>
    %cst_9 = arith.constant 1.000000e+00 : f32
    %11 = vector.broadcast %cst_9 : f32 to vector<8x64xf32>
    %12 = arith.select %9, %11, %5 : vector<8x64xi1>, vector<8x64xf32>
    %c2 = arith.constant 2 : index
    %c0_10 = arith.constant 0 : index
    %c0_11 = arith.constant 0 : index
    %13 = vector.load %arg2[%c2, %c0_10, %c0_11] : memref<4x256x64xf32, #tpu.memory_space<vmem>>, vector<1x256x64xf32>
    %14 = vector.shape_cast %13 : vector<1x256x64xf32> to vector<256x64xf32>
    %cst_12 = arith.constant dense<0.000000e+00> : vector<8x64xf32>
    %15 = tpu.matmul %0, %14, %cst_12 {dimension_numbers = #tpu.dot_dimension_numbers<[1], [0], [0], [1], [0, 0, 1, 1], [], []>, precision = #tpu.contract_precision<fp32>} : vector<8x256xf32>, vector<256x64xf32>, vector<8x64xf32> -> vector<8x64xf32>
    %16 = arith.cmpf ogt, %15, %10 : vector<8x64xf32>
    %17 = arith.select %16, %15, %10 : vector<8x64xi1>, vector<8x64xf32>
    %cst_13 = arith.constant 1.000000e+00 : f32
    %18 = vector.broadcast %cst_13 : f32 to vector<8x64xf32>
    %19 = arith.select %16, %18, %4 : vector<8x64xi1>, vector<8x64xf32>
    %cst_14 = arith.constant 0.000000e+00 : f32
    %20 = vector.broadcast %cst_14 : f32 to vector<8x64xf32>
    %21 = arith.select %16, %20, %12 : vector<8x64xi1>, vector<8x64xf32>
    %c3 = arith.constant 3 : index
    %c0_15 = arith.constant 0 : index
    %c0_16 = arith.constant 0 : index
    %22 = vector.load %arg2[%c3, %c0_15, %c0_16] : memref<4x256x64xf32, #tpu.memory_space<vmem>>, vector<1x256x64xf32>
    %23 = vector.shape_cast %22 : vector<1x256x64xf32> to vector<256x64xf32>
    %cst_17 = arith.constant dense<0.000000e+00> : vector<8x64xf32>
    %24 = tpu.matmul %0, %23, %cst_17 {dimension_numbers = #tpu.dot_dimension_numbers<[1], [0], [0], [1], [0, 0, 1, 1], [], []>, precision = #tpu.contract_precision<fp32>} : vector<8x256xf32>, vector<256x64xf32>, vector<8x64xf32> -> vector<8x64xf32>
    %25 = arith.cmpf ogt, %24, %17 : vector<8x64xf32>
    %26 = arith.select %25, %24, %17 : vector<8x64xi1>, vector<8x64xf32>
    %cst_18 = arith.constant 1.000000e+00 : f32
    %27 = vector.broadcast %cst_18 : f32 to vector<8x64xf32>
    %28 = arith.select %25, %27, %19 : vector<8x64xi1>, vector<8x64xf32>
    %cst_19 = arith.constant 1.000000e+00 : f32
    %29 = vector.broadcast %cst_19 : f32 to vector<8x64xf32>
    %30 = arith.select %25, %29, %21 : vector<8x64xi1>, vector<8x64xf32>
    %c0_20 = arith.constant 0 : index
    %c0_21 = arith.constant 0 : index
    %31 = vector.load %arg3[%c0_20, %c0_21] : memref<2x64xf32, #tpu.memory_space<vmem>>, vector<1x64xf32>
    %c1_22 = arith.constant 1 : index
    %c0_23 = arith.constant 0 : index
    %32 = vector.load %arg3[%c1_22, %c0_23] : memref<2x64xf32, #tpu.memory_space<vmem>>, vector<1x64xf32>
    %33 = vector.broadcast %31 : vector<1x64xf32> to vector<8x64xf32>
    %34 = arith.addf %33, %28 : vector<8x64xf32>
    %cst_24 = arith.constant 0.13333334 : f32
    %35 = vector.broadcast %cst_24 : f32 to vector<8x64xf32>
    %36 = arith.mulf %34, %35 : vector<8x64xf32>
    %cst_25 = arith.constant 1.000000e+00 : f32
    %37 = vector.broadcast %cst_25 : f32 to vector<8x64xf32>
    %38 = arith.subf %36, %37 : vector<8x64xf32>
    %39 = vector.broadcast %32 : vector<1x64xf32> to vector<8x64xf32>
    %40 = arith.addf %39, %30 : vector<8x64xf32>
    %cst_26 = arith.constant 0.13333334 : f32
    %41 = vector.broadcast %cst_26 : f32 to vector<8x64xf32>
    %42 = arith.mulf %40, %41 : vector<8x64xf32>
    %cst_27 = arith.constant 1.000000e+00 : f32
    %43 = vector.broadcast %cst_27 : f32 to vector<8x64xf32>
    %44 = arith.subf %42, %43 : vector<8x64xf32>
    %c0_28 = arith.constant 0 : index
    %c0_29 = arith.constant 0 : index
    %45 = vector.load %arg4[%c0_28, %c0_29] : memref<8x256xf32, #tpu.memory_space<vmem>>, vector<8x64xf32>
    tpu.vector_store %arg4[%c0_28, %c0_29], %26 {strides = array<i32>} : memref<8x256xf32, #tpu.memory_space<vmem>>, vector<8x64xf32>,
    %c0_30 = arith.constant 0 : index
    %c64 = arith.constant 64 : index
    %46 = vector.load %arg4[%c0_30, %c64] : memref<8x256xf32, #tpu.memory_space<vmem>>, vector<8x64xf32>
    tpu.vector_store %arg4[%c0_30, %c64], %38 {strides = array<i32>} : memref<8x256xf32, #tpu.memory_space<vmem>>, vector<8x64xf32>,
    %c0_31 = arith.constant 0 : index
    %c128 = arith.constant 128 : index
    %47 = vector.load %arg4[%c0_31, %c128] : memref<8x256xf32, #tpu.memory_space<vmem>>, vector<8x64xf32>
    tpu.vector_store %arg4[%c0_31, %c128], %44 {strides = array<i32>} : memref<8x256xf32, #tpu.memory_space<vmem>>, vector<8x64xf32>,
    %48 = arith.mulf %38, %38 : vector<8x64xf32>
    %49 = arith.mulf %44, %44 : vector<8x64xf32>
    %50 = arith.addf %48, %49 : vector<8x64xf32>
    %51 = math.sqrt %50 : vector<8x64xf32>
    %c0_32 = arith.constant 0 : index
    %c192 = arith.constant 192 : index
    %52 = vector.load %arg4[%c0_32, %c192] : memref<8x256xf32, #tpu.memory_space<vmem>>, vector<8x64xf32>
    tpu.vector_store %arg4[%c0_32, %c192], %51 {strides = array<i32>} : memref<8x256xf32, #tpu.memory_space<vmem>>, vector<8x64xf32>,
    return
  }
  func.func @transform_0(%arg0: i32) -> (i32, i32) {
    %c0_i32 = arith.constant 0 : i32
    %c0_i32_0 = arith.constant 0 : i32
    return %arg0, %c0_i32 : i32, i32
  }
  func.func @transform_1(%arg0: i32) -> (i32, i32, i32) {
    %c0_i32 = arith.constant 0 : i32
    %c0_i32_0 = arith.constant 0 : i32
    %c0_i32_1 = arith.constant 0 : i32
    %c0_i32_2 = arith.constant 0 : i32
    return %c0_i32, %c0_i32_0, %c0_i32_1 : i32, i32, i32
  }
  func.func @transform_2(%arg0: i32) -> (i32, i32) {
    %c0_i32 = arith.constant 0 : i32
    %c0_i32_0 = arith.constant 0 : i32
    %c0_i32_1 = arith.constant 0 : i32
    return %c0_i32, %c0_i32_0 : i32, i32
  }
  func.func @transform_3(%arg0: i32) -> (i32, i32) {
    %c0_i32 = arith.constant 0 : i32
    %c0_i32_0 = arith.constant 0 : i32
    return %arg0, %c0_i32 : i32, i32
  }
}

</mosaic_0001>

<llo_original>
// kernel: tpu_custom_call.1
$region0: #{tpu_custom_call.1}
  #allocation0 [shape = 'u32[]', space=smem, size = 0x4, offset = 0x4, fixed_abs, tag = 'smem constant byte address 0x4 - core index']
  #allocation1 [shape = 'u32[144,128]{1,0:T(1,128)}', space=vmem, size = 0x12000, scoped, tag = 'internal scratch']
  %s0 = inlined_call_operand.vmem [shape: f32[8,256], index: 0, kind: input, shape index: {}]
  %s1 = inlined_call_operand.vmem [shape: f32[4,256,64], index: 1, kind: input, shape index: {}]
  %s2 = inlined_call_operand.vmem [shape: f32[2,64], index: 2, kind: input, shape index: {}]
  %s3 = inlined_call_operand.hbm [shape: f32[8,256], index: 3, kind: output, shape index: {}]
  %s4 = sld [smem:[#allocation0]]
  $region22: #{tpu_custom_call.1} parent=0
    _
  %s6 = ssub.s32 1, %s4
  %s7 = scalar_select 0, %s6, %s4
  $region1: #{tpu_custom_call.1} parent=0
    #allocation2 [shape = 'u8[8192]{0}', space=vmem, size = 0x2000, scoped, tag = 'output window, operand 0, single buffered']
    #allocation3 [shape = 's32[1]{0}', space=sflag, size = 0x4, scoped, tag = 'scoped memory for tpu_custom_call.1']
    %8 = vsyncpa [#allocation3], 0
    // Predicated region
    $region2: #{tpu_custom_call.1} parent=1 // pred_check
      _
    $region3: #{tpu_custom_call.1} parent=1 // pred_check_branch
      %10 = sbr.rel (0) target = $region5
    $region4: #{tpu_custom_call.1} parent=1 // pred_region
      _
    $region5: #{tpu_custom_call.1} parent=1 // pred_fallthru
      _
    // Predicated region
    $region6: #{tpu_custom_call.1} parent=1 // pred_check
      _
    $region7: #{tpu_custom_call.1} parent=1 // pred_check_branch
      %12 = sbr.rel (0) target = $region9
    $region8: #{tpu_custom_call.1} parent=1 // pred_region
      _
    $region9: #{tpu_custom_call.1} parent=1 // pred_fallthru
      _
    // Predicated region
    $region10: #{tpu_custom_call.1} parent=1 // pred_check
      _
    $region11: #{tpu_custom_call.1} parent=1 // pred_check_branch
      %14 = sbr.rel (0) target = $region13
    $region12: #{tpu_custom_call.1} parent=1 // pred_region
      _
    $region13: #{tpu_custom_call.1} parent=1 // pred_fallthru
      _
    %v15 = vld [vmem:[%s0] sm:$0xff]
    %v16 = vld [vmem:[%s0 + $0x8] sm:$0xff]
    %v17 = vld [vmem:[%s1] sm:$0xff]
    %v18 = vld [vmem:[%s1 + $0x8] sm:$0xff]
    %v19 = vld [vmem:[%s1 + $0x10] sm:$0xff]
    %v20 = vld [vmem:[%s1 + $0x18] sm:$0xff]
    %v21 = vld [vmem:[%s1 + $0x20] sm:$0xff]
    %v22 = vld [vmem:[%s1 + $0x28] sm:$0xff]
    %v23 = vld [vmem:[%s1 + $0x30] sm:$0xff]
    %v24 = vld [vmem:[%s1 + $0x38] sm:$0xff]
    %v25 = vld [vmem:[%s1 + $0x40] sm:$0xff]
    %v26 = vld [vmem:[%s1 + $0x48] sm:$0xff]
    %v27 = vld [vmem:[%s1 + $0x50] sm:$0xff]
    %v28 = vld [vmem:[%s1 + $0x58] sm:$0xff]
    %v29 = vld [vmem:[%s1 + $0x60] sm:$0xff]
    %v30 = vld [vmem:[%s1 + $0x68] sm:$0xff]
    %v31 = vld [vmem:[%s1 + $0x70] sm:$0xff]
    %v32 = vld [vmem:[%s1 + $0x78] sm:$0xff]
    %v33 = vld [vmem:[%s1 + $0x80] sm:$0xff]
    %v34 = vld [vmem:[%s1 + $0x88] sm:$0xff]
    %v35 = vld [vmem:[%s1 + $0x90] sm:$0xff]
    %v36 = vld [vmem:[%s1 + $0x98] sm:$0xff]
    %v37 = vld [vmem:[%s1 + $0xa0] sm:$0xff]
    %v38 = vld [vmem:[%s1 + $0xa8] sm:$0xff]
    %v39 = vld [vmem:[%s1 + $0xb0] sm:$0xff]
    %v40 = vld [vmem:[%s1 + $0xb8] sm:$0xff]
    %v41 = vld [vmem:[%s1 + $0xc0] sm:$0xff]
    %v42 = vld [vmem:[%s1 + $0xc8] sm:$0xff]
    %v43 = vld [vmem:[%s1 + $0xd0] sm:$0xff]
    %v44 = vld [vmem:[%s1 + $0xd8] sm:$0xff]
    %v45 = vld [vmem:[%s1 + $0xe0] sm:$0xff]
    %v46 = vld [vmem:[%s1 + $0xe8] sm:$0xff]
    %v47 = vld [vmem:[%s1 + $0xf0] sm:$0xff]
    %v48 = vld [vmem:[%s1 + $0xf8] sm:$0xff]
    %49 = vmatprep.subr.mxu0 0.0
    %v50 = vand.u32 %v17, 4294901760
    %51 = vmatpush1.msra.mxu0 %v50
    %52 = vmatprep.subr.mxu0 0.0
    %v53 = vand.u32 %v18, 4294901760
    %54 = vmatpush1.msra.mxu0 %v53
    %55 = vmatprep.subr.mxu0 0.0
    %v56 = vand.u32 %v19, 4294901760
    %57 = vmatpush1.msra.mxu0 %v56
    %58 = vmatprep.subr.mxu0 0.0
    %v59 = vand.u32 %v20, 4294901760
    %60 = vmatpush1.msra.mxu0 %v59
    %61 = vmatprep.subr.mxu0 0.0
    %v62 = vand.u32 %v21, 4294901760
    %63 = vmatpush1.msra.mxu0 %v62
    %64 = vmatprep.subr.mxu0 0.0
    %v65 = vand.u32 %v22, 4294901760
    %66 = vmatpush1.msra.mxu0 %v65
    %67 = vmatprep.subr.mxu0 0.0
    %v68 = vand.u32 %v23, 4294901760
    %69 = vmatpush1.msra.mxu0 %v68
    %70 = vmatprep.subr.mxu0 0.0
    %v71 = vand.u32 %v24, 4294901760
    %72 = vmatpush1.msra.mxu0 %v71
    %73 = vmatprep.subr.mxu0 0.0
    %v74 = vand.u32 %v25, 4294901760
    %75 = vmatpush1.msra.mxu0 %v74
    %76 = vmatprep.subr.mxu0 0.0
    %v77 = vand.u32 %v26, 4294901760
    %78 = vmatpush1.msra.mxu0 %v77
    %79 = vmatprep.subr.mxu0 0.0
    %v80 = vand.u32 %v27, 4294901760
    %81 = vmatpush1.msra.mxu0 %v80
    %82 = vmatprep.subr.mxu0 0.0
    %v83 = vand.u32 %v28, 4294901760
    %84 = vmatpush1.msra.mxu0 %v83
    %85 = vmatprep.subr.mxu0 0.0
    %v86 = vand.u32 %v29, 4294901760
    %87 = vmatpush1.msra.mxu0 %v86
    %88 = vmatprep.subr.mxu0 0.0
    %v89 = vand.u32 %v30, 4294901760
    %90 = vmatpush1.msra.mxu0 %v89
    %91 = vmatprep.subr.mxu0 0.0
    %v92 = vand.u32 %v31, 4294901760
    %93 = vmatpush1.msra.mxu0 %v92
    %94 = vmatprep.subr.mxu0 0.0
    %v95 = vand.u32 %v32, 4294901760
    %96 = vmatpush1.msra.mxu0 %v95
    %97 = vmatprep.subr.mxu0 0.0
    %v98 = vand.u32 %v33, 4294901760
    %99 = vmatpush1.msra.mxu0 %v98
    %100 = vmatprep.subr.mxu0 0.0
    %v101 = vand.u32 %v34, 4294901760
    %102 = vmatpush1.msra.mxu0 %v101
    %103 = vmatprep.subr.mxu0 0.0
    %v104 = vand.u32 %v35, 4294901760
    %105 = vmatpush1.msra.mxu0 %v104
    %106 = vmatprep.subr.mxu0 0.0
    %v107 = vand.u32 %v36, 4294901760
    %108 = vmatpush1.msra.mxu0 %v107
    %109 = vmatprep.subr.mxu0 0.0
    %v110 = vand.u32 %v37, 4294901760
    %111 = vmatpush1.msra.mxu0 %v110
    %112 = vmatprep.subr.mxu0 0.0
    %v113 = vand.u32 %v38, 4294901760
    %114 = vmatpush1.msra.mxu0 %v113
    %115 = vmatprep.subr.mxu0 0.0
    %v116 = vand.u32 %v39, 4294901760
    %117 = vmatpush1.msra.mxu0 %v116
    %118 = vmatprep.subr.mxu0 0.0
    %v119 = vand.u32 %v40, 4294901760
    %120 = vmatpush1.msra.mxu0 %v119
    %121 = vmatprep.subr.mxu0 0.0
    %v122 = vand.u32 %v41, 4294901760
    %123 = vmatpush1.msra.mxu0 %v122
    %124 = vmatprep.subr.mxu0 0.0
    %v125 = vand.u32 %v42, 4294901760
    %126 = vmatpush1.msra.mxu0 %v125
    %127 = vmatprep.subr.mxu0 0.0
    %v128 = vand.u32 %v43, 4294901760
    %129 = vmatpush1.msra.mxu0 %v128
    %130 = vmatprep.subr.mxu0 0.0
    %v131 = vand.u32 %v44, 4294901760
    %132 = vmatpush1.msra.mxu0 %v131
    %133 = vmatprep.subr.mxu0 0.0
    %v134 = vand.u32 %v45, 4294901760
    %135 = vmatpush1.msra.mxu0 %v134
    %136 = vmatprep.subr.mxu0 0.0
    %v137 = vand.u32 %v46, 4294901760
    %138 = vmatpush1.msra.mxu0 %v137
    %139 = vmatprep.subr.mxu0 0.0
    %v140 = vand.u32 %v47, 4294901760
    %141 = vmatpush1.msra.mxu0 %v140
    %142 = vmatprep.subr.mxu0 0.0
    %v143 = vand.u32 %v48, 4294901760
    %144 = vmatpush1.msra.mxu0 %v143
    %v145 = vand.u32 %v16, 4294901760
    %v146 = vsub.f32 %v16, %v145
    %v147 = vand.u32 %v146, 4294901760
    %v148 = vsub.f32 %v146, %v147
    %v149 = vand.u32 %v148, 4294901760
    %150 = vmatprep.mubr.f32.mxu0 %v149
    %v151 = vand.u32 %v15, 4294901760
    %v152 = vsub.f32 %v15, %v151
    %v153 = vand.u32 %v152, 4294901760
    %v154 = vsub.f32 %v152, %v153
    %v155 = vand.u32 %v154, 4294901760
    %156 = vmatmul.mubr.f32.gmra.mrb[0].mxu0 %v155
    %v157 = vpop.f32.mrb[0].mxu0
    %v158 = vadd.f32 0.0, %v157
    %v159 = vpop.f32.mrb[0].mxu0
    %160 = vdwg.mxu0
    %161 = vmatprep.subr.mxu0 0.0
    %v162 = vand.u32 %v17, 4294901760
    %v163 = vsub.f32 %v17, %v162
    %v164 = vand.u32 %v163, 4294901760
    %v165 = vsub.f32 %v163, %v164
    %v166 = vand.u32 %v165, 4294901760
    %167 = vmatpush1.msra.mxu0 %v166
    %168 = vmatprep.subr.mxu0 0.0
    %v169 = vand.u32 %v18, 4294901760
    %v170 = vsub.f32 %v18, %v169
    %v171 = vand.u32 %v170, 4294901760
    %v172 = vsub.f32 %v170, %v171
    %v173 = vand.u32 %v172, 4294901760
    %174 = vmatpush1.msra.mxu0 %v173
    %175 = vmatprep.subr.mxu0 0.0
    %v176 = vand.u32 %v19, 4294901760
    %v177 = vsub.f32 %v19, %v176
    %v178 = vand.u32 %v177, 4294901760
    %v179 = vsub.f32 %v177, %v178
    %v180 = vand.u32 %v179, 4294901760
    %181 = vmatpush1.msra.mxu0 %v180
    %182 = vmatprep.subr.mxu0 0.0
    %v183 = vand.u32 %v20, 4294901760
    %v184 = vsub.f32 %v20, %v183
    %v185 = vand.u32 %v184, 4294901760
    %v186 = vsub.f32 %v184, %v185
    %v187 = vand.u32 %v186, 4294901760
    %188 = vmatpush1.msra.mxu0 %v187
    %189 = vmatprep.subr.mxu0 0.0
    %v190 = vand.u32 %v21, 4294901760
    %v191 = vsub.f32 %v21, %v190
    %v192 = vand.u32 %v191, 4294901760
    %v193 = vsub.f32 %v191, %v192
    %v194 = vand.u32 %v193, 4294901760
    %195 = vmatpush1.msra.mxu0 %v194
    %196 = vmatprep.subr.mxu0 0.0
    %v197 = vand.u32 %v22, 4294901760
    %v198 = vsub.f32 %v22, %v197
    %v199 = vand.u32 %v198, 4294901760
    %v200 = vsub.f32 %v198, %v199
    %v201 = vand.u32 %v200, 4294901760
    %202 = vmatpush1.msra.mxu0 %v201
    %203 = vmatprep.subr.mxu0 0.0
    %v204 = vand.u32 %v23, 4294901760
    %v205 = vsub.f32 %v23, %v204
    %v206 = vand.u32 %v205, 4294901760
    %v207 = vsub.f32 %v205, %v206
    %v208 = vand.u32 %v207, 4294901760
    %209 = vmatpush1.msra.mxu0 %v208
    %210 = vmatprep.subr.mxu0 0.0
    %v211 = vand.u32 %v24, 4294901760
    %v212 = vsub.f32 %v24, %v211
    %v213 = vand.u32 %v212, 4294901760
    %v214 = vsub.f32 %v212, %v213
    %v215 = vand.u32 %v214, 4294901760
    %216 = vmatpush1.msra.mxu0 %v215
    %217 = vmatprep.subr.mxu0 0.0
    %v218 = vand.u32 %v25, 4294901760
    %v219 = vsub.f32 %v25, %v218
    %v220 = vand.u32 %v219, 4294901760
    %v221 = vsub.f32 %v219, %v220
    %v222 = vand.u32 %v221, 4294901760
    %223 = vmatpush1.msra.mxu0 %v222
    %224 = vmatprep.subr.mxu0 0.0
    %v225 = vand.u32 %v26, 4294901760
    %v226 = vsub.f32 %v26, %v225
    %v227 = vand.u32 %v226, 4294901760
    %v228 = vsub.f32 %v226, %v227
    %v229 = vand.u32 %v228, 4294901760
    %230 = vmatpush1.msra.mxu0 %v229
    %231 = vmatprep.subr.mxu0 0.0
    %v232 = vand.u32 %v27, 4294901760
    %v233 = vsub.f32 %v27, %v232
    %v234 = vand.u32 %v233, 4294901760
    %v235 = vsub.f32 %v233, %v234
    %v236 = vand.u32 %v235, 4294901760
    %237 = vmatpush1.msra.mxu0 %v236
    %238 = vmatprep.subr.mxu0 0.0
    %v239 = vand.u32 %v28, 4294901760
    %v240 = vsub.f32 %v28, %v239
    %v241 = vand.u32 %v240, 4294901760
    %v242 = vsub.f32 %v240, %v241
    %v243 = vand.u32 %v242, 4294901760
    %244 = vmatpush1.msra.mxu0 %v243
    %245 = vmatprep.subr.mxu0 0.0
    %v246 = vand.u32 %v29, 4294901760
    %v247 = vsub.f32 %v29, %v246
    %v248 = vand.u32 %v247, 4294901760
    %v249 = vsub.f32 %v247, %v248
    %v250 = vand.u32 %v249, 4294901760
    %251 = vmatpush1.msra.mxu0 %v250
    %252 = vmatprep.subr.mxu0 0.0
    %v253 = vand.u32 %v30, 4294901760
    %v254 = vsub.f32 %v30, %v253
    %v255 = vand.u32 %v254, 4294901760
    %v256 = vsub.f32 %v254, %v255
    %v257 = vand.u32 %v256, 4294901760
    %258 = vmatpush1.msra.mxu0 %v257
    %259 = vmatprep.subr.mxu0 0.0
    %v260 = vand.u32 %v31, 4294901760
    %v261 = vsub.f32 %v31, %v260
    %v262 = vand.u32 %v261, 4294901760
    %v263 = vsub.f32 %v261, %v262
    %v264 = vand.u32 %v263, 4294901760
    %265 = vmatpush1.msra.mxu0 %v264
    %266 = vmatprep.subr.mxu0 0.0
    %v267 = vand.u32 %v32, 4294901760
    %v268 = vsub.f32 %v32, %v267
    %v269 = vand.u32 %v268, 4294901760
    %v270 = vsub.f32 %v268, %v269
    %v271 = vand.u32 %v270, 4294901760
    %272 = vmatpush1.msra.mxu0 %v271
    %273 = vmatprep.subr.mxu0 0.0
    %v274 = vand.u32 %v33, 4294901760
    %v275 = vsub.f32 %v33, %v274
    %v276 = vand.u32 %v275, 4294901760
    %v277 = vsub.f32 %v275, %v276
    %v278 = vand.u32 %v277, 4294901760
    %279 = vmatpush1.msra.mxu0 %v278
    %280 = vmatprep.subr.mxu0 0.0
    %v281 = vand.u32 %v34, 4294901760
    %v282 = vsub.f32 %v34, %v281
    %v283 = vand.u32 %v282, 4294901760
    %v284 = vsub.f32 %v282, %v283
    %v285 = vand.u32 %v284, 4294901760
    %286 = vmatpush1.msra.mxu0 %v285
    %287 = vmatprep.subr.mxu0 0.0
    %v288 = vand.u32 %v35, 4294901760
    %v289 = vsub.f32 %v35, %v288
    %v290 = vand.u32 %v289, 4294901760
    %v291 = vsub.f32 %v289, %v290
    %v292 = vand.u32 %v291, 4294901760
    %293 = vmatpush1.msra.mxu0 %v292
    %294 = vmatprep.subr.mxu0 0.0
    %v295 = vand.u32 %v36, 4294901760
    %v296 = vsub.f32 %v36, %v295
    %v297 = vand.u32 %v296, 4294901760
    %v298 = vsub.f32 %v296, %v297
    %v299 = vand.u32 %v298, 4294901760
    %300 = vmatpush1.msra.mxu0 %v299
    %301 = vmatprep.subr.mxu0 0.0
    %v302 = vand.u32 %v37, 4294901760
    %v303 = vsub.f32 %v37, %v302
    %v304 = vand.u32 %v303, 4294901760
    %v305 = vsub.f32 %v303, %v304
    %v306 = vand.u32 %v305, 4294901760
    %307 = vmatpush1.msra.mxu0 %v306
    %308 = vmatprep.subr.mxu0 0.0
    %v309 = vand.u32 %v38, 4294901760
    %v310 = vsub.f32 %v38, %v309
    %v311 = vand.u32 %v310, 4294901760
    %v312 = vsub.f32 %v310, %v311
    %v313 = vand.u32 %v312, 4294901760
    %314 = vmatpush1.msra.mxu0 %v313
    %315 = vmatprep.subr.mxu0 0.0
    %v316 = vand.u32 %v39, 4294901760
    %v317 = vsub.f32 %v39, %v316
    %v318 = vand.u32 %v317, 4294901760
    %v319 = vsub.f32 %v317, %v318
    %v320 = vand.u32 %v319, 4294901760
    %321 = vmatpush1.msra.mxu0 %v320
    %322 = vmatprep.subr.mxu0 0.0
    %v323 = vand.u32 %v40, 4294901760
    %v324 = vsub.f32 %v40, %v323
    %v325 = vand.u32 %v324, 4294901760
    %v326 = vsub.f32 %v324, %v325
    %v327 = vand.u32 %v326, 4294901760
    %328 = vmatpush1.msra.mxu0 %v327
    %329 = vmatprep.subr.mxu0 0.0
    %v330 = vand.u32 %v41, 4294901760
    %v331 = vsub.f32 %v41, %v330
    %v332 = vand.u32 %v331, 4294901760
    %v333 = vsub.f32 %v331, %v332
    %v334 = vand.u32 %v333, 4294901760
    %335 = vmatpush1.msra.mxu0 %v334
    %336 = vmatprep.subr.mxu0 0.0
    %v337 = vand.u32 %v42, 4294901760
    %v338 = vsub.f32 %v42, %v337
    %v339 = vand.u32 %v338, 4294901760
    %v340 = vsub.f32 %v338, %v339
    %v341 = vand.u32 %v340, 4294901760
    %342 = vmatpush1.msra.mxu0 %v341
    %343 = vmatprep.subr.mxu0 0.0
    %v344 = vand.u32 %v43, 4294901760
    %v345 = vsub.f32 %v43, %v344
    %v346 = vand.u32 %v345, 4294901760
    %v347 = vsub.f32 %v345, %v346
    %v348 = vand.u32 %v347, 4294901760
    %349 = vmatpush1.msra.mxu0 %v348
    %350 = vmatprep.subr.mxu0 0.0
    %v351 = vand.u32 %v44, 4294901760
    %v352 = vsub.f32 %v44, %v351
    %v353 = vand.u32 %v352, 4294901760
    %v354 = vsub.f32 %v352, %v353
    %v355 = vand.u32 %v354, 4294901760
    %356 = vmatpush1.msra.mxu0 %v355
    %357 = vmatprep.subr.mxu0 0.0
    %v358 = vand.u32 %v45, 4294901760
    %v359 = vsub.f32 %v45, %v358
    %v360 = vand.u32 %v359, 4294901760
    %v361 = vsub.f32 %v359, %v360
    %v362 = vand.u32 %v361, 4294901760
    %363 = vmatpush1.msra.mxu0 %v362
    %364 = vmatprep.subr.mxu0 0.0
    %v365 = vand.u32 %v46, 4294901760
    %v366 = vsub.f32 %v46, %v365
    %v367 = vand.u32 %v366, 4294901760
    %v368 = vsub.f32 %v366, %v367
    %v369 = vand.u32 %v368, 4294901760
    %370 = vmatpush1.msra.mxu0 %v369
    %371 = vmatprep.subr.mxu0 0.0
    %v372 = vand.u32 %v47, 4294901760
    %v373 = vsub.f32 %v47, %v372
    %v374 = vand.u32 %v373, 4294901760
    %v375 = vsub.f32 %v373, %v374
    %v376 = vand.u32 %v375, 4294901760
    %377 = vmatpush1.msra.mxu0 %v376
    %378 = vmatprep.subr.mxu0 0.0
    %v379 = vand.u32 %v48, 4294901760
    %v380 = vsub.f32 %v48, %v379
    %v381 = vand.u32 %v380, 4294901760
    %v382 = vsub.f32 %v380, %v381
    %v383 = vand.u32 %v382, 4294901760
    %384 = vmatpush1.msra.mxu0 %v383
    %v385 = vand.u32 %v16, 4294901760
    %386 = vmatprep.mubr.f32.mxu0 %v385
    %v387 = vand.u32 %v15, 4294901760
    %388 = vmatmul.mubr.f32.gmra.mrb[0].mxu0 %v387
    %v389 = vpop.f32.mrb[0].mxu0
    %v390 = vadd.f32 %v158, %v389
    %v391 = vpop.f32.mrb[0].mxu0
    %392 = vdwg.mxu0
    %393 = vmatprep.subr.mxu0 0.0
    %v394 = vand.u32 %v17, 4294901760
    %v395 = vsub.f32 %v17, %v394
    %396 = vmatpush1.msra.mxu0 %v395
    %397 = vmatprep.subr.mxu0 0.0
    %v398 = vand.u32 %v18, 4294901760
    %v399 = vsub.f32 %v18, %v398
    %400 = vmatpush1.msra.mxu0 %v399
    %401 = vmatprep.subr.mxu0 0.0
    %v402 = vand.u32 %v19, 4294901760
    %v403 = vsub.f32 %v19, %v402
    %404 = vmatpush1.msra.mxu0 %v403
    %405 = vmatprep.subr.mxu0 0.0
    %v406 = vand.u32 %v20, 4294901760
    %v407 = vsub.f32 %v20, %v406
    %408 = vmatpush1.msra.mxu0 %v407
    %409 = vmatprep.subr.mxu0 0.0
    %v410 = vand.u32 %v21, 4294901760
    %v411 = vsub.f32 %v21, %v410
    %412 = vmatpush1.msra.mxu0 %v411
    %413 = vmatprep.subr.mxu0 0.0
    %v414 = vand.u32 %v22, 4294901760
    %v415 = vsub.f32 %v22, %v414
    %416 = vmatpush1.msra.mxu0 %v415
    %417 = vmatprep.subr.mxu0 0.0
    %v418 = vand.u32 %v23, 4294901760
    %v419 = vsub.f32 %v23, %v418
    %420 = vmatpush1.msra.mxu0 %v419
    %421 = vmatprep.subr.mxu0 0.0
    %v422 = vand.u32 %v24, 4294901760
    %v423 = vsub.f32 %v24, %v422
    %424 = vmatpush1.msra.mxu0 %v423
    %425 = vmatprep.subr.mxu0 0.0
    %v426 = vand.u32 %v25, 4294901760
    %v427 = vsub.f32 %v25, %v426
    %428 = vmatpush1.msra.mxu0 %v427
    %429 = vmatprep.subr.mxu0 0.0
    %v430 = vand.u32 %v26, 4294901760
    %v431 = vsub.f32 %v26, %v430
    %432 = vmatpush1.msra.mxu0 %v431
    %433 = vmatprep.subr.mxu0 0.0
    %v434 = vand.u32 %v27, 4294901760
    %v435 = vsub.f32 %v27, %v434
    %436 = vmatpush1.msra.mxu0 %v435
    %437 = vmatprep.subr.mxu0 0.0
    %v438 = vand.u32 %v28, 4294901760
    %v439 = vsub.f32 %v28, %v438
    %440 = vmatpush1.msra.mxu0 %v439
    %441 = vmatprep.subr.mxu0 0.0
    %v442 = vand.u32 %v29, 4294901760
    %v443 = vsub.f32 %v29, %v442
    %444 = vmatpush1.msra.mxu0 %v443
    %445 = vmatprep.subr.mxu0 0.0
    %v446 = vand.u32 %v30, 4294901760
    %v447 = vsub.f32 %v30, %v446
    %448 = vmatpush1.msra.mxu0 %v447
    %449 = vmatprep.subr.mxu0 0.0
    %v450 = vand.u32 %v31, 4294901760
    %v451 = vsub.f32 %v31, %v450
    %452 = vmatpush1.msra.mxu0 %v451
    %453 = vmatprep.subr.mxu0 0.0
    %v454 = vand.u32 %v32, 4294901760
    %v455 = vsub.f32 %v32, %v454
    %456 = vmatpush1.msra.mxu0 %v455
    %457 = vmatprep.subr.mxu0 0.0
    %v458 = vand.u32 %v33, 4294901760
    %v459 = vsub.f32 %v33, %v458
    %460 = vmatpush1.msra.mxu0 %v459
    %461 = vmatprep.subr.mxu0 0.0
    %v462 = vand.u32 %v34, 4294901760
    %v463 = vsub.f32 %v34, %v462
    %464 = vmatpush1.msra.mxu0 %v463
    %465 = vmatprep.subr.mxu0 0.0
    %v466 = vand.u32 %v35, 4294901760
    %v467 = vsub.f32 %v35, %v466
    %468 = vmatpush1.msra.mxu0 %v467
    %469 = vmatprep.subr.mxu0 0.0
    %v470 = vand.u32 %v36, 4294901760
    %v471 = vsub.f32 %v36, %v470
    %472 = vmatpush1.msra.mxu0 %v471
    %473 = vmatprep.subr.mxu0 0.0
    %v474 = vand.u32 %v37, 4294901760
    %v475 = vsub.f32 %v37, %v474
    %476 = vmatpush1.msra.mxu0 %v475
    %477 = vmatprep.subr.mxu0 0.0
    %v478 = vand.u32 %v38, 4294901760
    %v479 = vsub.f32 %v38, %v478
    %480 = vmatpush1.msra.mxu0 %v479
    %481 = vmatprep.subr.mxu0 0.0
    %v482 = vand.u32 %v39, 4294901760
    %v483 = vsub.f32 %v39, %v482
    %484 = vmatpush1.msra.mxu0 %v483
    %485 = vmatprep.subr.mxu0 0.0
    %v486 = vand.u32 %v40, 4294901760
    %v487 = vsub.f32 %v40, %v486
    %488 = vmatpush1.msra.mxu0 %v487
    %489 = vmatprep.subr.mxu0 0.0
    %v490 = vand.u32 %v41, 4294901760
    %v491 = vsub.f32 %v41, %v490
    %492 = vmatpush1.msra.mxu0 %v491
    %493 = vmatprep.subr.mxu0 0.0
    %v494 = vand.u32 %v42, 4294901760
    %v495 = vsub.f32 %v42, %v494
    %496 = vmatpush1.msra.mxu0 %v495
    %497 = vmatprep.subr.mxu0 0.0
    %v498 = vand.u32 %v43, 4294901760
    %v499 = vsub.f32 %v43, %v498
    %500 = vmatpush1.msra.mxu0 %v499
    %501 = vmatprep.subr.mxu0 0.0
    %v502 = vand.u32 %v44, 4294901760
    %v503 = vsub.f32 %v44, %v502
    %504 = vmatpush1.msra.mxu0 %v503
    %505 = vmatprep.subr.mxu0 0.0
    %v506 = vand.u32 %v45, 4294901760
    %v507 = vsub.f32 %v45, %v506
    %508 = vmatpush1.msra.mxu0 %v507
    %509 = vmatprep.subr.mxu0 0.0
    %v510 = vand.u32 %v46, 4294901760
    %v511 = vsub.f32 %v46, %v510
    %512 = vmatpush1.msra.mxu0 %v511
    %513 = vmatprep.subr.mxu0 0.0
    %v514 = vand.u32 %v47, 4294901760
    %v515 = vsub.f32 %v47, %v514
    %516 = vmatpush1.msra.mxu0 %v515
    %517 = vmatprep.subr.mxu0 0.0
    %v518 = vand.u32 %v48, 4294901760
    %v519 = vsub.f32 %v48, %v518
    %520 = vmatpush1.msra.mxu0 %v519
    %v521 = vand.u32 %v16, 4294901760
    %v522 = vsub.f32 %v16, %v521
    %523 = vmatprep.mubr.f32.mxu0 %v522
    %v524 = vand.u32 %v15, 4294901760
    %v525 = vsub.f32 %v15, %v524
    %526 = vmatmul.mubr.f32.gmra.mrb[0].mxu0 %v525
    %v527 = vpop.f32.mrb[0].mxu0
    %v528 = vadd.f32 %v390, %v527
    %v529 = vpop.f32.mrb[0].mxu0
    %530 = vdwg.mxu0
    %531 = vmatprep.subr.mxu0 0.0
    %v532 = vand.u32 %v17, 4294901760
    %533 = vmatpush1.msra.mxu0 %v532
    %534 = vmatprep.subr.mxu0 0.0
    %v535 = vand.u32 %v18, 4294901760
    %536 = vmatpush1.msra.mxu0 %v535
    %537 = vmatprep.subr.mxu0 0.0
    %v538 = vand.u32 %v19, 4294901760
    %539 = vmatpush1.msra.mxu0 %v538
    %540 = vmatprep.subr.mxu0 0.0
    %v541 = vand.u32 %v20, 4294901760
    %542 = vmatpush1.msra.mxu0 %v541
    %543 = vmatprep.subr.mxu0 0.0
    %v544 = vand.u32 %v21, 4294901760
    %545 = vmatpush1.msra.mxu0 %v544
    %546 = vmatprep.subr.mxu0 0.0
    %v547 = vand.u32 %v22, 4294901760
    %548 = vmatpush1.msra.mxu0 %v547
    %549 = vmatprep.subr.mxu0 0.0
    %v550 = vand.u32 %v23, 4294901760
    %551 = vmatpush1.msra.mxu0 %v550
    %552 = vmatprep.subr.mxu0 0.0
    %v553 = vand.u32 %v24, 4294901760
    %554 = vmatpush1.msra.mxu0 %v553
    %555 = vmatprep.subr.mxu0 0.0
    %v556 = vand.u32 %v25, 4294901760
    %557 = vmatpush1.msra.mxu0 %v556
    %558 = vmatprep.subr.mxu0 0.0
    %v559 = vand.u32 %v26, 4294901760
    %560 = vmatpush1.msra.mxu0 %v559
    %561 = vmatprep.subr.mxu0 0.0
    %v562 = vand.u32 %v27, 4294901760
    %563 = vmatpush1.msra.mxu0 %v562
    %564 = vmatprep.subr.mxu0 0.0
    %v565 = vand.u32 %v28, 4294901760
    %566 = vmatpush1.msra.mxu0 %v565
    %567 = vmatprep.subr.mxu0 0.0
    %v568 = vand.u32 %v29, 4294901760
    %569 = vmatpush1.msra.mxu0 %v568
    %570 = vmatprep.subr.mxu0 0.0
    %v571 = vand.u32 %v30, 4294901760
    %572 = vmatpush1.msra.mxu0 %v571
    %573 = vmatprep.subr.mxu0 0.0
    %v574 = vand.u32 %v31, 4294901760
    %575 = vmatpush1.msra.mxu0 %v574
    %576 = vmatprep.subr.mxu0 0.0
    %v577 = vand.u32 %v32, 4294901760
    %578 = vmatpush1.msra.mxu0 %v577
    %579 = vmatprep.subr.mxu0 0.0
    %v580 = vand.u32 %v33, 4294901760
    %581 = vmatpush1.msra.mxu0 %v580
    %582 = vmatprep.subr.mxu0 0.0
    %v583 = vand.u32 %v34, 4294901760
    %584 = vmatpush1.msra.mxu0 %v583
    %585 = vmatprep.subr.mxu0 0.0
    %v586 = vand.u32 %v35, 4294901760
    %587 = vmatpush1.msra.mxu0 %v586
    %588 = vmatprep.subr.mxu0 0.0
    %v589 = vand.u32 %v36, 4294901760
    %590 = vmatpush1.msra.mxu0 %v589
    %591 = vmatprep.subr.mxu0 0.0
    %v592 = vand.u32 %v37, 4294901760
    %593 = vmatpush1.msra.mxu0 %v592
    %594 = vmatprep.subr.mxu0 0.0
    %v595 = vand.u32 %v38, 4294901760
    %596 = vmatpush1.msra.mxu0 %v595
    %597 = vmatprep.subr.mxu0 0.0
    %v598 = vand.u32 %v39, 4294901760
    %599 = vmatpush1.msra.mxu0 %v598
    %600 = vmatprep.subr.mxu0 0.0
    %v601 = vand.u32 %v40, 4294901760
    %602 = vmatpush1.msra.mxu0 %v601
    %603 = vmatprep.subr.mxu0 0.0
    %v604 = vand.u32 %v41, 4294901760
    %605 = vmatpush1.msra.mxu0 %v604
    %606 = vmatprep.subr.mxu0 0.0
    %v607 = vand.u32 %v42, 4294901760
    %608 = vmatpush1.msra.mxu0 %v607
    %609 = vmatprep.subr.mxu0 0.0
    %v610 = vand.u32 %v43, 4294901760
    %611 = vmatpush1.msra.mxu0 %v610
    %612 = vmatprep.subr.mxu0 0.0
    %v613 = vand.u32 %v44, 4294901760
    %614 = vmatpush1.msra.mxu0 %v613
    %615 = vmatprep.subr.mxu0 0.0
    %v616 = vand.u32 %v45, 4294901760
    %617 = vmatpush1.msra.mxu0 %v616
    %618 = vmatprep.subr.mxu0 0.0
    %v619 = vand.u32 %v46, 4294901760
    %620 = vmatpush1.msra.mxu0 %v619
    %621 = vmatprep.subr.mxu0 0.0
    %v622 = vand.u32 %v47, 4294901760
    %623 = vmatpush1.msra.mxu0 %v622
    %624 = vmatprep.subr.mxu0 0.0
    %v625 = vand.u32 %v48, 4294901760
    %626 = vmatpush1.msra.mxu0 %v625
    %v627 = vand.u32 %v16, 4294901760
    %v628 = vsub.f32 %v16, %v627
    %v629 = vand.u32 %v628, 4294901760
    %630 = vmatprep.mubr.f32.mxu0 %v629
    %v631 = vand.u32 %v15, 4294901760
    %v632 = vsub.f32 %v15, %v631
    %v633 = vand.u32 %v632, 4294901760
    %634 = vmatmul.mubr.f32.gmra.mrb[0].mxu0 %v633
    %v635 = vpop.f32.mrb[0].mxu0
    %v636 = vadd.f32 %v528, %v635
    %v637 = vpop.f32.mrb[0].mxu0
    %638 = vdwg.mxu0
    %639 = vmatprep.subr.mxu0 0.0
    %v640 = vand.u32 %v17, 4294901760
    %v641 = vsub.f32 %v17, %v640
    %v642 = vand.u32 %v641, 4294901760
    %643 = vmatpush1.msra.mxu0 %v642
    %644 = vmatprep.subr.mxu0 0.0
    %v645 = vand.u32 %v18, 4294901760
    %v646 = vsub.f32 %v18, %v645
    %v647 = vand.u32 %v646, 4294901760
    %648 = vmatpush1.msra.mxu0 %v647
    %649 = vmatprep.subr.mxu0 0.0
    %v650 = vand.u32 %v19, 4294901760
    %v651 = vsub.f32 %v19, %v650
    %v652 = vand.u32 %v651, 4294901760
    %653 = vmatpush1.msra.mxu0 %v652
    %654 = vmatprep.subr.mxu0 0.0
    %v655 = vand.u32 %v20, 4294901760
    %v656 = vsub.f32 %v20, %v655
    %v657 = vand.u32 %v656, 4294901760
    %658 = vmatpush1.msra.mxu0 %v657
    %659 = vmatprep.subr.mxu0 0.0
    %v660 = vand.u32 %v21, 4294901760
    %v661 = vsub.f32 %v21, %v660
    %v662 = vand.u32 %v661, 4294901760
    %663 = vmatpush1.msra.mxu0 %v662
    %664 = vmatprep.subr.mxu0 0.0
    %v665 = vand.u32 %v22, 4294901760
    %v666 = vsub.f32 %v22, %v665
    %v667 = vand.u32 %v666, 4294901760
    %668 = vmatpush1.msra.mxu0 %v667
    %669 = vmatprep.subr.mxu0 0.0
    %v670 = vand.u32 %v23, 4294901760
    %v671 = vsub.f32 %v23, %v670
    %v672 = vand.u32 %v671, 4294901760
    %673 = vmatpush1.msra.mxu0 %v672
    %674 = vmatprep.subr.mxu0 0.0
    %v675 = vand.u32 %v24, 4294901760
    %v676 = vsub.f32 %v24, %v675
    %v677 = vand.u32 %v676, 4294901760
    %678 = vmatpush1.msra.mxu0 %v677
    %679 = vmatprep.subr.mxu0 0.0
    %v680 = vand.u32 %v25, 4294901760
    %v681 = vsub.f32 %v25, %v680
    %v682 = vand.u32 %v681, 4294901760
    %683 = vmatpush1.msra.mxu0 %v682
    %684 = vmatprep.subr.mxu0 0.0
    %v685 = vand.u32 %v26, 4294901760
    %v686 = vsub.f32 %v26, %v685
    %v687 = vand.u32 %v686, 4294901760
    %688 = vmatpush1.msra.mxu0 %v687
    %689 = vmatprep.subr.mxu0 0.0
    %v690 = vand.u32 %v27, 4294901760
    %v691 = vsub.f32 %v27, %v690
    %v692 = vand.u32 %v691, 4294901760
    %693 = vmatpush1.msra.mxu0 %v692
    %694 = vmatprep.subr.mxu0 0.0
    %v695 = vand.u32 %v28, 4294901760
    %v696 = vsub.f32 %v28, %v695
    %v697 = vand.u32 %v696, 4294901760
    %698 = vmatpush1.msra.mxu0 %v697
    %699 = vmatprep.subr.mxu0 0.0
    %v700 = vand.u32 %v29, 4294901760
    %v701 = vsub.f32 %v29, %v700
    %v702 = vand.u32 %v701, 4294901760
    %703 = vmatpush1.msra.mxu0 %v702
    %704 = vmatprep.subr.mxu0 0.0
    %v705 = vand.u32 %v30, 4294901760
    %v706 = vsub.f32 %v30, %v705
    %v707 = vand.u32 %v706, 4294901760
    %708 = vmatpush1.msra.mxu0 %v707
    %709 = vmatprep.subr.mxu0 0.0
    %v710 = vand.u32 %v31, 4294901760
    %v711 = vsub.f32 %v31, %v710
    %v712 = vand.u32 %v711, 4294901760
    %713 = vmatpush1.msra.mxu0 %v712
    %714 = vmatprep.subr.mxu0 0.0
    %v715 = vand.u32 %v32, 4294901760
    %v716 = vsub.f32 %v32, %v715
    %v717 = vand.u32 %v716, 4294901760
    %718 = vmatpush1.msra.mxu0 %v717
    %719 = vmatprep.subr.mxu0 0.0
    %v720 = vand.u32 %v33, 4294901760
    %v721 = vsub.f32 %v33, %v720
    %v722 = vand.u32 %v721, 4294901760
    %723 = vmatpush1.msra.mxu0 %v722
    %724 = vmatprep.subr.mxu0 0.0
    %v725 = vand.u32 %v34, 4294901760
    %v726 = vsub.f32 %v34, %v725
    %v727 = vand.u32 %v726, 4294901760
    %728 = vmatpush1.msra.mxu0 %v727
    %729 = vmatprep.subr.mxu0 0.0
    %v730 = vand.u32 %v35, 4294901760
    %v731 = vsub.f32 %v35, %v730
    %v732 = vand.u32 %v731, 4294901760
    %733 = vmatpush1.msra.mxu0 %v732
    %734 = vmatprep.subr.mxu0 0.0
    %v735 = vand.u32 %v36, 4294901760
    %v736 = vsub.f32 %v36, %v735
    %v737 = vand.u32 %v736, 4294901760
    %738 = vmatpush1.msra.mxu0 %v737
    %739 = vmatprep.subr.mxu0 0.0
    %v740 = vand.u32 %v37, 4294901760
    %v741 = vsub.f32 %v37, %v740
    %v742 = vand.u32 %v741, 4294901760
    %743 = vmatpush1.msra.mxu0 %v742
    %744 = vmatprep.subr.mxu0 0.0
    %v745 = vand.u32 %v38, 4294901760
    %v746 = vsub.f32 %v38, %v745
    %v747 = vand.u32 %v746, 4294901760
    %748 = vmatpush1.msra.mxu0 %v747
    %749 = vmatprep.subr.mxu0 0.0
    %v750 = vand.u32 %v39, 4294901760
    %v751 = vsub.f32 %v39, %v750
    %v752 = vand.u32 %v751, 4294901760
    %753 = vmatpush1.msra.mxu0 %v752
    %754 = vmatprep.subr.mxu0 0.0
    %v755 = vand.u32 %v40, 4294901760
    %v756 = vsub.f32 %v40, %v755
    %v757 = vand.u32 %v756, 4294901760
    %758 = vmatpush1.msra.mxu0 %v757
    %759 = vmatprep.subr.mxu0 0.0
    %v760 = vand.u32 %v41, 4294901760
    %v761 = vsub.f32 %v41, %v760
    %v762 = vand.u32 %v761, 4294901760
    %763 = vmatpush1.msra.mxu0 %v762
    %764 = vmatprep.subr.mxu0 0.0
    %v765 = vand.u32 %v42, 4294901760
    %v766 = vsub.f32 %v42, %v765
    %v767 = vand.u32 %v766, 4294901760
    %768 = vmatpush1.msra.mxu0 %v767
    %769 = vmatprep.subr.mxu0 0.0
    %v770 = vand.u32 %v43, 4294901760
    %v771 = vsub.f32 %v43, %v770
    %v772 = vand.u32 %v771, 4294901760
    %773 = vmatpush1.msra.mxu0 %v772
    %774 = vmatprep.subr.mxu0 0.0
    %v775 = vand.u32 %v44, 4294901760
    %v776 = vsub.f32 %v44, %v775
    %v777 = vand.u32 %v776, 4294901760
    %778 = vmatpush1.msra.mxu0 %v777
    %779 = vmatprep.subr.mxu0 0.0
    %v780 = vand.u32 %v45, 4294901760
    %v781 = vsub.f32 %v45, %v780
    %v782 = vand.u32 %v781, 4294901760
    %783 = vmatpush1.msra.mxu0 %v782
    %784 = vmatprep.subr.mxu0 0.0
    %v785 = vand.u32 %v46, 4294901760
    %v786 = vsub.f32 %v46, %v785
    %v787 = vand.u32 %v786, 4294901760
    %788 = vmatpush1.msra.mxu0 %v787
    %789 = vmatprep.subr.mxu0 0.0
    %v790 = vand.u32 %v47, 4294901760
    %v791 = vsub.f32 %v47, %v790
    %v792 = vand.u32 %v791, 4294901760
    %793 = vmatpush1.msra.mxu0 %v792
    %794 = vmatprep.subr.mxu0 0.0
    %v795 = vand.u32 %v48, 4294901760
    %v796 = vsub.f32 %v48, %v795
    %v797 = vand.u32 %v796, 4294901760
    %798 = vmatpush1.msra.mxu0 %v797
    %v799 = vand.u32 %v16, 4294901760
    %800 = vmatprep.mubr.f32.mxu0 %v799
    %v801 = vand.u32 %v15, 4294901760
    %802 = vmatmul.mubr.f32.gmra.mrb[0].mxu0 %v801
    %v803 = vpop.f32.mrb[0].mxu0
    %v804 = vadd.f32 %v636, %v803
    %v805 = vpop.f32.mrb[0].mxu0
    %806 = vdwg.mxu0
    %807 = vmatprep.subr.mxu0 0.0
    %v808 = vand.u32 %v17, 4294901760
    %809 = vmatpush1.msra.mxu0 %v808
    %810 = vmatprep.subr.mxu0 0.0
    %v811 = vand.u32 %v18, 4294901760
    %812 = vmatpush1.msra.mxu0 %v811
    %813 = vmatprep.subr.mxu0 0.0
    %v814 = vand.u32 %v19, 4294901760
    %815 = vmatpush1.msra.mxu0 %v814
    %816 = vmatprep.subr.mxu0 0.0
    %v817 = vand.u32 %v20, 4294901760
    %818 = vmatpush1.msra.mxu0 %v817
    %819 = vmatprep.subr.mxu0 0.0
    %v820 = vand.u32 %v21, 4294901760
    %821 = vmatpush1.msra.mxu0 %v820
    %822 = vmatprep.subr.mxu0 0.0
    %v823 = vand.u32 %v22, 4294901760
    %824 = vmatpush1.msra.mxu0 %v823
    %825 = vmatprep.subr.mxu0 0.0
    %v826 = vand.u32 %v23, 4294901760
    %827 = vmatpush1.msra.mxu0 %v826
    %828 = vmatprep.subr.mxu0 0.0
    %v829 = vand.u32 %v24, 4294901760
    %830 = vmatpush1.msra.mxu0 %v829
    %831 = vmatprep.subr.mxu0 0.0
    %v832 = vand.u32 %v25, 4294901760
    %833 = vmatpush1.msra.mxu0 %v832
    %834 = vmatprep.subr.mxu0 0.0
    %v835 = vand.u32 %v26, 4294901760
    %836 = vmatpush1.msra.mxu0 %v835
    %837 = vmatprep.subr.mxu0 0.0
    %v838 = vand.u32 %v27, 4294901760
    %839 = vmatpush1.msra.mxu0 %v838
    %840 = vmatprep.subr.mxu0 0.0
    %v841 = vand.u32 %v28, 4294901760
    %842 = vmatpush1.msra.mxu0 %v841
    %843 = vmatprep.subr.mxu0 0.0
    %v844 = vand.u32 %v29, 4294901760
    %845 = vmatpush1.msra.mxu0 %v844
    %846 = vmatprep.subr.mxu0 0.0
    %v847 = vand.u32 %v30, 4294901760
    %848 = vmatpush1.msra.mxu0 %v847
    %849 = vmatprep.subr.mxu0 0.0
    %v850 = vand.u32 %v31, 4294901760
    %851 = vmatpush1.msra.mxu0 %v850
    %852 = vmatprep.subr.mxu0 0.0
    %v853 = vand.u32 %v32, 4294901760
    %854 = vmatpush1.msra.mxu0 %v853
    %855 = vmatprep.subr.mxu0 0.0
    %v856 = vand.u32 %v33, 4294901760
    %857 = vmatpush1.msra.mxu0 %v856
    %858 = vmatprep.subr.mxu0 0.0
    %v859 = vand.u32 %v34, 4294901760
    %860 = vmatpush1.msra.mxu0 %v859
    %861 = vmatprep.subr.mxu0 0.0
    %v862 = vand.u32 %v35, 4294901760
    %863 = vmatpush1.msra.mxu0 %v862
    %864 = vmatprep.subr.mxu0 0.0
    %v865 = vand.u32 %v36, 4294901760
    %866 = vmatpush1.msra.mxu0 %v865
    %867 = vmatprep.subr.mxu0 0.0
    %v868 = vand.u32 %v37, 4294901760
    %869 = vmatpush1.msra.mxu0 %v868
    %870 = vmatprep.subr.mxu0 0.0
    %v871 = vand.u32 %v38, 4294901760
    %872 = vmatpush1.msra.mxu0 %v871
    %873 = vmatprep.subr.mxu0 0.0
    %v874 = vand.u32 %v39, 4294901760
    %875 = vmatpush1.msra.mxu0 %v874
    %876 = vmatprep.subr.mxu0 0.0
    %v877 = vand.u32 %v40, 4294901760
    %878 = vmatpush1.msra.mxu0 %v877
    %879 = vmatprep.subr.mxu0 0.0
    %v880 = vand.u32 %v41, 4294901760
    %881 = vmatpush1.msra.mxu0 %v880
    %882 = vmatprep.subr.mxu0 0.0
    %v883 = vand.u32 %v42, 4294901760
    %884 = vmatpush1.msra.mxu0 %v883
    %885 = vmatprep.subr.mxu0 0.0
    %v886 = vand.u32 %v43, 4294901760
    %887 = vmatpush1.msra.mxu0 %v886
    %888 = vmatprep.subr.mxu0 0.0
    %v889 = vand.u32 %v44, 4294901760
    %890 = vmatpush1.msra.mxu0 %v889
    %891 = vmatprep.subr.mxu0 0.0
    %v892 = vand.u32 %v45, 4294901760
    %893 = vmatpush1.msra.mxu0 %v892
    %894 = vmatprep.subr.mxu0 0.0
    %v895 = vand.u32 %v46, 4294901760
    %896 = vmatpush1.msra.mxu0 %v895
    %897 = vmatprep.subr.mxu0 0.0
    %v898 = vand.u32 %v47, 4294901760
    %899 = vmatpush1.msra.mxu0 %v898
    %900 = vmatprep.subr.mxu0 0.0
    %v901 = vand.u32 %v48, 4294901760
    %902 = vmatpush1.msra.mxu0 %v901
    %v903 = vand.u32 %v16, 4294901760
    %904 = vmatprep.mubr.f32.mxu0 %v903
    %v905 = vand.u32 %v15, 4294901760
    %906 = vmatmul.mubr.f32.gmra.mrb[0].mxu0 %v905
    %v907 = vpop.f32.mrb[0].mxu0
    %v908 = vadd.f32 %v804, %v907
    %v909 = vpop.f32.mrb[0].mxu0
    %910 = vdwg.mxu0
    %s911 = scalar_lea.vmem %s1, 256
    %v912 = vld [vmem:[%s911] sm:$0xff]
    %v913 = vld [vmem:[%s911 + $0x8] sm:$0xff]
    %v914 = vld [vmem:[%s911 + $0x10] sm:$0xff]
    %v915 = vld [vmem:[%s911 + $0x18] sm:$0xff]
    %v916 = vld [vmem:[%s911 + $0x20] sm:$0xff]
    %v917 = vld [vmem:[%s911 + $0x28] sm:$0xff]
    %v918 = vld [vmem:[%s911 + $0x30] sm:$0xff]
    %v919 = vld [vmem:[%s911 + $0x38] sm:$0xff]
    %v920 = vld [vmem:[%s911 + $0x40] sm:$0xff]
    %v921 = vld [vmem:[%s911 + $0x48] sm:$0xff]
    %v922 = vld [vmem:[%s911 + $0x50] sm:$0xff]
    %v923 = vld [vmem:[%s911 + $0x58] sm:$0xff]
    %v924 = vld [vmem:[%s911 + $0x60] sm:$0xff]
    %v925 = vld [vmem:[%s911 + $0x68] sm:$0xff]
    %v926 = vld [vmem:[%s911 + $0x70] sm:$0xff]
    %v927 = vld [vmem:[%s911 + $0x78] sm:$0xff]
    %v928 = vld [vmem:[%s911 + $0x80] sm:$0xff]
    %v929 = vld [vmem:[%s911 + $0x88] sm:$0xff]
    %v930 = vld [vmem:[%s911 + $0x90] sm:$0xff]
    %v931 = vld [vmem:[%s911 + $0x98] sm:$0xff]
    %v932 = vld [vmem:[%s911 + $0xa0] sm:$0xff]
    %v933 = vld [vmem:[%s911 + $0xa8] sm:$0xff]
    %v934 = vld [vmem:[%s911 + $0xb0] sm:$0xff]
    %v935 = vld [vmem:[%s911 + $0xb8] sm:$0xff]
    %v936 = vld [vmem:[%s911 + $0xc0] sm:$0xff]
    %v937 = vld [vmem:[%s911 + $0xc8] sm:$0xff]
    %v938 = vld [vmem:[%s911 + $0xd0] sm:$0xff]
    %v939 = vld [vmem:[%s911 + $0xd8] sm:$0xff]
    %v940 = vld [vmem:[%s911 + $0xe0] sm:$0xff]
    %v941 = vld [vmem:[%s911 + $0xe8] sm:$0xff]
    %v942 = vld [vmem:[%s911 + $0xf0] sm:$0xff]
    %v943 = vld [vmem:[%s911 + $0xf8] sm:$0xff]
    %944 = vmatprep.subr.mxu0 0.0
    %v945 = vand.u32 %v912, 4294901760
    %946 = vmatpush1.msra.mxu0 %v945
    %947 = vmatprep.subr.mxu0 0.0
    %v948 = vand.u32 %v913, 4294901760
    %949 = vmatpush1.msra.mxu0 %v948
    %950 = vmatprep.subr.mxu0 0.0
    %v951 = vand.u32 %v914, 4294901760
    %952 = vmatpush1.msra.mxu0 %v951
    %953 = vmatprep.subr.mxu0 0.0
    %v954 = vand.u32 %v915, 4294901760
    %955 = vmatpush1.msra.mxu0 %v954
    %956 = vmatprep.subr.mxu0 0.0
    %v957 = vand.u32 %v916, 4294901760
    %958 = vmatpush1.msra.mxu0 %v957
    %959 = vmatprep.subr.mxu0 0.0
    %v960 = vand.u32 %v917, 4294901760
    %961 = vmatpush1.msra.mxu0 %v960
    %962 = vmatprep.subr.mxu0 0.0
    %v963 = vand.u32 %v918, 4294901760
    %964 = vmatpush1.msra.mxu0 %v963
    %965 = vmatprep.subr.mxu0 0.0
    %v966 = vand.u32 %v919, 4294901760
    %967 = vmatpush1.msra.mxu0 %v966
    %968 = vmatprep.subr.mxu0 0.0
    %v969 = vand.u32 %v920, 4294901760
    %970 = vmatpush1.msra.mxu0 %v969
    %971 = vmatprep.subr.mxu0 0.0
    %v972 = vand.u32 %v921, 4294901760
    %973 = vmatpush1.msra.mxu0 %v972
    %974 = vmatprep.subr.mxu0 0.0
    %v975 = vand.u32 %v922, 4294901760
    %976 = vmatpush1.msra.mxu0 %v975
    %977 = vmatprep.subr.mxu0 0.0
    %v978 = vand.u32 %v923, 4294901760
    %979 = vmatpush1.msra.mxu0 %v978
    %980 = vmatprep.subr.mxu0 0.0
    %v981 = vand.u32 %v924, 4294901760
    %982 = vmatpush1.msra.mxu0 %v981
    %983 = vmatprep.subr.mxu0 0.0
    %v984 = vand.u32 %v925, 4294901760
    %985 = vmatpush1.msra.mxu0 %v984
    %986 = vmatprep.subr.mxu0 0.0
    %v987 = vand.u32 %v926, 4294901760
    %988 = vmatpush1.msra.mxu0 %v987
    %989 = vmatprep.subr.mxu0 0.0
    %v990 = vand.u32 %v927, 4294901760
    %991 = vmatpush1.msra.mxu0 %v990
    %992 = vmatprep.subr.mxu0 0.0
    %v993 = vand.u32 %v928, 4294901760
    %994 = vmatpush1.msra.mxu0 %v993
    %995 = vmatprep.subr.mxu0 0.0
    %v996 = vand.u32 %v929, 4294901760
    %997 = vmatpush1.msra.mxu0 %v996
    %998 = vmatprep.subr.mxu0 0.0
    %v999 = vand.u32 %v930, 4294901760
    %1000 = vmatpush1.msra.mxu0 %v999
    %1001 = vmatprep.subr.mxu0 0.0
    %v1002 = vand.u32 %v931, 4294901760
    %1003 = vmatpush1.msra.mxu0 %v1002
    %1004 = vmatprep.subr.mxu0 0.0
    %v1005 = vand.u32 %v932, 4294901760
    %1006 = vmatpush1.msra.mxu0 %v1005
    %1007 = vmatprep.subr.mxu0 0.0
    %v1008 = vand.u32 %v933, 4294901760
    %1009 = vmatpush1.msra.mxu0 %v1008
    %1010 = vmatprep.subr.mxu0 0.0
    %v1011 = vand.u32 %v934, 4294901760
    %1012 = vmatpush1.msra.mxu0 %v1011
    %1013 = vmatprep.subr.mxu0 0.0
    %v1014 = vand.u32 %v935, 4294901760
    %1015 = vmatpush1.msra.mxu0 %v1014
    %1016 = vmatprep.subr.mxu0 0.0
    %v1017 = vand.u32 %v936, 4294901760
    %1018 = vmatpush1.msra.mxu0 %v1017
    %1019 = vmatprep.subr.mxu0 0.0
    %v1020 = vand.u32 %v937, 4294901760
    %1021 = vmatpush1.msra.mxu0 %v1020
    %1022 = vmatprep.subr.mxu0 0.0
    %v1023 = vand.u32 %v938, 4294901760
    %1024 = vmatpush1.msra.mxu0 %v1023
    %1025 = vmatprep.subr.mxu0 0.0
    %v1026 = vand.u32 %v939, 4294901760
    %1027 = vmatpush1.msra.mxu0 %v1026
    %1028 = vmatprep.subr.mxu0 0.0
    %v1029 = vand.u32 %v940, 4294901760
    %1030 = vmatpush1.msra.mxu0 %v1029
    %1031 = vmatprep.subr.mxu0 0.0
    %v1032 = vand.u32 %v941, 4294901760
    %1033 = vmatpush1.msra.mxu0 %v1032
    %1034 = vmatprep.subr.mxu0 0.0
    %v1035 = vand.u32 %v942, 4294901760
    %1036 = vmatpush1.msra.mxu0 %v1035
    %1037 = vmatprep.subr.mxu0 0.0
    %v1038 = vand.u32 %v943, 4294901760
    %1039 = vmatpush1.msra.mxu0 %v1038
    %v1040 = vand.u32 %v16, 4294901760
    %v1041 = vsub.f32 %v16, %v1040
    %v1042 = vand.u32 %v1041, 4294901760
    %v1043 = vsub.f32 %v1041, %v1042
    %v1044 = vand.u32 %v1043, 4294901760
    %1045 = vmatprep.mubr.f32.mxu0 %v1044
    %v1046 = vand.u32 %v15, 4294901760
    %v1047 = vsub.f32 %v15, %v1046
    %v1048 = vand.u32 %v1047, 4294901760
    %v1049 = vsub.f32 %v1047, %v1048
    %v1050 = vand.u32 %v1049, 4294901760
    %1051 = vmatmul.mubr.f32.gmra.mrb[0].mxu0 %v1050
    %v1052 = vpop.f32.mrb[0].mxu0
    %v1053 = vadd.f32 0.0, %v1052
    %v1054 = vpop.f32.mrb[0].mxu0
    %1055 = vdwg.mxu0
    %1056 = vmatprep.subr.mxu0 0.0
    %v1057 = vand.u32 %v912, 4294901760
    %v1058 = vsub.f32 %v912, %v1057
    %v1059 = vand.u32 %v1058, 4294901760
    %v1060 = vsub.f32 %v1058, %v1059
    %v1061 = vand.u32 %v1060, 4294901760
    %1062 = vmatpush1.msra.mxu0 %v1061
    %1063 = vmatprep.subr.mxu0 0.0
    %v1064 = vand.u32 %v913, 4294901760
    %v1065 = vsub.f32 %v913, %v1064
    %v1066 = vand.u32 %v1065, 4294901760
    %v1067 = vsub.f32 %v1065, %v1066
    %v1068 = vand.u32 %v1067, 4294901760
    %1069 = vmatpush1.msra.mxu0 %v1068
    %1070 = vmatprep.subr.mxu0 0.0
    %v1071 = vand.u32 %v914, 4294901760
    %v1072 = vsub.f32 %v914, %v1071
    %v1073 = vand.u32 %v1072, 4294901760
    %v1074 = vsub.f32 %v1072, %v1073
    %v1075 = vand.u32 %v1074, 4294901760
    %1076 = vmatpush1.msra.mxu0 %v1075
    %1077 = vmatprep.subr.mxu0 0.0
    %v1078 = vand.u32 %v915, 4294901760
    %v1079 = vsub.f32 %v915, %v1078
    %v1080 = vand.u32 %v1079, 4294901760
    %v1081 = vsub.f32 %v1079, %v1080
    %v1082 = vand.u32 %v1081, 4294901760
    %1083 = vmatpush1.msra.mxu0 %v1082
    %1084 = vmatprep.subr.mxu0 0.0
    %v1085 = vand.u32 %v916, 4294901760
    %v1086 = vsub.f32 %v916, %v1085
    %v1087 = vand.u32 %v1086, 4294901760
    %v1088 = vsub.f32 %v1086, %v1087
    %v1089 = vand.u32 %v1088, 4294901760
    %1090 = vmatpush1.msra.mxu0 %v1089
    %1091 = vmatprep.subr.mxu0 0.0
    %v1092 = vand.u32 %v917, 4294901760
    %v1093 = vsub.f32 %v917, %v1092
    %v1094 = vand.u32 %v1093, 4294901760
    %v1095 = vsub.f32 %v1093, %v1094
    %v1096 = vand.u32 %v1095, 4294901760
    %1097 = vmatpush1.msra.mxu0 %v1096
    %1098 = vmatprep.subr.mxu0 0.0
    %v1099 = vand.u32 %v918, 4294901760
    %v1100 = vsub.f32 %v918, %v1099
    %v1101 = vand.u32 %v1100, 4294901760
    %v1102 = vsub.f32 %v1100, %v1101
    %v1103 = vand.u32 %v1102, 4294901760
    %1104 = vmatpush1.msra.mxu0 %v1103
    %1105 = vmatprep.subr.mxu0 0.0
    %v1106 = vand.u32 %v919, 4294901760
    %v1107 = vsub.f32 %v919, %v1106
    %v1108 = vand.u32 %v1107, 4294901760
    %v1109 = vsub.f32 %v1107, %v1108
    %v1110 = vand.u32 %v1109, 4294901760
    %1111 = vmatpush1.msra.mxu0 %v1110
    %1112 = vmatprep.subr.mxu0 0.0
    %v1113 = vand.u32 %v920, 4294901760
    %v1114 = vsub.f32 %v920, %v1113
    %v1115 = vand.u32 %v1114, 4294901760
    %v1116 = vsub.f32 %v1114, %v1115
    %v1117 = vand.u32 %v1116, 4294901760
    %1118 = vmatpush1.msra.mxu0 %v1117
    %1119 = vmatprep.subr.mxu0 0.0
    %v1120 = vand.u32 %v921, 4294901760
    %v1121 = vsub.f32 %v921, %v1120
    %v1122 = vand.u32 %v1121, 4294901760
    %v1123 = vsub.f32 %v1121, %v1122
    %v1124 = vand.u32 %v1123, 4294901760
    %1125 = vmatpush1.msra.mxu0 %v1124
    %1126 = vmatprep.subr.mxu0 0.0
    %v1127 = vand.u32 %v922, 4294901760
    %v1128 = vsub.f32 %v922, %v1127
    %v1129 = vand.u32 %v1128, 4294901760
    %v1130 = vsub.f32 %v1128, %v1129
    %v1131 = vand.u32 %v1130, 4294901760
    %1132 = vmatpush1.msra.mxu0 %v1131
    %1133 = vmatprep.subr.mxu0 0.0
    %v1134 = vand.u32 %v923, 4294901760
    %v1135 = vsub.f32 %v923, %v1134
    %v1136 = vand.u32 %v1135, 4294901760
    %v1137 = vsub.f32 %v1135, %v1136
    %v1138 = vand.u32 %v1137, 4294901760
    %1139 = vmatpush1.msra.mxu0 %v1138
    %1140 = vmatprep.subr.mxu0 0.0
    %v1141 = vand.u32 %v924, 4294901760
    %v1142 = vsub.f32 %v924, %v1141
    %v1143 = vand.u32 %v1142, 4294901760
    %v1144 = vsub.f32 %v1142, %v1143
    %v1145 = vand.u32 %v1144, 4294901760
    %1146 = vmatpush1.msra.mxu0 %v1145
    %1147 = vmatprep.subr.mxu0 0.0
    %v1148 = vand.u32 %v925, 4294901760
    %v1149 = vsub.f32 %v925, %v1148
    %v1150 = vand.u32 %v1149, 4294901760
    %v1151 = vsub.f32 %v1149, %v1150
    %v1152 = vand.u32 %v1151, 4294901760
    %1153 = vmatpush1.msra.mxu0 %v1152
    %1154 = vmatprep.subr.mxu0 0.0
    %v1155 = vand.u32 %v926, 4294901760
    %v1156 = vsub.f32 %v926, %v1155
    %v1157 = vand.u32 %v1156, 4294901760
    %v1158 = vsub.f32 %v1156, %v1157
    %v1159 = vand.u32 %v1158, 4294901760
    %1160 = vmatpush1.msra.mxu0 %v1159
    %1161 = vmatprep.subr.mxu0 0.0
    %v1162 = vand.u32 %v927, 4294901760
    %v1163 = vsub.f32 %v927, %v1162
    %v1164 = vand.u32 %v1163, 4294901760
    %v1165 = vsub.f32 %v1163, %v1164
    %v1166 = vand.u32 %v1165, 4294901760
    %1167 = vmatpush1.msra.mxu0 %v1166
    %1168 = vmatprep.subr.mxu0 0.0
    %v1169 = vand.u32 %v928, 4294901760
    %v1170 = vsub.f32 %v928, %v1169
    %v1171 = vand.u32 %v1170, 4294901760
    %v1172 = vsub.f32 %v1170, %v1171
    %v1173 = vand.u32 %v1172, 4294901760
    %1174 = vmatpush1.msra.mxu0 %v1173
    %1175 = vmatprep.subr.mxu0 0.0
    %v1176 = vand.u32 %v929, 4294901760
    %v1177 = vsub.f32 %v929, %v1176
    %v1178 = vand.u32 %v1177, 4294901760
    %v1179 = vsub.f32 %v1177, %v1178
    %v1180 = vand.u32 %v1179, 4294901760
    %1181 = vmatpush1.msra.mxu0 %v1180
    %1182 = vmatprep.subr.mxu0 0.0
    %v1183 = vand.u32 %v930, 4294901760
    %v1184 = vsub.f32 %v930, %v1183
    %v1185 = vand.u32 %v1184, 4294901760
    %v1186 = vsub.f32 %v1184, %v1185
    %v1187 = vand.u32 %v1186, 4294901760
    %1188 = vmatpush1.msra.mxu0 %v1187
    %1189 = vmatprep.subr.mxu0 0.0
    %v1190 = vand.u32 %v931, 4294901760
    %v1191 = vsub.f32 %v931, %v1190
    %v1192 = vand.u32 %v1191, 4294901760
    %v1193 = vsub.f32 %v1191, %v1192
    %v1194 = vand.u32 %v1193, 4294901760
    %1195 = vmatpush1.msra.mxu0 %v1194
    %1196 = vmatprep.subr.mxu0 0.0
    %v1197 = vand.u32 %v932, 4294901760
    %v1198 = vsub.f32 %v932, %v1197
    %v1199 = vand.u32 %v1198, 4294901760
    %v1200 = vsub.f32 %v1198, %v1199
    %v1201 = vand.u32 %v1200, 4294901760
    %1202 = vmatpush1.msra.mxu0 %v1201
    %1203 = vmatprep.subr.mxu0 0.0
    %v1204 = vand.u32 %v933, 4294901760
    %v1205 = vsub.f32 %v933, %v1204
    %v1206 = vand.u32 %v1205, 4294901760
    %v1207 = vsub.f32 %v1205, %v1206
    %v1208 = vand.u32 %v1207, 4294901760
    %1209 = vmatpush1.msra.mxu0 %v1208
    %1210 = vmatprep.subr.mxu0 0.0
    %v1211 = vand.u32 %v934, 4294901760
    %v1212 = vsub.f32 %v934, %v1211
    %v1213 = vand.u32 %v1212, 4294901760
    %v1214 = vsub.f32 %v1212, %v1213
    %v1215 = vand.u32 %v1214, 4294901760
    %1216 = vmatpush1.msra.mxu0 %v1215
    %1217 = vmatprep.subr.mxu0 0.0
    %v1218 = vand.u32 %v935, 4294901760
    %v1219 = vsub.f32 %v935, %v1218
    %v1220 = vand.u32 %v1219, 4294901760
    %v1221 = vsub.f32 %v1219, %v1220
    %v1222 = vand.u32 %v1221, 4294901760
    %1223 = vmatpush1.msra.mxu0 %v1222
    %1224 = vmatprep.subr.mxu0 0.0
    %v1225 = vand.u32 %v936, 4294901760
    %v1226 = vsub.f32 %v936, %v1225
    %v1227 = vand.u32 %v1226, 4294901760
    %v1228 = vsub.f32 %v1226, %v1227
    %v1229 = vand.u32 %v1228, 4294901760
    %1230 = vmatpush1.msra.mxu0 %v1229
    %1231 = vmatprep.subr.mxu0 0.0
    %v1232 = vand.u32 %v937, 4294901760
    %v1233 = vsub.f32 %v937, %v1232
    %v1234 = vand.u32 %v1233, 4294901760
    %v1235 = vsub.f32 %v1233, %v1234
    %v1236 = vand.u32 %v1235, 4294901760
    %1237 = vmatpush1.msra.mxu0 %v1236
    %1238 = vmatprep.subr.mxu0 0.0
    %v1239 = vand.u32 %v938, 4294901760
    %v1240 = vsub.f32 %v938, %v1239
    %v1241 = vand.u32 %v1240, 4294901760
    %v1242 = vsub.f32 %v1240, %v1241
    %v1243 = vand.u32 %v1242, 4294901760
    %1244 = vmatpush1.msra.mxu0 %v1243
    %1245 = vmatprep.subr.mxu0 0.0
    %v1246 = vand.u32 %v939, 4294901760
    %v1247 = vsub.f32 %v939, %v1246
    %v1248 = vand.u32 %v1247, 4294901760
    %v1249 = vsub.f32 %v1247, %v1248
    %v1250 = vand.u32 %v1249, 4294901760
    %1251 = vmatpush1.msra.mxu0 %v1250
    %1252 = vmatprep.subr.mxu0 0.0
    %v1253 = vand.u32 %v940, 4294901760
    %v1254 = vsub.f32 %v940, %v1253
    %v1255 = vand.u32 %v1254, 4294901760
    %v1256 = vsub.f32 %v1254, %v1255
    %v1257 = vand.u32 %v1256, 4294901760
    %1258 = vmatpush1.msra.mxu0 %v1257
    %1259 = vmatprep.subr.mxu0 0.0
    %v1260 = vand.u32 %v941, 4294901760
    %v1261 = vsub.f32 %v941, %v1260
    %v1262 = vand.u32 %v1261, 4294901760
    %v1263 = vsub.f32 %v1261, %v1262
    %v1264 = vand.u32 %v1263, 4294901760
    %1265 = vmatpush1.msra.mxu0 %v1264
    %1266 = vmatprep.subr.mxu0 0.0
    %v1267 = vand.u32 %v942, 4294901760
    %v1268 = vsub.f32 %v942, %v1267
    %v1269 = vand.u32 %v1268, 4294901760
    %v1270 = vsub.f32 %v1268, %v1269
    %v1271 = vand.u32 %v1270, 4294901760
    %1272 = vmatpush1.msra.mxu0 %v1271
    %1273 = vmatprep.subr.mxu0 0.0
    %v1274 = vand.u32 %v943, 4294901760
    %v1275 = vsub.f32 %v943, %v1274
    %v1276 = vand.u32 %v1275, 4294901760
    %v1277 = vsub.f32 %v1275, %v1276
    %v1278 = vand.u32 %v1277, 4294901760
    %1279 = vmatpush1.msra.mxu0 %v1278
    %v1280 = vand.u32 %v16, 4294901760
    %1281 = vmatprep.mubr.f32.mxu0 %v1280
    %v1282 = vand.u32 %v15, 4294901760
    %1283 = vmatmul.mubr.f32.gmra.mrb[0].mxu0 %v1282
    %v1284 = vpop.f32.mrb[0].mxu0
    %v1285 = vadd.f32 %v1053, %v1284
    %v1286 = vpop.f32.mrb[0].mxu0
    %1287 = vdwg.mxu0
    %1288 = vmatprep.subr.mxu0 0.0
    %v1289 = vand.u32 %v912, 4294901760
    %v1290 = vsub.f32 %v912, %v1289
    %1291 = vmatpush1.msra.mxu0 %v1290
    %1292 = vmatprep.subr.mxu0 0.0
    %v1293 = vand.u32 %v913, 4294901760
    %v1294 = vsub.f32 %v913, %v1293
    %1295 = vmatpush1.msra.mxu0 %v1294
    %1296 = vmatprep.subr.mxu0 0.0
    %v1297 = vand.u32 %v914, 4294901760
    %v1298 = vsub.f32 %v914, %v1297
    %1299 = vmatpush1.msra.mxu0 %v1298
    %1300 = vmatprep.subr.mxu0 0.0
    %v1301 = vand.u32 %v915, 4294901760
    %v1302 = vsub.f32 %v915, %v1301
    %1303 = vmatpush1.msra.mxu0 %v1302
    %1304 = vmatprep.subr.mxu0 0.0
    %v1305 = vand.u32 %v916, 4294901760
    %v1306 = vsub.f32 %v916, %v1305
    %1307 = vmatpush1.msra.mxu0 %v1306
    %1308 = vmatprep.subr.mxu0 0.0
    %v1309 = vand.u32 %v917, 4294901760
    %v1310 = vsub.f32 %v917, %v1309
    %1311 = vmatpush1.msra.mxu0 %v1310
    %1312 = vmatprep.subr.mxu0 0.0
    %v1313 = vand.u32 %v918, 4294901760
    %v1314 = vsub.f32 %v918, %v1313
    %1315 = vmatpush1.msra.mxu0 %v1314
    %1316 = vmatprep.subr.mxu0 0.0
    %v1317 = vand.u32 %v919, 4294901760
    %v1318 = vsub.f32 %v919, %v1317
    %1319 = vmatpush1.msra.mxu0 %v1318
    %1320 = vmatprep.subr.mxu0 0.0
    %v1321 = vand.u32 %v920, 4294901760
    %v1322 = vsub.f32 %v920, %v1321
    %1323 = vmatpush1.msra.mxu0 %v1322
    %1324 = vmatprep.subr.mxu0 0.0
    %v1325 = vand.u32 %v921, 4294901760
    %v1326 = vsub.f32 %v921, %v1325
    %1327 = vmatpush1.msra.mxu0 %v1326
    %1328 = vmatprep.subr.mxu0 0.0
    %v1329 = vand.u32 %v922, 4294901760
    %v1330 = vsub.f32 %v922, %v1329
    %1331 = vmatpush1.msra.mxu0 %v1330
    %1332 = vmatprep.subr.mxu0 0.0
    %v1333 = vand.u32 %v923, 4294901760
    %v1334 = vsub.f32 %v923, %v1333
    %1335 = vmatpush1.msra.mxu0 %v1334
    %1336 = vmatprep.subr.mxu0 0.0
    %v1337 = vand.u32 %v924, 4294901760
    %v1338 = vsub.f32 %v924, %v1337
    %1339 = vmatpush1.msra.mxu0 %v1338
    %1340 = vmatprep.subr.mxu0 0.0
    %v1341 = vand.u32 %v925, 4294901760
    %v1342 = vsub.f32 %v925, %v1341
    %1343 = vmatpush1.msra.mxu0 %v1342
    %1344 = vmatprep.subr.mxu0 0.0
    %v1345 = vand.u32 %v926, 4294901760
    %v1346 = vsub.f32 %v926, %v1345
    %1347 = vmatpush1.msra.mxu0 %v1346
    %1348 = vmatprep.subr.mxu0 0.0
    %v1349 = vand.u32 %v927, 4294901760
    %v1350 = vsub.f32 %v927, %v1349
    %1351 = vmatpush1.msra.mxu0 %v1350
    %1352 = vmatprep.subr.mxu0 0.0
    %v1353 = vand.u32 %v928, 4294901760
    %v1354 = vsub.f32 %v928, %v1353
    %1355 = vmatpush1.msra.mxu0 %v1354
    %1356 = vmatprep.subr.mxu0 0.0
    %v1357 = vand.u32 %v929, 4294901760
    %v1358 = vsub.f32 %v929, %v1357
    %1359 = vmatpush1.msra.mxu0 %v1358
    %1360 = vmatprep.subr.mxu0 0.0
    %v1361 = vand.u32 %v930, 4294901760
    %v1362 = vsub.f32 %v930, %v1361
    %1363 = vmatpush1.msra.mxu0 %v1362
    %1364 = vmatprep.subr.mxu0 0.0
    %v1365 = vand.u32 %v931, 4294901760
    %v1366 = vsub.f32 %v931, %v1365
    %1367 = vmatpush1.msra.mxu0 %v1366
    %1368 = vmatprep.subr.mxu0 0.0
    %v1369 = vand.u32 %v932, 4294901760
    %v1370 = vsub.f32 %v932, %v1369
    %1371 = vmatpush1.msra.mxu0 %v1370
    %1372 = vmatprep.subr.mxu0 0.0
    %v1373 = vand.u32 %v933, 4294901760
    %v1374 = vsub.f32 %v933, %v1373
    %1375 = vmatpush1.msra.mxu0 %v1374
    %1376 = vmatprep.subr.mxu0 0.0
    %v1377 = vand.u32 %v934, 4294901760
    %v1378 = vsub.f32 %v934, %v1377
    %1379 = vmatpush1.msra.mxu0 %v1378
    %1380 = vmatprep.subr.mxu0 0.0
    %v1381 = vand.u32 %v935, 4294901760
    %v1382 = vsub.f32 %v935, %v1381
    %1383 = vmatpush1.msra.mxu0 %v1382
    %1384 = vmatprep.subr.mxu0 0.0
    %v1385 = vand.u32 %v936, 4294901760
    %v1386 = vsub.f32 %v936, %v1385
    %1387 = vmatpush1.msra.mxu0 %v1386
    %1388 = vmatprep.subr.mxu0 0.0
    %v1389 = vand.u32 %v937, 4294901760
    %v1390 = vsub.f32 %v937, %v1389
    %1391 = vmatpush1.msra.mxu0 %v1390
    %1392 = vmatprep.subr.mxu0 0.0
    %v1393 = vand.u32 %v938, 4294901760
    %v1394 = vsub.f32 %v938, %v1393
    %1395 = vmatpush1.msra.mxu0 %v1394
    %1396 = vmatprep.subr.mxu0 0.0
    %v1397 = vand.u32 %v939, 4294901760
    %v1398 = vsub.f32 %v939, %v1397
    %1399 = vmatpush1.msra.mxu0 %v1398
    %1400 = vmatprep.subr.mxu0 0.0
    %v1401 = vand.u32 %v940, 4294901760
    %v1402 = vsub.f32 %v940, %v1401
    %1403 = vmatpush1.msra.mxu0 %v1402
    %1404 = vmatprep.subr.mxu0 0.0
    %v1405 = vand.u32 %v941, 4294901760
    %v1406 = vsub.f32 %v941, %v1405
    %1407 = vmatpush1.msra.mxu0 %v1406
    %1408 = vmatprep.subr.mxu0 0.0
    %v1409 = vand.u32 %v942, 4294901760
    %v1410 = vsub.f32 %v942, %v1409
    %1411 = vmatpush1.msra.mxu0 %v1410
    %1412 = vmatprep.subr.mxu0 0.0
    %v1413 = vand.u32 %v943, 4294901760
    %v1414 = vsub.f32 %v943, %v1413
    %1415 = vmatpush1.msra.mxu0 %v1414
    %v1416 = vand.u32 %v16, 4294901760
    %v1417 = vsub.f32 %v16, %v1416
    %1418 = vmatprep.mubr.f32.mxu0 %v1417
    %v1419 = vand.u32 %v15, 4294901760
    %v1420 = vsub.f32 %v15, %v1419
    %1421 = vmatmul.mubr.f32.gmra.mrb[0].mxu0 %v1420
    %v1422 = vpop.f32.mrb[0].mxu0
    %v1423 = vadd.f32 %v1285, %v1422
    %v1424 = vpop.f32.mrb[0].mxu0
    %1425 = vdwg.mxu0
    %1426 = vmatprep.subr.mxu0 0.0
    %v1427 = vand.u32 %v912, 4294901760
    %1428 = vmatpush1.msra.mxu0 %v1427
    %1429 = vmatprep.subr.mxu0 0.0
    %v1430 = vand.u32 %v913, 4294901760
    %1431 = vmatpush1.msra.mxu0 %v1430
    %1432 = vmatprep.subr.mxu0 0.0
    %v1433 = vand.u32 %v914, 4294901760
    %1434 = vmatpush1.msra.mxu0 %v1433
    %1435 = vmatprep.subr.mxu0 0.0
    %v1436 = vand.u32 %v915, 4294901760
    %1437 = vmatpush1.msra.mxu0 %v1436
    %1438 = vmatprep.subr.mxu0 0.0
    %v1439 = vand.u32 %v916, 4294901760
    %1440 = vmatpush1.msra.mxu0 %v1439
    %1441 = vmatprep.subr.mxu0 0.0
    %v1442 = vand.u32 %v917, 4294901760
    %1443 = vmatpush1.msra.mxu0 %v1442
    %1444 = vmatprep.subr.mxu0 0.0
    %v1445 = vand.u32 %v918, 4294901760
    %1446 = vmatpush1.msra.mxu0 %v1445
    %1447 = vmatprep.subr.mxu0 0.0
    %v1448 = vand.u32 %v919, 4294901760
    %1449 = vmatpush1.msra.mxu0 %v1448
    %1450 = vmatprep.subr.mxu0 0.0
    %v1451 = vand.u32 %v920, 4294901760
    %1452 = vmatpush1.msra.mxu0 %v1451
    %1453 = vmatprep.subr.mxu0 0.0
    %v1454 = vand.u32 %v921, 4294901760
    %1455 = vmatpush1.msra.mxu0 %v1454
    %1456 = vmatprep.subr.mxu0 0.0
    %v1457 = vand.u32 %v922, 4294901760
    %1458 = vmatpush1.msra.mxu0 %v1457
    %1459 = vmatprep.subr.mxu0 0.0
    %v1460 = vand.u32 %v923, 4294901760
    %1461 = vmatpush1.msra.mxu0 %v1460
    %1462 = vmatprep.subr.mxu0 0.0
    %v1463 = vand.u32 %v924, 4294901760
    %1464 = vmatpush1.msra.mxu0 %v1463
    %1465 = vmatprep.subr.mxu0 0.0
    %v1466 = vand.u32 %v925, 4294901760
    %1467 = vmatpush1.msra.mxu0 %v1466
    %1468 = vmatprep.subr.mxu0 0.0
    %v1469 = vand.u32 %v926, 4294901760
    %1470 = vmatpush1.msra.mxu0 %v1469
    %1471 = vmatprep.subr.mxu0 0.0
    %v1472 = vand.u32 %v927, 4294901760
    %1473 = vmatpush1.msra.mxu0 %v1472
    %1474 = vmatprep.subr.mxu0 0.0
    %v1475 = vand.u32 %v928, 4294901760
    %1476 = vmatpush1.msra.mxu0 %v1475
    %1477 = vmatprep.subr.mxu0 0.0
    %v1478 = vand.u32 %v929, 4294901760
    %1479 = vmatpush1.msra.mxu0 %v1478
    %1480 = vmatprep.subr.mxu0 0.0
    %v1481 = vand.u32 %v930, 4294901760
    %1482 = vmatpush1.msra.mxu0 %v1481
    %1483 = vmatprep.subr.mxu0 0.0
    %v1484 = vand.u32 %v931, 4294901760
    %1485 = vmatpush1.msra.mxu0 %v1484
    %1486 = vmatprep.subr.mxu0 0.0
    %v1487 = vand.u32 %v932, 4294901760
    %1488 = vmatpush1.msra.mxu0 %v1487
    %1489 = vmatprep.subr.mxu0 0.0
    %v1490 = vand.u32 %v933, 4294901760
    %1491 = vmatpush1.msra.mxu0 %v1490
    %1492 = vmatprep.subr.mxu0 0.0
    %v1493 = vand.u32 %v934, 4294901760
    %1494 = vmatpush1.msra.mxu0 %v1493
    %1495 = vmatprep.subr.mxu0 0.0
    %v1496 = vand.u32 %v935, 4294901760
    %1497 = vmatpush1.msra.mxu0 %v1496
    %1498 = vmatprep.subr.mxu0 0.0
    %v1499 = vand.u32 %v936, 4294901760
    %1500 = vmatpush1.msra.mxu0 %v1499
    %1501 = vmatprep.subr.mxu0 0.0
    %v1502 = vand.u32 %v937, 4294901760
    %1503 = vmatpush1.msra.mxu0 %v1502
    %1504 = vmatprep.subr.mxu0 0.0
    %v1505 = vand.u32 %v938, 4294901760
    %1506 = vmatpush1.msra.mxu0 %v1505
    %1507 = vmatprep.subr.mxu0 0.0
    %v1508 = vand.u32 %v939, 4294901760
    %1509 = vmatpush1.msra.mxu0 %v1508
    %1510 = vmatprep.subr.mxu0 0.0
    %v1511 = vand.u32 %v940, 4294901760
    %1512 = vmatpush1.msra.mxu0 %v1511
    %1513 = vmatprep.subr.mxu0 0.0
    %v1514 = vand.u32 %v941, 4294901760
    %1515 = vmatpush1.msra.mxu0 %v1514
    %1516 = vmatprep.subr.mxu0 0.0
    %v1517 = vand.u32 %v942, 4294901760
    %1518 = vmatpush1.msra.mxu0 %v1517
    %1519 = vmatprep.subr.mxu0 0.0
    %v1520 = vand.u32 %v943, 4294901760
    %1521 = vmatpush1.msra.mxu0 %v1520
    %v1522 = vand.u32 %v16, 4294901760
    %v1523 = vsub.f32 %v16, %v1522
    %v1524 = vand.u32 %v1523, 4294901760
    %1525 = vmatprep.mubr.f32.mxu0 %v1524
    %v1526 = vand.u32 %v15, 4294901760
    %v1527 = vsub.f32 %v15, %v1526
    %v1528 = vand.u32 %v1527, 4294901760
    %1529 = vmatmul.mubr.f32.gmra.mrb[0].mxu0 %v1528
    %v1530 = vpop.f32.mrb[0].mxu0
    %v1531 = vadd.f32 %v1423, %v1530
    %v1532 = vpop.f32.mrb[0].mxu0
    %1533 = vdwg.mxu0
    %1534 = vmatprep.subr.mxu0 0.0
    %v1535 = vand.u32 %v912, 4294901760
    %v1536 = vsub.f32 %v912, %v1535
    %v1537 = vand.u32 %v1536, 4294901760
    %1538 = vmatpush1.msra.mxu0 %v1537
    %1539 = vmatprep.subr.mxu0 0.0
    %v1540 = vand.u32 %v913, 4294901760
    %v1541 = vsub.f32 %v913, %v1540
    %v1542 = vand.u32 %v1541, 4294901760
    %1543 = vmatpush1.msra.mxu0 %v1542
    %1544 = vmatprep.subr.mxu0 0.0
    %v1545 = vand.u32 %v914, 4294901760
    %v1546 = vsub.f32 %v914, %v1545
    %v1547 = vand.u32 %v1546, 4294901760
    %1548 = vmatpush1.msra.mxu0 %v1547
    %1549 = vmatprep.subr.mxu0 0.0
    %v1550 = vand.u32 %v915, 4294901760
    %v1551 = vsub.f32 %v915, %v1550
    %v1552 = vand.u32 %v1551, 4294901760
    %1553 = vmatpush1.msra.mxu0 %v1552
    %1554 = vmatprep.subr.mxu0 0.0
    %v1555 = vand.u32 %v916, 4294901760
    %v1556 = vsub.f32 %v916, %v1555
    %v1557 = vand.u32 %v1556, 4294901760
    %1558 = vmatpush1.msra.mxu0 %v1557
    %1559 = vmatprep.subr.mxu0 0.0
    %v1560 = vand.u32 %v917, 4294901760
    %v1561 = vsub.f32 %v917, %v1560
    %v1562 = vand.u32 %v1561, 4294901760
    %1563 = vmatpush1.msra.mxu0 %v1562
    %1564 = vmatprep.subr.mxu0 0.0
    %v1565 = vand.u32 %v918, 4294901760
    %v1566 = vsub.f32 %v918, %v1565
    %v1567 = vand.u32 %v1566, 4294901760
    %1568 = vmatpush1.msra.mxu0 %v1567
    %1569 = vmatprep.subr.mxu0 0.0
    %v1570 = vand.u32 %v919, 4294901760
    %v1571 = vsub.f32 %v919, %v1570
    %v1572 = vand.u32 %v1571, 4294901760
    %1573 = vmatpush1.msra.mxu0 %v1572
    %1574 = vmatprep.subr.mxu0 0.0
    %v1575 = vand.u32 %v920, 4294901760
    %v1576 = vsub.f32 %v920, %v1575
    %v1577 = vand.u32 %v1576, 4294901760
    %1578 = vmatpush1.msra.mxu0 %v1577
    %1579 = vmatprep.subr.mxu0 0.0
    %v1580 = vand.u32 %v921, 4294901760
    %v1581 = vsub.f32 %v921, %v1580
    %v1582 = vand.u32 %v1581, 4294901760
    %1583 = vmatpush1.msra.mxu0 %v1582
    %1584 = vmatprep.subr.mxu0 0.0
    %v1585 = vand.u32 %v922, 4294901760
    %v1586 = vsub.f32 %v922, %v1585
    %v1587 = vand.u32 %v1586, 4294901760
    %1588 = vmatpush1.msra.mxu0 %v1587
    %1589 = vmatprep.subr.mxu0 0.0
    %v1590 = vand.u32 %v923, 4294901760
    %v1591 = vsub.f32 %v923, %v1590
    %v1592 = vand.u32 %v1591, 4294901760
    %1593 = vmatpush1.msra.mxu0 %v1592
    %1594 = vmatprep.subr.mxu0 0.0
    %v1595 = vand.u32 %v924, 4294901760
    %v1596 = vsub.f32 %v924, %v1595
    %v1597 = vand.u32 %v1596, 4294901760
    %1598 = vmatpush1.msra.mxu0 %v1597
    %1599 = vmatprep.subr.mxu0 0.0
    %v1600 = vand.u32 %v925, 4294901760
    %v1601 = vsub.f32 %v925, %v1600
    %v1602 = vand.u32 %v1601, 4294901760
    %1603 = vmatpush1.msra.mxu0 %v1602
    %1604 = vmatprep.subr.mxu0 0.0
    %v1605 = vand.u32 %v926, 4294901760
    %v1606 = vsub.f32 %v926, %v1605
    %v1607 = vand.u32 %v1606, 4294901760
    %1608 = vmatpush1.msra.mxu0 %v1607
    %1609 = vmatprep.subr.mxu0 0.0
    %v1610 = vand.u32 %v927, 4294901760
    %v1611 = vsub.f32 %v927, %v1610
    %v1612 = vand.u32 %v1611, 4294901760
    %1613 = vmatpush1.msra.mxu0 %v1612
    %1614 = vmatprep.subr.mxu0 0.0
    %v1615 = vand.u32 %v928, 4294901760
    %v1616 = vsub.f32 %v928, %v1615
    %v1617 = vand.u32 %v1616, 4294901760
    %1618 = vmatpush1.msra.mxu0 %v1617
    %1619 = vmatprep.subr.mxu0 0.0
    %v1620 = vand.u32 %v929, 4294901760
    %v1621 = vsub.f32 %v929, %v1620
    %v1622 = vand.u32 %v1621, 4294901760
    %1623 = vmatpush1.msra.mxu0 %v1622
    %1624 = vmatprep.subr.mxu0 0.0
    %v1625 = vand.u32 %v930, 4294901760
    %v1626 = vsub.f32 %v930, %v1625
    %v1627 = vand.u32 %v1626, 4294901760
    %1628 = vmatpush1.msra.mxu0 %v1627
    %1629 = vmatprep.subr.mxu0 0.0
    %v1630 = vand.u32 %v931, 4294901760
    %v1631 = vsub.f32 %v931, %v1630
    %v1632 = vand.u32 %v1631, 4294901760
    %1633 = vmatpush1.msra.mxu0 %v1632
    %1634 = vmatprep.subr.mxu0 0.0
    %v1635 = vand.u32 %v932, 4294901760
    %v1636 = vsub.f32 %v932, %v1635
    %v1637 = vand.u32 %v1636, 4294901760
    %1638 = vmatpush1.msra.mxu0 %v1637
    %1639 = vmatprep.subr.mxu0 0.0
    %v1640 = vand.u32 %v933, 4294901760
    %v1641 = vsub.f32 %v933, %v1640
    %v1642 = vand.u32 %v1641, 4294901760
    %1643 = vmatpush1.msra.mxu0 %v1642
    %1644 = vmatprep.subr.mxu0 0.0
    %v1645 = vand.u32 %v934, 4294901760
    %v1646 = vsub.f32 %v934, %v1645
    %v1647 = vand.u32 %v1646, 4294901760
    %1648 = vmatpush1.msra.mxu0 %v1647
    %1649 = vmatprep.subr.mxu0 0.0
    %v1650 = vand.u32 %v935, 4294901760
    %v1651 = vsub.f32 %v935, %v1650
    %v1652 = vand.u32 %v1651, 4294901760
    %1653 = vmatpush1.msra.mxu0 %v1652
    %1654 = vmatprep.subr.mxu0 0.0
    %v1655 = vand.u32 %v936, 4294901760
    %v1656 = vsub.f32 %v936, %v1655
    %v1657 = vand.u32 %v1656, 4294901760
    %1658 = vmatpush1.msra.mxu0 %v1657
    %1659 = vmatprep.subr.mxu0 0.0
    %v1660 = vand.u32 %v937, 4294901760
    %v1661 = vsub.f32 %v937, %v1660
    %v1662 = vand.u32 %v1661, 4294901760
    %1663 = vmatpush1.msra.mxu0 %v1662
    %1664 = vmatprep.subr.mxu0 0.0
    %v1665 = vand.u32 %v938, 4294901760
    %v1666 = vsub.f32 %v938, %v1665
    %v1667 = vand.u32 %v1666, 4294901760
    %1668 = vmatpush1.msra.mxu0 %v1667
    %1669 = vmatprep.subr.mxu0 0.0
    %v1670 = vand.u32 %v939, 4294901760
    %v1671 = vsub.f32 %v939, %v1670
    %v1672 = vand.u32 %v1671, 4294901760
    %1673 = vmatpush1.msra.mxu0 %v1672
    %1674 = vmatprep.subr.mxu0 0.0
    %v1675 = vand.u32 %v940, 4294901760
    %v1676 = vsub.f32 %v940, %v1675
    %v1677 = vand.u32 %v1676, 4294901760
    %1678 = vmatpush1.msra.mxu0 %v1677
    %1679 = vmatprep.subr.mxu0 0.0
    %v1680 = vand.u32 %v941, 4294901760
    %v1681 = vsub.f32 %v941, %v1680
    %v1682 = vand.u32 %v1681, 4294901760
    %1683 = vmatpush1.msra.mxu0 %v1682
    %1684 = vmatprep.subr.mxu0 0.0
    %v1685 = vand.u32 %v942, 4294901760
    %v1686 = vsub.f32 %v942, %v1685
    %v1687 = vand.u32 %v1686, 4294901760
    %1688 = vmatpush1.msra.mxu0 %v1687
    %1689 = vmatprep.subr.mxu0 0.0
    %v1690 = vand.u32 %v943, 4294901760
    %v1691 = vsub.f32 %v943, %v1690
    %v1692 = vand.u32 %v1691, 4294901760
    %1693 = vmatpush1.msra.mxu0 %v1692
    %v1694 = vand.u32 %v16, 4294901760
    %1695 = vmatprep.mubr.f32.mxu0 %v1694
    %v1696 = vand.u32 %v15, 4294901760
    %1697 = vmatmul.mubr.f32.gmra.mrb[0].mxu0 %v1696
    %v1698 = vpop.f32.mrb[0].mxu0
    %v1699 = vadd.f32 %v1531, %v1698
    %v1700 = vpop.f32.mrb[0].mxu0
    %1701 = vdwg.mxu0
    %1702 = vmatprep.subr.mxu0 0.0
    %v1703 = vand.u32 %v912, 4294901760
    %1704 = vmatpush1.msra.mxu0 %v1703
    %1705 = vmatprep.subr.mxu0 0.0
    %v1706 = vand.u32 %v913, 4294901760
    %1707 = vmatpush1.msra.mxu0 %v1706
    %1708 = vmatprep.subr.mxu0 0.0
    %v1709 = vand.u32 %v914, 4294901760
    %1710 = vmatpush1.msra.mxu0 %v1709
    %1711 = vmatprep.subr.mxu0 0.0
    %v1712 = vand.u32 %v915, 4294901760
    %1713 = vmatpush1.msra.mxu0 %v1712
    %1714 = vmatprep.subr.mxu0 0.0
    %v1715 = vand.u32 %v916, 4294901760
    %1716 = vmatpush1.msra.mxu0 %v1715
    %1717 = vmatprep.subr.mxu0 0.0
    %v1718 = vand.u32 %v917, 4294901760
    %1719 = vmatpush1.msra.mxu0 %v1718
    %1720 = vmatprep.subr.mxu0 0.0
    %v1721 = vand.u32 %v918, 4294901760
    %1722 = vmatpush1.msra.mxu0 %v1721
    %1723 = vmatprep.subr.mxu0 0.0
    %v1724 = vand.u32 %v919, 4294901760
    %1725 = vmatpush1.msra.mxu0 %v1724
    %1726 = vmatprep.subr.mxu0 0.0
    %v1727 = vand.u32 %v920, 4294901760
    %1728 = vmatpush1.msra.mxu0 %v1727
    %1729 = vmatprep.subr.mxu0 0.0
    %v1730 = vand.u32 %v921, 4294901760
    %1731 = vmatpush1.msra.mxu0 %v1730
    %1732 = vmatprep.subr.mxu0 0.0
    %v1733 = vand.u32 %v922, 4294901760
    %1734 = vmatpush1.msra.mxu0 %v1733
    %1735 = vmatprep.subr.mxu0 0.0
    %v1736 = vand.u32 %v923, 4294901760
    %1737 = vmatpush1.msra.mxu0 %v1736
    %1738 = vmatprep.subr.mxu0 0.0
    %v1739 = vand.u32 %v924, 4294901760
    %1740 = vmatpush1.msra.mxu0 %v1739
    %1741 = vmatprep.subr.mxu0 0.0
    %v1742 = vand.u32 %v925, 4294901760
    %1743 = vmatpush1.msra.mxu0 %v1742
    %1744 = vmatprep.subr.mxu0 0.0
    %v1745 = vand.u32 %v926, 4294901760
    %1746 = vmatpush1.msra.mxu0 %v1745
    %1747 = vmatprep.subr.mxu0 0.0
    %v1748 = vand.u32 %v927, 4294901760
    %1749 = vmatpush1.msra.mxu0 %v1748
    %1750 = vmatprep.subr.mxu0 0.0
    %v1751 = vand.u32 %v928, 4294901760
    %1752 = vmatpush1.msra.mxu0 %v1751
    %1753 = vmatprep.subr.mxu0 0.0
    %v1754 = vand.u32 %v929, 4294901760
    %1755 = vmatpush1.msra.mxu0 %v1754
    %1756 = vmatprep.subr.mxu0 0.0
    %v1757 = vand.u32 %v930, 4294901760
    %1758 = vmatpush1.msra.mxu0 %v1757
    %1759 = vmatprep.subr.mxu0 0.0
    %v1760 = vand.u32 %v931, 4294901760
    %1761 = vmatpush1.msra.mxu0 %v1760
    %1762 = vmatprep.subr.mxu0 0.0
    %v1763 = vand.u32 %v932, 4294901760
    %1764 = vmatpush1.msra.mxu0 %v1763
    %1765 = vmatprep.subr.mxu0 0.0
    %v1766 = vand.u32 %v933, 4294901760
    %1767 = vmatpush1.msra.mxu0 %v1766
    %1768 = vmatprep.subr.mxu0 0.0
    %v1769 = vand.u32 %v934, 4294901760
    %1770 = vmatpush1.msra.mxu0 %v1769
    %1771 = vmatprep.subr.mxu0 0.0
    %v1772 = vand.u32 %v935, 4294901760
    %1773 = vmatpush1.msra.mxu0 %v1772
    %1774 = vmatprep.subr.mxu0 0.0
    %v1775 = vand.u32 %v936, 4294901760
    %1776 = vmatpush1.msra.mxu0 %v1775
    %1777 = vmatprep.subr.mxu0 0.0
    %v1778 = vand.u32 %v937, 4294901760
    %1779 = vmatpush1.msra.mxu0 %v1778
    %1780 = vmatprep.subr.mxu0 0.0
    %v1781 = vand.u32 %v938, 4294901760
    %1782 = vmatpush1.msra.mxu0 %v1781
    %1783 = vmatprep.subr.mxu0 0.0
    %v1784 = vand.u32 %v939, 4294901760
    %1785 = vmatpush1.msra.mxu0 %v1784
    %1786 = vmatprep.subr.mxu0 0.0
    %v1787 = vand.u32 %v940, 4294901760
    %1788 = vmatpush1.msra.mxu0 %v1787
    %1789 = vmatprep.subr.mxu0 0.0
    %v1790 = vand.u32 %v941, 4294901760
    %1791 = vmatpush1.msra.mxu0 %v1790
    %1792 = vmatprep.subr.mxu0 0.0
    %v1793 = vand.u32 %v942, 4294901760
    %1794 = vmatpush1.msra.mxu0 %v1793
    %1795 = vmatprep.subr.mxu0 0.0
    %v1796 = vand.u32 %v943, 4294901760
    %1797 = vmatpush1.msra.mxu0 %v1796
    %v1798 = vand.u32 %v16, 4294901760
    %1799 = vmatprep.mubr.f32.mxu0 %v1798
    %v1800 = vand.u32 %v15, 4294901760
    %1801 = vmatmul.mubr.f32.gmra.mrb[0].mxu0 %v1800
    %v1802 = vpop.f32.mrb[0].mxu0
    %v1803 = vadd.f32 %v1699, %v1802
    %v1804 = vpop.f32.mrb[0].mxu0
    %1805 = vdwg.mxu0
    %vm1806 = vcmp.gt.f32.partialorder %v1803, %v908
    %v1807 = vsel %vm1806, %v1803, %v908
    %v1808 = vsel %vm1806, 1.0, 0.0
    %s1809 = scalar_lea.vmem %s1, 512
    %v1810 = vld [vmem:[%s1809] sm:$0xff]
    %v1811 = vld [vmem:[%s1809 + $0x8] sm:$0xff]
    %v1812 = vld [vmem:[%s1809 + $0x10] sm:$0xff]
    %v1813 = vld [vmem:[%s1809 + $0x18] sm:$0xff]
    %v1814 = vld [vmem:[%s1809 + $0x20] sm:$0xff]
    %v1815 = vld [vmem:[%s1809 + $0x28] sm:$0xff]
    %v1816 = vld [vmem:[%s1809 + $0x30] sm:$0xff]
    %v1817 = vld [vmem:[%s1809 + $0x38] sm:$0xff]
    %v1818 = vld [vmem:[%s1809 + $0x40] sm:$0xff]
    %v1819 = vld [vmem:[%s1809 + $0x48] sm:$0xff]
    %v1820 = vld [vmem:[%s1809 + $0x50] sm:$0xff]
    %v1821 = vld [vmem:[%s1809 + $0x58] sm:$0xff]
    %v1822 = vld [vmem:[%s1809 + $0x60] sm:$0xff]
    %v1823 = vld [vmem:[%s1809 + $0x68] sm:$0xff]
    %v1824 = vld [vmem:[%s1809 + $0x70] sm:$0xff]
    %v1825 = vld [vmem:[%s1809 + $0x78] sm:$0xff]
    %v1826 = vld [vmem:[%s1809 + $0x80] sm:$0xff]
    %v1827 = vld [vmem:[%s1809 + $0x88] sm:$0xff]
    %v1828 = vld [vmem:[%s1809 + $0x90] sm:$0xff]
    %v1829 = vld [vmem:[%s1809 + $0x98] sm:$0xff]
    %v1830 = vld [vmem:[%s1809 + $0xa0] sm:$0xff]
    %v1831 = vld [vmem:[%s1809 + $0xa8] sm:$0xff]
    %v1832 = vld [vmem:[%s1809 + $0xb0] sm:$0xff]
    %v1833 = vld [vmem:[%s1809 + $0xb8] sm:$0xff]
    %v1834 = vld [vmem:[%s1809 + $0xc0] sm:$0xff]
    %v1835 = vld [vmem:[%s1809 + $0xc8] sm:$0xff]
    %v1836 = vld [vmem:[%s1809 + $0xd0] sm:$0xff]
    %v1837 = vld [vmem:[%s1809 + $0xd8] sm:$0xff]
    %v1838 = vld [vmem:[%s1809 + $0xe0] sm:$0xff]
    %v1839 = vld [vmem:[%s1809 + $0xe8] sm:$0xff]
    %v1840 = vld [vmem:[%s1809 + $0xf0] sm:$0xff]
    %v1841 = vld [vmem:[%s1809 + $0xf8] sm:$0xff]
    %1842 = vmatprep.subr.mxu0 0.0
    %v1843 = vand.u32 %v1810, 4294901760
    %1844 = vmatpush1.msra.mxu0 %v1843
    %1845 = vmatprep.subr.mxu0 0.0
    %v1846 = vand.u32 %v1811, 4294901760
    %1847 = vmatpush1.msra.mxu0 %v1846
    %1848 = vmatprep.subr.mxu0 0.0
    %v1849 = vand.u32 %v1812, 4294901760
    %1850 = vmatpush1.msra.mxu0 %v1849
    %1851 = vmatprep.subr.mxu0 0.0
    %v1852 = vand.u32 %v1813, 4294901760
    %1853 = vmatpush1.msra.mxu0 %v1852
    %1854 = vmatprep.subr.mxu0 0.0
    %v1855 = vand.u32 %v1814, 4294901760
    %1856 = vmatpush1.msra.mxu0 %v1855
    %1857 = vmatprep.subr.mxu0 0.0
    %v1858 = vand.u32 %v1815, 4294901760
    %1859 = vmatpush1.msra.mxu0 %v1858
    %1860 = vmatprep.subr.mxu0 0.0
    %v1861 = vand.u32 %v1816, 4294901760
    %1862 = vmatpush1.msra.mxu0 %v1861
    %1863 = vmatprep.subr.mxu0 0.0
    %v1864 = vand.u32 %v1817, 4294901760
    %1865 = vmatpush1.msra.mxu0 %v1864
    %1866 = vmatprep.subr.mxu0 0.0
    %v1867 = vand.u32 %v1818, 4294901760
    %1868 = vmatpush1.msra.mxu0 %v1867
    %1869 = vmatprep.subr.mxu0 0.0
    %v1870 = vand.u32 %v1819, 4294901760
    %1871 = vmatpush1.msra.mxu0 %v1870
    %1872 = vmatprep.subr.mxu0 0.0
    %v1873 = vand.u32 %v1820, 4294901760
    %1874 = vmatpush1.msra.mxu0 %v1873
    %1875 = vmatprep.subr.mxu0 0.0
    %v1876 = vand.u32 %v1821, 4294901760
    %1877 = vmatpush1.msra.mxu0 %v1876
    %1878 = vmatprep.subr.mxu0 0.0
    %v1879 = vand.u32 %v1822, 4294901760
    %1880 = vmatpush1.msra.mxu0 %v1879
    %1881 = vmatprep.subr.mxu0 0.0
    %v1882 = vand.u32 %v1823, 4294901760
    %1883 = vmatpush1.msra.mxu0 %v1882
    %1884 = vmatprep.subr.mxu0 0.0
    %v1885 = vand.u32 %v1824, 4294901760
    %1886 = vmatpush1.msra.mxu0 %v1885
    %1887 = vmatprep.subr.mxu0 0.0
    %v1888 = vand.u32 %v1825, 4294901760
    %1889 = vmatpush1.msra.mxu0 %v1888
    %1890 = vmatprep.subr.mxu0 0.0
    %v1891 = vand.u32 %v1826, 4294901760
    %1892 = vmatpush1.msra.mxu0 %v1891
    %1893 = vmatprep.subr.mxu0 0.0
    %v1894 = vand.u32 %v1827, 4294901760
    %1895 = vmatpush1.msra.mxu0 %v1894
    %1896 = vmatprep.subr.mxu0 0.0
    %v1897 = vand.u32 %v1828, 4294901760
    %1898 = vmatpush1.msra.mxu0 %v1897
    %1899 = vmatprep.subr.mxu0 0.0
    %v1900 = vand.u32 %v1829, 4294901760
    %1901 = vmatpush1.msra.mxu0 %v1900
    %1902 = vmatprep.subr.mxu0 0.0
    %v1903 = vand.u32 %v1830, 4294901760
    %1904 = vmatpush1.msra.mxu0 %v1903
    %1905 = vmatprep.subr.mxu0 0.0
    %v1906 = vand.u32 %v1831, 4294901760
    %1907 = vmatpush1.msra.mxu0 %v1906
    %1908 = vmatprep.subr.mxu0 0.0
    %v1909 = vand.u32 %v1832, 4294901760
    %1910 = vmatpush1.msra.mxu0 %v1909
    %1911 = vmatprep.subr.mxu0 0.0
    %v1912 = vand.u32 %v1833, 4294901760
    %1913 = vmatpush1.msra.mxu0 %v1912
    %1914 = vmatprep.subr.mxu0 0.0
    %v1915 = vand.u32 %v1834, 4294901760
    %1916 = vmatpush1.msra.mxu0 %v1915
    %1917 = vmatprep.subr.mxu0 0.0
    %v1918 = vand.u32 %v1835, 4294901760
    %1919 = vmatpush1.msra.mxu0 %v1918
    %1920 = vmatprep.subr.mxu0 0.0
    %v1921 = vand.u32 %v1836, 4294901760
    %1922 = vmatpush1.msra.mxu0 %v1921
    %1923 = vmatprep.subr.mxu0 0.0
    %v1924 = vand.u32 %v1837, 4294901760
    %1925 = vmatpush1.msra.mxu0 %v1924
    %1926 = vmatprep.subr.mxu0 0.0
    %v1927 = vand.u32 %v1838, 4294901760
    %1928 = vmatpush1.msra.mxu0 %v1927
    %1929 = vmatprep.subr.mxu0 0.0
    %v1930 = vand.u32 %v1839, 4294901760
    %1931 = vmatpush1.msra.mxu0 %v1930
    %1932 = vmatprep.subr.mxu0 0.0
    %v1933 = vand.u32 %v1840, 4294901760
    %1934 = vmatpush1.msra.mxu0 %v1933
    %1935 = vmatprep.subr.mxu0 0.0
    %v1936 = vand.u32 %v1841, 4294901760
    %1937 = vmatpush1.msra.mxu0 %v1936
    %v1938 = vand.u32 %v16, 4294901760
    %v1939 = vsub.f32 %v16, %v1938
    %v1940 = vand.u32 %v1939, 4294901760
    %v1941 = vsub.f32 %v1939, %v1940
    %v1942 = vand.u32 %v1941, 4294901760
    %1943 = vmatprep.mubr.f32.mxu0 %v1942
    %v1944 = vand.u32 %v15, 4294901760
    %v1945 = vsub.f32 %v15, %v1944
    %v1946 = vand.u32 %v1945, 4294901760
    %v1947 = vsub.f32 %v1945, %v1946
    %v1948 = vand.u32 %v1947, 4294901760
    %1949 = vmatmul.mubr.f32.gmra.mrb[0].mxu0 %v1948
    %v1950 = vpop.f32.mrb[0].mxu0
    %v1951 = vadd.f32 0.0, %v1950
    %v1952 = vpop.f32.mrb[0].mxu0
    %1953 = vdwg.mxu0
    %1954 = vmatprep.subr.mxu0 0.0
    %v1955 = vand.u32 %v1810, 4294901760
    %v1956 = vsub.f32 %v1810, %v1955
    %v1957 = vand.u32 %v1956, 4294901760
    %v1958 = vsub.f32 %v1956, %v1957
    %v1959 = vand.u32 %v1958, 4294901760
    %1960 = vmatpush1.msra.mxu0 %v1959
    %1961 = vmatprep.subr.mxu0 0.0
    %v1962 = vand.u32 %v1811, 4294901760
    %v1963 = vsub.f32 %v1811, %v1962
    %v1964 = vand.u32 %v1963, 4294901760
    %v1965 = vsub.f32 %v1963, %v1964
    %v1966 = vand.u32 %v1965, 4294901760
    %1967 = vmatpush1.msra.mxu0 %v1966
    %1968 = vmatprep.subr.mxu0 0.0
    %v1969 = vand.u32 %v1812, 4294901760
    %v1970 = vsub.f32 %v1812, %v1969
    %v1971 = vand.u32 %v1970, 4294901760
    %v1972 = vsub.f32 %v1970, %v1971
    %v1973 = vand.u32 %v1972, 4294901760
    %1974 = vmatpush1.msra.mxu0 %v1973
    %1975 = vmatprep.subr.mxu0 0.0
    %v1976 = vand.u32 %v1813, 4294901760
    %v1977 = vsub.f32 %v1813, %v1976
    %v1978 = vand.u32 %v1977, 4294901760
    %v1979 = vsub.f32 %v1977, %v1978
    %v1980 = vand.u32 %v1979, 4294901760
    %1981 = vmatpush1.msra.mxu0 %v1980
    %1982 = vmatprep.subr.mxu0 0.0
    %v1983 = vand.u32 %v1814, 4294901760
    %v1984 = vsub.f32 %v1814, %v1983
    %v1985 = vand.u32 %v1984, 4294901760
    %v1986 = vsub.f32 %v1984, %v1985
    %v1987 = vand.u32 %v1986, 4294901760
    %1988 = vmatpush1.msra.mxu0 %v1987
    %1989 = vmatprep.subr.mxu0 0.0
    %v1990 = vand.u32 %v1815, 4294901760
    %v1991 = vsub.f32 %v1815, %v1990
    %v1992 = vand.u32 %v1991, 4294901760
    %v1993 = vsub.f32 %v1991, %v1992
    %v1994 = vand.u32 %v1993, 4294901760
    %1995 = vmatpush1.msra.mxu0 %v1994
    %1996 = vmatprep.subr.mxu0 0.0
    %v1997 = vand.u32 %v1816, 4294901760
    %v1998 = vsub.f32 %v1816, %v1997
    %v1999 = vand.u32 %v1998, 4294901760
    %v2000 = vsub.f32 %v1998, %v1999
    %v2001 = vand.u32 %v2000, 4294901760
    %2002 = vmatpush1.msra.mxu0 %v2001
    %2003 = vmatprep.subr.mxu0 0.0
    %v2004 = vand.u32 %v1817, 4294901760
    %v2005 = vsub.f32 %v1817, %v2004
    %v2006 = vand.u32 %v2005, 4294901760
    %v2007 = vsub.f32 %v2005, %v2006
    %v2008 = vand.u32 %v2007, 4294901760
    %2009 = vmatpush1.msra.mxu0 %v2008
    %2010 = vmatprep.subr.mxu0 0.0
    %v2011 = vand.u32 %v1818, 4294901760
    %v2012 = vsub.f32 %v1818, %v2011
    %v2013 = vand.u32 %v2012, 4294901760
    %v2014 = vsub.f32 %v2012, %v2013
    %v2015 = vand.u32 %v2014, 4294901760
    %2016 = vmatpush1.msra.mxu0 %v2015
    %2017 = vmatprep.subr.mxu0 0.0
    %v2018 = vand.u32 %v1819, 4294901760
    %v2019 = vsub.f32 %v1819, %v2018
    %v2020 = vand.u32 %v2019, 4294901760
    %v2021 = vsub.f32 %v2019, %v2020
    %v2022 = vand.u32 %v2021, 4294901760
    %2023 = vmatpush1.msra.mxu0 %v2022
    %2024 = vmatprep.subr.mxu0 0.0
    %v2025 = vand.u32 %v1820, 4294901760
    %v2026 = vsub.f32 %v1820, %v2025
    %v2027 = vand.u32 %v2026, 4294901760
    %v2028 = vsub.f32 %v2026, %v2027
    %v2029 = vand.u32 %v2028, 4294901760
    %2030 = vmatpush1.msra.mxu0 %v2029
    %2031 = vmatprep.subr.mxu0 0.0
    %v2032 = vand.u32 %v1821, 4294901760
    %v2033 = vsub.f32 %v1821, %v2032
    %v2034 = vand.u32 %v2033, 4294901760
    %v2035 = vsub.f32 %v2033, %v2034
    %v2036 = vand.u32 %v2035, 4294901760
    %2037 = vmatpush1.msra.mxu0 %v2036
    %2038 = vmatprep.subr.mxu0 0.0
    %v2039 = vand.u32 %v1822, 4294901760
    %v2040 = vsub.f32 %v1822, %v2039
    %v2041 = vand.u32 %v2040, 4294901760
    %v2042 = vsub.f32 %v2040, %v2041
    %v2043 = vand.u32 %v2042, 4294901760
    %2044 = vmatpush1.msra.mxu0 %v2043
    %2045 = vmatprep.subr.mxu0 0.0
    %v2046 = vand.u32 %v1823, 4294901760
    %v2047 = vsub.f32 %v1823, %v2046
    %v2048 = vand.u32 %v2047, 4294901760
    %v2049 = vsub.f32 %v2047, %v2048
    %v2050 = vand.u32 %v2049, 4294901760
    %2051 = vmatpush1.msra.mxu0 %v2050
    %2052 = vmatprep.subr.mxu0 0.0
    %v2053 = vand.u32 %v1824, 4294901760
    %v2054 = vsub.f32 %v1824, %v2053
    %v2055 = vand.u32 %v2054, 4294901760
    %v2056 = vsub.f32 %v2054, %v2055
    %v2057 = vand.u32 %v2056, 4294901760
    %2058 = vmatpush1.msra.mxu0 %v2057
    %2059 = vmatprep.subr.mxu0 0.0
    %v2060 = vand.u32 %v1825, 4294901760
    %v2061 = vsub.f32 %v1825, %v2060
    %v2062 = vand.u32 %v2061, 4294901760
    %v2063 = vsub.f32 %v2061, %v2062
    %v2064 = vand.u32 %v2063, 4294901760
    %2065 = vmatpush1.msra.mxu0 %v2064
    %2066 = vmatprep.subr.mxu0 0.0
    %v2067 = vand.u32 %v1826, 4294901760
    %v2068 = vsub.f32 %v1826, %v2067
    %v2069 = vand.u32 %v2068, 4294901760
    %v2070 = vsub.f32 %v2068, %v2069
    %v2071 = vand.u32 %v2070, 4294901760
    %2072 = vmatpush1.msra.mxu0 %v2071
    %2073 = vmatprep.subr.mxu0 0.0
    %v2074 = vand.u32 %v1827, 4294901760
    %v2075 = vsub.f32 %v1827, %v2074
    %v2076 = vand.u32 %v2075, 4294901760
    %v2077 = vsub.f32 %v2075, %v2076
    %v2078 = vand.u32 %v2077, 4294901760
    %2079 = vmatpush1.msra.mxu0 %v2078
    %2080 = vmatprep.subr.mxu0 0.0
    %v2081 = vand.u32 %v1828, 4294901760
    %v2082 = vsub.f32 %v1828, %v2081
    %v2083 = vand.u32 %v2082, 4294901760
    %v2084 = vsub.f32 %v2082, %v2083
    %v2085 = vand.u32 %v2084, 4294901760
    %2086 = vmatpush1.msra.mxu0 %v2085
    %2087 = vmatprep.subr.mxu0 0.0
    %v2088 = vand.u32 %v1829, 4294901760
    %v2089 = vsub.f32 %v1829, %v2088
    %v2090 = vand.u32 %v2089, 4294901760
    %v2091 = vsub.f32 %v2089, %v2090
    %v2092 = vand.u32 %v2091, 4294901760
    %2093 = vmatpush1.msra.mxu0 %v2092
    %2094 = vmatprep.subr.mxu0 0.0
    %v2095 = vand.u32 %v1830, 4294901760
    %v2096 = vsub.f32 %v1830, %v2095
    %v2097 = vand.u32 %v2096, 4294901760
    %v2098 = vsub.f32 %v2096, %v2097
    %v2099 = vand.u32 %v2098, 4294901760
    %2100 = vmatpush1.msra.mxu0 %v2099
    %2101 = vmatprep.subr.mxu0 0.0
    %v2102 = vand.u32 %v1831, 4294901760
    %v2103 = vsub.f32 %v1831, %v2102
    %v2104 = vand.u32 %v2103, 4294901760
    %v2105 = vsub.f32 %v2103, %v2104
    %v2106 = vand.u32 %v2105, 4294901760
    %2107 = vmatpush1.msra.mxu0 %v2106
    %2108 = vmatprep.subr.mxu0 0.0
    %v2109 = vand.u32 %v1832, 4294901760
    %v2110 = vsub.f32 %v1832, %v2109
    %v2111 = vand.u32 %v2110, 4294901760
    %v2112 = vsub.f32 %v2110, %v2111
    %v2113 = vand.u32 %v2112, 4294901760
    %2114 = vmatpush1.msra.mxu0 %v2113
    %2115 = vmatprep.subr.mxu0 0.0
    %v2116 = vand.u32 %v1833, 4294901760
    %v2117 = vsub.f32 %v1833, %v2116
    %v2118 = vand.u32 %v2117, 4294901760
    %v2119 = vsub.f32 %v2117, %v2118
    %v2120 = vand.u32 %v2119, 4294901760
    %2121 = vmatpush1.msra.mxu0 %v2120
    %2122 = vmatprep.subr.mxu0 0.0
    %v2123 = vand.u32 %v1834, 4294901760
    %v2124 = vsub.f32 %v1834, %v2123
    %v2125 = vand.u32 %v2124, 4294901760
    %v2126 = vsub.f32 %v2124, %v2125
    %v2127 = vand.u32 %v2126, 4294901760
    %2128 = vmatpush1.msra.mxu0 %v2127
    %2129 = vmatprep.subr.mxu0 0.0
    %v2130 = vand.u32 %v1835, 4294901760
    %v2131 = vsub.f32 %v1835, %v2130
    %v2132 = vand.u32 %v2131, 4294901760
    %v2133 = vsub.f32 %v2131, %v2132
    %v2134 = vand.u32 %v2133, 4294901760
    %2135 = vmatpush1.msra.mxu0 %v2134
    %2136 = vmatprep.subr.mxu0 0.0
    %v2137 = vand.u32 %v1836, 4294901760
    %v2138 = vsub.f32 %v1836, %v2137
    %v2139 = vand.u32 %v2138, 4294901760
    %v2140 = vsub.f32 %v2138, %v2139
    %v2141 = vand.u32 %v2140, 4294901760
    %2142 = vmatpush1.msra.mxu0 %v2141
    %2143 = vmatprep.subr.mxu0 0.0
    %v2144 = vand.u32 %v1837, 4294901760
    %v2145 = vsub.f32 %v1837, %v2144
    %v2146 = vand.u32 %v2145, 4294901760
    %v2147 = vsub.f32 %v2145, %v2146
    %v2148 = vand.u32 %v2147, 4294901760
    %2149 = vmatpush1.msra.mxu0 %v2148
    %2150 = vmatprep.subr.mxu0 0.0
    %v2151 = vand.u32 %v1838, 4294901760
    %v2152 = vsub.f32 %v1838, %v2151
    %v2153 = vand.u32 %v2152, 4294901760
    %v2154 = vsub.f32 %v2152, %v2153
    %v2155 = vand.u32 %v2154, 4294901760
    %2156 = vmatpush1.msra.mxu0 %v2155
    %2157 = vmatprep.subr.mxu0 0.0
    %v2158 = vand.u32 %v1839, 4294901760
    %v2159 = vsub.f32 %v1839, %v2158
    %v2160 = vand.u32 %v2159, 4294901760
    %v2161 = vsub.f32 %v2159, %v2160
    %v2162 = vand.u32 %v2161, 4294901760
    %2163 = vmatpush1.msra.mxu0 %v2162
    %2164 = vmatprep.subr.mxu0 0.0
    %v2165 = vand.u32 %v1840, 4294901760
    %v2166 = vsub.f32 %v1840, %v2165
    %v2167 = vand.u32 %v2166, 4294901760
    %v2168 = vsub.f32 %v2166, %v2167
    %v2169 = vand.u32 %v2168, 4294901760
    %2170 = vmatpush1.msra.mxu0 %v2169
    %2171 = vmatprep.subr.mxu0 0.0
    %v2172 = vand.u32 %v1841, 4294901760
    %v2173 = vsub.f32 %v1841, %v2172
    %v2174 = vand.u32 %v2173, 4294901760
    %v2175 = vsub.f32 %v2173, %v2174
    %v2176 = vand.u32 %v2175, 4294901760
    %2177 = vmatpush1.msra.mxu0 %v2176
    %v2178 = vand.u32 %v16, 4294901760
    %2179 = vmatprep.mubr.f32.mxu0 %v2178
    %v2180 = vand.u32 %v15, 4294901760
    %2181 = vmatmul.mubr.f32.gmra.mrb[0].mxu0 %v2180
    %v2182 = vpop.f32.mrb[0].mxu0
    %v2183 = vadd.f32 %v1951, %v2182
    %v2184 = vpop.f32.mrb[0].mxu0
    %2185 = vdwg.mxu0
    %2186 = vmatprep.subr.mxu0 0.0
    %v2187 = vand.u32 %v1810, 4294901760
    %v2188 = vsub.f32 %v1810, %v2187
    %2189 = vmatpush1.msra.mxu0 %v2188
    %2190 = vmatprep.subr.mxu0 0.0
    %v2191 = vand.u32 %v1811, 4294901760
    %v2192 = vsub.f32 %v1811, %v2191
    %2193 = vmatpush1.msra.mxu0 %v2192
    %2194 = vmatprep.subr.mxu0 0.0
    %v2195 = vand.u32 %v1812, 4294901760
    %v2196 = vsub.f32 %v1812, %v2195
    %2197 = vmatpush1.msra.mxu0 %v2196
    %2198 = vmatprep.subr.mxu0 0.0
    %v2199 = vand.u32 %v1813, 4294901760
    %v2200 = vsub.f32 %v1813, %v2199
    %2201 = vmatpush1.msra.mxu0 %v2200
    %2202 = vmatprep.subr.mxu0 0.0
    %v2203 = vand.u32 %v1814, 4294901760
    %v2204 = vsub.f32 %v1814, %v2203
    %2205 = vmatpush1.msra.mxu0 %v2204
    %2206 = vmatprep.subr.mxu0 0.0
    %v2207 = vand.u32 %v1815, 4294901760
    %v2208 = vsub.f32 %v1815, %v2207
    %2209 = vmatpush1.msra.mxu0 %v2208
    %2210 = vmatprep.subr.mxu0 0.0
    %v2211 = vand.u32 %v1816, 4294901760
    %v2212 = vsub.f32 %v1816, %v2211
    %2213 = vmatpush1.msra.mxu0 %v2212
    %2214 = vmatprep.subr.mxu0 0.0
    %v2215 = vand.u32 %v1817, 4294901760
    %v2216 = vsub.f32 %v1817, %v2215
    %2217 = vmatpush1.msra.mxu0 %v2216
    %2218 = vmatprep.subr.mxu0 0.0
    %v2219 = vand.u32 %v1818, 4294901760
    %v2220 = vsub.f32 %v1818, %v2219
    %2221 = vmatpush1.msra.mxu0 %v2220
    %2222 = vmatprep.subr.mxu0 0.0
    %v2223 = vand.u32 %v1819, 4294901760
    %v2224 = vsub.f32 %v1819, %v2223
    %2225 = vmatpush1.msra.mxu0 %v2224
    %2226 = vmatprep.subr.mxu0 0.0
    %v2227 = vand.u32 %v1820, 4294901760
    %v2228 = vsub.f32 %v1820, %v2227
    %2229 = vmatpush1.msra.mxu0 %v2228
    %2230 = vmatprep.subr.mxu0 0.0
    %v2231 = vand.u32 %v1821, 4294901760
    %v2232 = vsub.f32 %v1821, %v2231
    %2233 = vmatpush1.msra.mxu0 %v2232
    %2234 = vmatprep.subr.mxu0 0.0
    %v2235 = vand.u32 %v1822, 4294901760
    %v2236 = vsub.f32 %v1822, %v2235
    %2237 = vmatpush1.msra.mxu0 %v2236
    %2238 = vmatprep.subr.mxu0 0.0
    %v2239 = vand.u32 %v1823, 4294901760
    %v2240 = vsub.f32 %v1823, %v2239
    %2241 = vmatpush1.msra.mxu0 %v2240
    %2242 = vmatprep.subr.mxu0 0.0
    %v2243 = vand.u32 %v1824, 4294901760
    %v2244 = vsub.f32 %v1824, %v2243
    %2245 = vmatpush1.msra.mxu0 %v2244
    %2246 = vmatprep.subr.mxu0 0.0
    %v2247 = vand.u32 %v1825, 4294901760
    %v2248 = vsub.f32 %v1825, %v2247
    %2249 = vmatpush1.msra.mxu0 %v2248
    %2250 = vmatprep.subr.mxu0 0.0
    %v2251 = vand.u32 %v1826, 4294901760
    %v2252 = vsub.f32 %v1826, %v2251
    %2253 = vmatpush1.msra.mxu0 %v2252
    %2254 = vmatprep.subr.mxu0 0.0
    %v2255 = vand.u32 %v1827, 4294901760
    %v2256 = vsub.f32 %v1827, %v2255
    %2257 = vmatpush1.msra.mxu0 %v2256
    %2258 = vmatprep.subr.mxu0 0.0
    %v2259 = vand.u32 %v1828, 4294901760
    %v2260 = vsub.f32 %v1828, %v2259
    %2261 = vmatpush1.msra.mxu0 %v2260
    %2262 = vmatprep.subr.mxu0 0.0
    %v2263 = vand.u32 %v1829, 4294901760
    %v2264 = vsub.f32 %v1829, %v2263
    %2265 = vmatpush1.msra.mxu0 %v2264
    %2266 = vmatprep.subr.mxu0 0.0
    %v2267 = vand.u32 %v1830, 4294901760
    %v2268 = vsub.f32 %v1830, %v2267
    %2269 = vmatpush1.msra.mxu0 %v2268
    %2270 = vmatprep.subr.mxu0 0.0
    %v2271 = vand.u32 %v1831, 4294901760
    %v2272 = vsub.f32 %v1831, %v2271
    %2273 = vmatpush1.msra.mxu0 %v2272
    %2274 = vmatprep.subr.mxu0 0.0
    %v2275 = vand.u32 %v1832, 4294901760
    %v2276 = vsub.f32 %v1832, %v2275
    %2277 = vmatpush1.msra.mxu0 %v2276
    %2278 = vmatprep.subr.mxu0 0.0
    %v2279 = vand.u32 %v1833, 4294901760
    %v2280 = vsub.f32 %v1833, %v2279
    %2281 = vmatpush1.msra.mxu0 %v2280
    %2282 = vmatprep.subr.mxu0 0.0
    %v2283 = vand.u32 %v1834, 4294901760
    %v2284 = vsub.f32 %v1834, %v2283
    %2285 = vmatpush1.msra.mxu0 %v2284
    %2286 = vmatprep.subr.mxu0 0.0
    %v2287 = vand.u32 %v1835, 4294901760
    %v2288 = vsub.f32 %v1835, %v2287
    %2289 = vmatpush1.msra.mxu0 %v2288
    %2290 = vmatprep.subr.mxu0 0.0
    %v2291 = vand.u32 %v1836, 4294901760
    %v2292 = vsub.f32 %v1836, %v2291
    %2293 = vmatpush1.msra.mxu0 %v2292
    %2294 = vmatprep.subr.mxu0 0.0
    %v2295 = vand.u32 %v1837, 4294901760
    %v2296 = vsub.f32 %v1837, %v2295
    %2297 = vmatpush1.msra.mxu0 %v2296
    %2298 = vmatprep.subr.mxu0 0.0
    %v2299 = vand.u32 %v1838, 4294901760
    %v2300 = vsub.f32 %v1838, %v2299
    %2301 = vmatpush1.msra.mxu0 %v2300
    %2302 = vmatprep.subr.mxu0 0.0
    %v2303 = vand.u32 %v1839, 4294901760
    %v2304 = vsub.f32 %v1839, %v2303
    %2305 = vmatpush1.msra.mxu0 %v2304
    %2306 = vmatprep.subr.mxu0 0.0
    %v2307 = vand.u32 %v1840, 4294901760
    %v2308 = vsub.f32 %v1840, %v2307
    %2309 = vmatpush1.msra.mxu0 %v2308
    %2310 = vmatprep.subr.mxu0 0.0
    %v2311 = vand.u32 %v1841, 4294901760
    %v2312 = vsub.f32 %v1841, %v2311
    %2313 = vmatpush1.msra.mxu0 %v2312
    %v2314 = vand.u32 %v16, 4294901760
    %v2315 = vsub.f32 %v16, %v2314
    %2316 = vmatprep.mubr.f32.mxu0 %v2315
    %v2317 = vand.u32 %v15, 4294901760
    %v2318 = vsub.f32 %v15, %v2317
    %2319 = vmatmul.mubr.f32.gmra.mrb[0].mxu0 %v2318
    %v2320 = vpop.f32.mrb[0].mxu0
    %v2321 = vadd.f32 %v2183, %v2320
    %v2322 = vpop.f32.mrb[0].mxu0
    %2323 = vdwg.mxu0
    %2324 = vmatprep.subr.mxu0 0.0
    %v2325 = vand.u32 %v1810, 4294901760
    %2326 = vmatpush1.msra.mxu0 %v2325
    %2327 = vmatprep.subr.mxu0 0.0
    %v2328 = vand.u32 %v1811, 4294901760
    %2329 = vmatpush1.msra.mxu0 %v2328
    %2330 = vmatprep.subr.mxu0 0.0
    %v2331 = vand.u32 %v1812, 4294901760
    %2332 = vmatpush1.msra.mxu0 %v2331
    %2333 = vmatprep.subr.mxu0 0.0
    %v2334 = vand.u32 %v1813, 4294901760
    %2335 = vmatpush1.msra.mxu0 %v2334
    %2336 = vmatprep.subr.mxu0 0.0
    %v2337 = vand.u32 %v1814, 4294901760
    %2338 = vmatpush1.msra.mxu0 %v2337
    %2339 = vmatprep.subr.mxu0 0.0
    %v2340 = vand.u32 %v1815, 4294901760
    %2341 = vmatpush1.msra.mxu0 %v2340
    %2342 = vmatprep.subr.mxu0 0.0
    %v2343 = vand.u32 %v1816, 4294901760
    %2344 = vmatpush1.msra.mxu0 %v2343
    %2345 = vmatprep.subr.mxu0 0.0
    %v2346 = vand.u32 %v1817, 4294901760
    %2347 = vmatpush1.msra.mxu0 %v2346
    %2348 = vmatprep.subr.mxu0 0.0
    %v2349 = vand.u32 %v1818, 4294901760
    %2350 = vmatpush1.msra.mxu0 %v2349
    %2351 = vmatprep.subr.mxu0 0.0
    %v2352 = vand.u32 %v1819, 4294901760
    %2353 = vmatpush1.msra.mxu0 %v2352
    %2354 = vmatprep.subr.mxu0 0.0
    %v2355 = vand.u32 %v1820, 4294901760
    %2356 = vmatpush1.msra.mxu0 %v2355
    %2357 = vmatprep.subr.mxu0 0.0
    %v2358 = vand.u32 %v1821, 4294901760
    %2359 = vmatpush1.msra.mxu0 %v2358
    %2360 = vmatprep.subr.mxu0 0.0
    %v2361 = vand.u32 %v1822, 4294901760
    %2362 = vmatpush1.msra.mxu0 %v2361
    %2363 = vmatprep.subr.mxu0 0.0
    %v2364 = vand.u32 %v1823, 4294901760
    %2365 = vmatpush1.msra.mxu0 %v2364
    %2366 = vmatprep.subr.mxu0 0.0
    %v2367 = vand.u32 %v1824, 4294901760
    %2368 = vmatpush1.msra.mxu0 %v2367
    %2369 = vmatprep.subr.mxu0 0.0
    %v2370 = vand.u32 %v1825, 4294901760
    %2371 = vmatpush1.msra.mxu0 %v2370
    %2372 = vmatprep.subr.mxu0 0.0
    %v2373 = vand.u32 %v1826, 4294901760
    %2374 = vmatpush1.msra.mxu0 %v2373
    %2375 = vmatprep.subr.mxu0 0.0
    %v2376 = vand.u32 %v1827, 4294901760
    %2377 = vmatpush1.msra.mxu0 %v2376
    %2378 = vmatprep.subr.mxu0 0.0
    %v2379 = vand.u32 %v1828, 4294901760
    %2380 = vmatpush1.msra.mxu0 %v2379
    %2381 = vmatprep.subr.mxu0 0.0
    %v2382 = vand.u32 %v1829, 4294901760
    %2383 = vmatpush1.msra.mxu0 %v2382
    %2384 = vmatprep.subr.mxu0 0.0
    %v2385 = vand.u32 %v1830, 4294901760
    %2386 = vmatpush1.msra.mxu0 %v2385
    %2387 = vmatprep.subr.mxu0 0.0
    %v2388 = vand.u32 %v1831, 4294901760
    %2389 = vmatpush1.msra.mxu0 %v2388
    %2390 = vmatprep.subr.mxu0 0.0
    %v2391 = vand.u32 %v1832, 4294901760
    %2392 = vmatpush1.msra.mxu0 %v2391
    %2393 = vmatprep.subr.mxu0 0.0
    %v2394 = vand.u32 %v1833, 4294901760
    %2395 = vmatpush1.msra.mxu0 %v2394
    %2396 = vmatprep.subr.mxu0 0.0
    %v2397 = vand.u32 %v1834, 4294901760
    %2398 = vmatpush1.msra.mxu0 %v2397
    %2399 = vmatprep.subr.mxu0 0.0
    %v2400 = vand.u32 %v1835, 4294901760
    %2401 = vmatpush1.msra.mxu0 %v2400
    %2402 = vmatprep.subr.mxu0 0.0
    %v2403 = vand.u32 %v1836, 4294901760
    %2404 = vmatpush1.msra.mxu0 %v2403
    %2405 = vmatprep.subr.mxu0 0.0
    %v2406 = vand.u32 %v1837, 4294901760
    %2407 = vmatpush1.msra.mxu0 %v2406
    %2408 = vmatprep.subr.mxu0 0.0
    %v2409 = vand.u32 %v1838, 4294901760
    %2410 = vmatpush1.msra.mxu0 %v2409
    %2411 = vmatprep.subr.mxu0 0.0
    %v2412 = vand.u32 %v1839, 4294901760
    %2413 = vmatpush1.msra.mxu0 %v2412
    %2414 = vmatprep.subr.mxu0 0.0
    %v2415 = vand.u32 %v1840, 4294901760
    %2416 = vmatpush1.msra.mxu0 %v2415
    %2417 = vmatprep.subr.mxu0 0.0
    %v2418 = vand.u32 %v1841, 4294901760
    %2419 = vmatpush1.msra.mxu0 %v2418
    %v2420 = vand.u32 %v16, 4294901760
    %v2421 = vsub.f32 %v16, %v2420
    %v2422 = vand.u32 %v2421, 4294901760
    %2423 = vmatprep.mubr.f32.mxu0 %v2422
    %v2424 = vand.u32 %v15, 4294901760
    %v2425 = vsub.f32 %v15, %v2424
    %v2426 = vand.u32 %v2425, 4294901760
    %2427 = vmatmul.mubr.f32.gmra.mrb[0].mxu0 %v2426
    %v2428 = vpop.f32.mrb[0].mxu0
    %v2429 = vadd.f32 %v2321, %v2428
    %v2430 = vpop.f32.mrb[0].mxu0
    %2431 = vdwg.mxu0
    %2432 = vmatprep.subr.mxu0 0.0
    %v2433 = vand.u32 %v1810, 4294901760
    %v2434 = vsub.f32 %v1810, %v2433
    %v2435 = vand.u32 %v2434, 4294901760
    %2436 = vmatpush1.msra.mxu0 %v2435
    %2437 = vmatprep.subr.mxu0 0.0
    %v2438 = vand.u32 %v1811, 4294901760
    %v2439 = vsub.f32 %v1811, %v2438
    %v2440 = vand.u32 %v2439, 4294901760
    %2441 = vmatpush1.msra.mxu0 %v2440
    %2442 = vmatprep.subr.mxu0 0.0
    %v2443 = vand.u32 %v1812, 4294901760
    %v2444 = vsub.f32 %v1812, %v2443
    %v2445 = vand.u32 %v2444, 4294901760
    %2446 = vmatpush1.msra.mxu0 %v2445
    %2447 = vmatprep.subr.mxu0 0.0
    %v2448 = vand.u32 %v1813, 4294901760
    %v2449 = vsub.f32 %v1813, %v2448
    %v2450 = vand.u32 %v2449, 4294901760
    %2451 = vmatpush1.msra.mxu0 %v2450
    %2452 = vmatprep.subr.mxu0 0.0
    %v2453 = vand.u32 %v1814, 4294901760
    %v2454 = vsub.f32 %v1814, %v2453
    %v2455 = vand.u32 %v2454, 4294901760
    %2456 = vmatpush1.msra.mxu0 %v2455
    %2457 = vmatprep.subr.mxu0 0.0
    %v2458 = vand.u32 %v1815, 4294901760
    %v2459 = vsub.f32 %v1815, %v2458
    %v2460 = vand.u32 %v2459, 4294901760
    %2461 = vmatpush1.msra.mxu0 %v2460
    %2462 = vmatprep.subr.mxu0 0.0
    %v2463 = vand.u32 %v1816, 4294901760
    %v2464 = vsub.f32 %v1816, %v2463
    %v2465 = vand.u32 %v2464, 4294901760
    %2466 = vmatpush1.msra.mxu0 %v2465
    %2467 = vmatprep.subr.mxu0 0.0
    %v2468 = vand.u32 %v1817, 4294901760
    %v2469 = vsub.f32 %v1817, %v2468
    %v2470 = vand.u32 %v2469, 4294901760
    %2471 = vmatpush1.msra.mxu0 %v2470
    %2472 = vmatprep.subr.mxu0 0.0
    %v2473 = vand.u32 %v1818, 4294901760
    %v2474 = vsub.f32 %v1818, %v2473
    %v2475 = vand.u32 %v2474, 4294901760
    %2476 = vmatpush1.msra.mxu0 %v2475
    %2477 = vmatprep.subr.mxu0 0.0
    %v2478 = vand.u32 %v1819, 4294901760
    %v2479 = vsub.f32 %v1819, %v2478
    %v2480 = vand.u32 %v2479, 4294901760
    %2481 = vmatpush1.msra.mxu0 %v2480
    %2482 = vmatprep.subr.mxu0 0.0
    %v2483 = vand.u32 %v1820, 4294901760
    %v2484 = vsub.f32 %v1820, %v2483
    %v2485 = vand.u32 %v2484, 4294901760
    %2486 = vmatpush1.msra.mxu0 %v2485
    %2487 = vmatprep.subr.mxu0 0.0
    %v2488 = vand.u32 %v1821, 4294901760
    %v2489 = vsub.f32 %v1821, %v2488
    %v2490 = vand.u32 %v2489, 4294901760
    %2491 = vmatpush1.msra.mxu0 %v2490
    %2492 = vmatprep.subr.mxu0 0.0
    %v2493 = vand.u32 %v1822, 4294901760
    %v2494 = vsub.f32 %v1822, %v2493
    %v2495 = vand.u32 %v2494, 4294901760
    %2496 = vmatpush1.msra.mxu0 %v2495
    %2497 = vmatprep.subr.mxu0 0.0
    %v2498 = vand.u32 %v1823, 4294901760
    %v2499 = vsub.f32 %v1823, %v2498
    %v2500 = vand.u32 %v2499, 4294901760
    %2501 = vmatpush1.msra.mxu0 %v2500
    %2502 = vmatprep.subr.mxu0 0.0
    %v2503 = vand.u32 %v1824, 4294901760
    %v2504 = vsub.f32 %v1824, %v2503
    %v2505 = vand.u32 %v2504, 4294901760
    %2506 = vmatpush1.msra.mxu0 %v2505
    %2507 = vmatprep.subr.mxu0 0.0
    %v2508 = vand.u32 %v1825, 4294901760
    %v2509 = vsub.f32 %v1825, %v2508
    %v2510 = vand.u32 %v2509, 4294901760
    %2511 = vmatpush1.msra.mxu0 %v2510
    %2512 = vmatprep.subr.mxu0 0.0
    %v2513 = vand.u32 %v1826, 4294901760
    %v2514 = vsub.f32 %v1826, %v2513
    %v2515 = vand.u32 %v2514, 4294901760
    %2516 = vmatpush1.msra.mxu0 %v2515
    %2517 = vmatprep.subr.mxu0 0.0
    %v2518 = vand.u32 %v1827, 4294901760
    %v2519 = vsub.f32 %v1827, %v2518
    %v2520 = vand.u32 %v2519, 4294901760
    %2521 = vmatpush1.msra.mxu0 %v2520
    %2522 = vmatprep.subr.mxu0 0.0
    %v2523 = vand.u32 %v1828, 4294901760
    %v2524 = vsub.f32 %v1828, %v2523
    %v2525 = vand.u32 %v2524, 4294901760
    %2526 = vmatpush1.msra.mxu0 %v2525
    %2527 = vmatprep.subr.mxu0 0.0
    %v2528 = vand.u32 %v1829, 4294901760
    %v2529 = vsub.f32 %v1829, %v2528
    %v2530 = vand.u32 %v2529, 4294901760
    %2531 = vmatpush1.msra.mxu0 %v2530
    %2532 = vmatprep.subr.mxu0 0.0
    %v2533 = vand.u32 %v1830, 4294901760
    %v2534 = vsub.f32 %v1830, %v2533
    %v2535 = vand.u32 %v2534, 4294901760
    %2536 = vmatpush1.msra.mxu0 %v2535
    %2537 = vmatprep.subr.mxu0 0.0
    %v2538 = vand.u32 %v1831, 4294901760
    %v2539 = vsub.f32 %v1831, %v2538
    %v2540 = vand.u32 %v2539, 4294901760
    %2541 = vmatpush1.msra.mxu0 %v2540
    %2542 = vmatprep.subr.mxu0 0.0
    %v2543 = vand.u32 %v1832, 4294901760
    %v2544 = vsub.f32 %v1832, %v2543
    %v2545 = vand.u32 %v2544, 4294901760
    %2546 = vmatpush1.msra.mxu0 %v2545
    %2547 = vmatprep.subr.mxu0 0.0
    %v2548 = vand.u32 %v1833, 4294901760
    %v2549 = vsub.f32 %v1833, %v2548
    %v2550 = vand.u32 %v2549, 4294901760
    %2551 = vmatpush1.msra.mxu0 %v2550
    %2552 = vmatprep.subr.mxu0 0.0
    %v2553 = vand.u32 %v1834, 4294901760
    %v2554 = vsub.f32 %v1834, %v2553
    %v2555 = vand.u32 %v2554, 4294901760
    %2556 = vmatpush1.msra.mxu0 %v2555
    %2557 = vmatprep.subr.mxu0 0.0
    %v2558 = vand.u32 %v1835, 4294901760
    %v2559 = vsub.f32 %v1835, %v2558
    %v2560 = vand.u32 %v2559, 4294901760
    %2561 = vmatpush1.msra.mxu0 %v2560
    %2562 = vmatprep.subr.mxu0 0.0
    %v2563 = vand.u32 %v1836, 4294901760
    %v2564 = vsub.f32 %v1836, %v2563
    %v2565 = vand.u32 %v2564, 4294901760
    %2566 = vmatpush1.msra.mxu0 %v2565
    %2567 = vmatprep.subr.mxu0 0.0
    %v2568 = vand.u32 %v1837, 4294901760
    %v2569 = vsub.f32 %v1837, %v2568
    %v2570 = vand.u32 %v2569, 4294901760
    %2571 = vmatpush1.msra.mxu0 %v2570
    %2572 = vmatprep.subr.mxu0 0.0
    %v2573 = vand.u32 %v1838, 4294901760
    %v2574 = vsub.f32 %v1838, %v2573
    %v2575 = vand.u32 %v2574, 4294901760
    %2576 = vmatpush1.msra.mxu0 %v2575
    %2577 = vmatprep.subr.mxu0 0.0
    %v2578 = vand.u32 %v1839, 4294901760
    %v2579 = vsub.f32 %v1839, %v2578
    %v2580 = vand.u32 %v2579, 4294901760
    %2581 = vmatpush1.msra.mxu0 %v2580
    %2582 = vmatprep.subr.mxu0 0.0
    %v2583 = vand.u32 %v1840, 4294901760
    %v2584 = vsub.f32 %v1840, %v2583
    %v2585 = vand.u32 %v2584, 4294901760
    %2586 = vmatpush1.msra.mxu0 %v2585
    %2587 = vmatprep.subr.mxu0 0.0
    %v2588 = vand.u32 %v1841, 4294901760
    %v2589 = vsub.f32 %v1841, %v2588
    %v2590 = vand.u32 %v2589, 4294901760
    %2591 = vmatpush1.msra.mxu0 %v2590
    %v2592 = vand.u32 %v16, 4294901760
    %2593 = vmatprep.mubr.f32.mxu0 %v2592
    %v2594 = vand.u32 %v15, 4294901760
    %2595 = vmatmul.mubr.f32.gmra.mrb[0].mxu0 %v2594
    %v2596 = vpop.f32.mrb[0].mxu0
    %v2597 = vadd.f32 %v2429, %v2596
    %v2598 = vpop.f32.mrb[0].mxu0
    %2599 = vdwg.mxu0
    %2600 = vmatprep.subr.mxu0 0.0
    %v2601 = vand.u32 %v1810, 4294901760
    %2602 = vmatpush1.msra.mxu0 %v2601
    %2603 = vmatprep.subr.mxu0 0.0
    %v2604 = vand.u32 %v1811, 4294901760
    %2605 = vmatpush1.msra.mxu0 %v2604
    %2606 = vmatprep.subr.mxu0 0.0
    %v2607 = vand.u32 %v1812, 4294901760
    %2608 = vmatpush1.msra.mxu0 %v2607
    %2609 = vmatprep.subr.mxu0 0.0
    %v2610 = vand.u32 %v1813, 4294901760
    %2611 = vmatpush1.msra.mxu0 %v2610
    %2612 = vmatprep.subr.mxu0 0.0
    %v2613 = vand.u32 %v1814, 4294901760
    %2614 = vmatpush1.msra.mxu0 %v2613
    %2615 = vmatprep.subr.mxu0 0.0
    %v2616 = vand.u32 %v1815, 4294901760
    %2617 = vmatpush1.msra.mxu0 %v2616
    %2618 = vmatprep.subr.mxu0 0.0
    %v2619 = vand.u32 %v1816, 4294901760
    %2620 = vmatpush1.msra.mxu0 %v2619
    %2621 = vmatprep.subr.mxu0 0.0
    %v2622 = vand.u32 %v1817, 4294901760
    %2623 = vmatpush1.msra.mxu0 %v2622
    %2624 = vmatprep.subr.mxu0 0.0
    %v2625 = vand.u32 %v1818, 4294901760
    %2626 = vmatpush1.msra.mxu0 %v2625
    %2627 = vmatprep.subr.mxu0 0.0
    %v2628 = vand.u32 %v1819, 4294901760
    %2629 = vmatpush1.msra.mxu0 %v2628
    %2630 = vmatprep.subr.mxu0 0.0
    %v2631 = vand.u32 %v1820, 4294901760
    %2632 = vmatpush1.msra.mxu0 %v2631
    %2633 = vmatprep.subr.mxu0 0.0
    %v2634 = vand.u32 %v1821, 4294901760
    %2635 = vmatpush1.msra.mxu0 %v2634
    %2636 = vmatprep.subr.mxu0 0.0
    %v2637 = vand.u32 %v1822, 4294901760
    %2638 = vmatpush1.msra.mxu0 %v2637
    %2639 = vmatprep.subr.mxu0 0.0
    %v2640 = vand.u32 %v1823, 4294901760
    %2641 = vmatpush1.msra.mxu0 %v2640
    %2642 = vmatprep.subr.mxu0 0.0
    %v2643 = vand.u32 %v1824, 4294901760
    %2644 = vmatpush1.msra.mxu0 %v2643
    %2645 = vmatprep.subr.mxu0 0.0
    %v2646 = vand.u32 %v1825, 4294901760
    %2647 = vmatpush1.msra.mxu0 %v2646
    %2648 = vmatprep.subr.mxu0 0.0
    %v2649 = vand.u32 %v1826, 4294901760
    %2650 = vmatpush1.msra.mxu0 %v2649
    %2651 = vmatprep.subr.mxu0 0.0
    %v2652 = vand.u32 %v1827, 4294901760
    %2653 = vmatpush1.msra.mxu0 %v2652
    %2654 = vmatprep.subr.mxu0 0.0
    %v2655 = vand.u32 %v1828, 4294901760
    %2656 = vmatpush1.msra.mxu0 %v2655
    %2657 = vmatprep.subr.mxu0 0.0
    %v2658 = vand.u32 %v1829, 4294901760
    %2659 = vmatpush1.msra.mxu0 %v2658
    %2660 = vmatprep.subr.mxu0 0.0
    %v2661 = vand.u32 %v1830, 4294901760
    %2662 = vmatpush1.msra.mxu0 %v2661
    %2663 = vmatprep.subr.mxu0 0.0
    %v2664 = vand.u32 %v1831, 4294901760
    %2665 = vmatpush1.msra.mxu0 %v2664
    %2666 = vmatprep.subr.mxu0 0.0
    %v2667 = vand.u32 %v1832, 4294901760
    %2668 = vmatpush1.msra.mxu0 %v2667
    %2669 = vmatprep.subr.mxu0 0.0
    %v2670 = vand.u32 %v1833, 4294901760
    %2671 = vmatpush1.msra.mxu0 %v2670
    %2672 = vmatprep.subr.mxu0 0.0
    %v2673 = vand.u32 %v1834, 4294901760
    %2674 = vmatpush1.msra.mxu0 %v2673
    %2675 = vmatprep.subr.mxu0 0.0
    %v2676 = vand.u32 %v1835, 4294901760
    %2677 = vmatpush1.msra.mxu0 %v2676
    %2678 = vmatprep.subr.mxu0 0.0
    %v2679 = vand.u32 %v1836, 4294901760
    %2680 = vmatpush1.msra.mxu0 %v2679
    %2681 = vmatprep.subr.mxu0 0.0
    %v2682 = vand.u32 %v1837, 4294901760
    %2683 = vmatpush1.msra.mxu0 %v2682
    %2684 = vmatprep.subr.mxu0 0.0
    %v2685 = vand.u32 %v1838, 4294901760
    %2686 = vmatpush1.msra.mxu0 %v2685
    %2687 = vmatprep.subr.mxu0 0.0
    %v2688 = vand.u32 %v1839, 4294901760
    %2689 = vmatpush1.msra.mxu0 %v2688
    %2690 = vmatprep.subr.mxu0 0.0
    %v2691 = vand.u32 %v1840, 4294901760
    %2692 = vmatpush1.msra.mxu0 %v2691
    %2693 = vmatprep.subr.mxu0 0.0
    %v2694 = vand.u32 %v1841, 4294901760
    %2695 = vmatpush1.msra.mxu0 %v2694
    %v2696 = vand.u32 %v16, 4294901760
    %2697 = vmatprep.mubr.f32.mxu0 %v2696
    %v2698 = vand.u32 %v15, 4294901760
    %2699 = vmatmul.mubr.f32.gmra.mrb[0].mxu0 %v2698
    %v2700 = vpop.f32.mrb[0].mxu0
    %v2701 = vadd.f32 %v2597, %v2700
    %v2702 = vpop.f32.mrb[0].mxu0
    %2703 = vdwg.mxu0
    %vm2704 = vcmp.gt.f32.partialorder %v2701, %v1807
    %v2705 = vsel %vm2704, %v2701, %v1807
    %v2706 = vsel %vm2704, 1.0, 0.0
    %v2707 = vsel %vm2704, 0.0, %v1808
    %s2708 = scalar_lea.vmem %s1, 768
    %v2709 = vld [vmem:[%s2708] sm:$0xff]
    %v2710 = vld [vmem:[%s2708 + $0x8] sm:$0xff]
    %v2711 = vld [vmem:[%s2708 + $0x10] sm:$0xff]
    %v2712 = vld [vmem:[%s2708 + $0x18] sm:$0xff]
    %v2713 = vld [vmem:[%s2708 + $0x20] sm:$0xff]
    %v2714 = vld [vmem:[%s2708 + $0x28] sm:$0xff]
    %v2715 = vld [vmem:[%s2708 + $0x30] sm:$0xff]
    %v2716 = vld [vmem:[%s2708 + $0x38] sm:$0xff]
    %v2717 = vld [vmem:[%s2708 + $0x40] sm:$0xff]
    %v2718 = vld [vmem:[%s2708 + $0x48] sm:$0xff]
    %v2719 = vld [vmem:[%s2708 + $0x50] sm:$0xff]
    %v2720 = vld [vmem:[%s2708 + $0x58] sm:$0xff]
    %v2721 = vld [vmem:[%s2708 + $0x60] sm:$0xff]
    %v2722 = vld [vmem:[%s2708 + $0x68] sm:$0xff]
    %v2723 = vld [vmem:[%s2708 + $0x70] sm:$0xff]
    %v2724 = vld [vmem:[%s2708 + $0x78] sm:$0xff]
    %v2725 = vld [vmem:[%s2708 + $0x80] sm:$0xff]
    %v2726 = vld [vmem:[%s2708 + $0x88] sm:$0xff]
    %v2727 = vld [vmem:[%s2708 + $0x90] sm:$0xff]
    %v2728 = vld [vmem:[%s2708 + $0x98] sm:$0xff]
    %v2729 = vld [vmem:[%s2708 + $0xa0] sm:$0xff]
    %v2730 = vld [vmem:[%s2708 + $0xa8] sm:$0xff]
    %v2731 = vld [vmem:[%s2708 + $0xb0] sm:$0xff]
    %v2732 = vld [vmem:[%s2708 + $0xb8] sm:$0xff]
    %v2733 = vld [vmem:[%s2708 + $0xc0] sm:$0xff]
    %v2734 = vld [vmem:[%s2708 + $0xc8] sm:$0xff]
    %v2735 = vld [vmem:[%s2708 + $0xd0] sm:$0xff]
    %v2736 = vld [vmem:[%s2708 + $0xd8] sm:$0xff]
    %v2737 = vld [vmem:[%s2708 + $0xe0] sm:$0xff]
    %v2738 = vld [vmem:[%s2708 + $0xe8] sm:$0xff]
    %v2739 = vld [vmem:[%s2708 + $0xf0] sm:$0xff]
    %v2740 = vld [vmem:[%s2708 + $0xf8] sm:$0xff]
    %2741 = vmatprep.subr.mxu0 0.0
    %v2742 = vand.u32 %v2709, 4294901760
    %2743 = vmatpush1.msra.mxu0 %v2742
    %2744 = vmatprep.subr.mxu0 0.0
    %v2745 = vand.u32 %v2710, 4294901760
    %2746 = vmatpush1.msra.mxu0 %v2745
    %2747 = vmatprep.subr.mxu0 0.0
    %v2748 = vand.u32 %v2711, 4294901760
    %2749 = vmatpush1.msra.mxu0 %v2748
    %2750 = vmatprep.subr.mxu0 0.0
    %v2751 = vand.u32 %v2712, 4294901760
    %2752 = vmatpush1.msra.mxu0 %v2751
    %2753 = vmatprep.subr.mxu0 0.0
    %v2754 = vand.u32 %v2713, 4294901760
    %2755 = vmatpush1.msra.mxu0 %v2754
    %2756 = vmatprep.subr.mxu0 0.0
    %v2757 = vand.u32 %v2714, 4294901760
    %2758 = vmatpush1.msra.mxu0 %v2757
    %2759 = vmatprep.subr.mxu0 0.0
    %v2760 = vand.u32 %v2715, 4294901760
    %2761 = vmatpush1.msra.mxu0 %v2760
    %2762 = vmatprep.subr.mxu0 0.0
    %v2763 = vand.u32 %v2716, 4294901760
    %2764 = vmatpush1.msra.mxu0 %v2763
    %2765 = vmatprep.subr.mxu0 0.0
    %v2766 = vand.u32 %v2717, 4294901760
    %2767 = vmatpush1.msra.mxu0 %v2766
    %2768 = vmatprep.subr.mxu0 0.0
    %v2769 = vand.u32 %v2718, 4294901760
    %2770 = vmatpush1.msra.mxu0 %v2769
    %2771 = vmatprep.subr.mxu0 0.0
    %v2772 = vand.u32 %v2719, 4294901760
    %2773 = vmatpush1.msra.mxu0 %v2772
    %2774 = vmatprep.subr.mxu0 0.0
    %v2775 = vand.u32 %v2720, 4294901760
    %2776 = vmatpush1.msra.mxu0 %v2775
    %2777 = vmatprep.subr.mxu0 0.0
    %v2778 = vand.u32 %v2721, 4294901760
    %2779 = vmatpush1.msra.mxu0 %v2778
    %2780 = vmatprep.subr.mxu0 0.0
    %v2781 = vand.u32 %v2722, 4294901760
    %2782 = vmatpush1.msra.mxu0 %v2781
    %2783 = vmatprep.subr.mxu0 0.0
    %v2784 = vand.u32 %v2723, 4294901760
    %2785 = vmatpush1.msra.mxu0 %v2784
    %2786 = vmatprep.subr.mxu0 0.0
    %v2787 = vand.u32 %v2724, 4294901760
    %2788 = vmatpush1.msra.mxu0 %v2787
    %2789 = vmatprep.subr.mxu0 0.0
    %v2790 = vand.u32 %v2725, 4294901760
    %2791 = vmatpush1.msra.mxu0 %v2790
    %2792 = vmatprep.subr.mxu0 0.0
    %v2793 = vand.u32 %v2726, 4294901760
    %2794 = vmatpush1.msra.mxu0 %v2793
    %2795 = vmatprep.subr.mxu0 0.0
    %v2796 = vand.u32 %v2727, 4294901760
    %2797 = vmatpush1.msra.mxu0 %v2796
    %2798 = vmatprep.subr.mxu0 0.0
    %v2799 = vand.u32 %v2728, 4294901760
    %2800 = vmatpush1.msra.mxu0 %v2799
    %2801 = vmatprep.subr.mxu0 0.0
    %v2802 = vand.u32 %v2729, 4294901760
    %2803 = vmatpush1.msra.mxu0 %v2802
    %2804 = vmatprep.subr.mxu0 0.0
    %v2805 = vand.u32 %v2730, 4294901760
    %2806 = vmatpush1.msra.mxu0 %v2805
    %2807 = vmatprep.subr.mxu0 0.0
    %v2808 = vand.u32 %v2731, 4294901760
    %2809 = vmatpush1.msra.mxu0 %v2808
    %2810 = vmatprep.subr.mxu0 0.0
    %v2811 = vand.u32 %v2732, 4294901760
    %2812 = vmatpush1.msra.mxu0 %v2811
    %2813 = vmatprep.subr.mxu0 0.0
    %v2814 = vand.u32 %v2733, 4294901760
    %2815 = vmatpush1.msra.mxu0 %v2814
    %2816 = vmatprep.subr.mxu0 0.0
    %v2817 = vand.u32 %v2734, 4294901760
    %2818 = vmatpush1.msra.mxu0 %v2817
    %2819 = vmatprep.subr.mxu0 0.0
    %v2820 = vand.u32 %v2735, 4294901760
    %2821 = vmatpush1.msra.mxu0 %v2820
    %2822 = vmatprep.subr.mxu0 0.0
    %v2823 = vand.u32 %v2736, 4294901760
    %2824 = vmatpush1.msra.mxu0 %v2823
    %2825 = vmatprep.subr.mxu0 0.0
    %v2826 = vand.u32 %v2737, 4294901760
    %2827 = vmatpush1.msra.mxu0 %v2826
    %2828 = vmatprep.subr.mxu0 0.0
    %v2829 = vand.u32 %v2738, 4294901760
    %2830 = vmatpush1.msra.mxu0 %v2829
    %2831 = vmatprep.subr.mxu0 0.0
    %v2832 = vand.u32 %v2739, 4294901760
    %2833 = vmatpush1.msra.mxu0 %v2832
    %2834 = vmatprep.subr.mxu0 0.0
    %v2835 = vand.u32 %v2740, 4294901760
    %2836 = vmatpush1.msra.mxu0 %v2835
    %v2837 = vand.u32 %v16, 4294901760
    %v2838 = vsub.f32 %v16, %v2837
    %v2839 = vand.u32 %v2838, 4294901760
    %v2840 = vsub.f32 %v2838, %v2839
    %v2841 = vand.u32 %v2840, 4294901760
    %2842 = vmatprep.mubr.f32.mxu0 %v2841
    %v2843 = vand.u32 %v15, 4294901760
    %v2844 = vsub.f32 %v15, %v2843
    %v2845 = vand.u32 %v2844, 4294901760
    %v2846 = vsub.f32 %v2844, %v2845
    %v2847 = vand.u32 %v2846, 4294901760
    %2848 = vmatmul.mubr.f32.gmra.mrb[0].mxu0 %v2847
    %v2849 = vpop.f32.mrb[0].mxu0
    %v2850 = vadd.f32 0.0, %v2849
    %v2851 = vpop.f32.mrb[0].mxu0
    %2852 = vdwg.mxu0
    %2853 = vmatprep.subr.mxu0 0.0
    %v2854 = vand.u32 %v2709, 4294901760
    %v2855 = vsub.f32 %v2709, %v2854
    %v2856 = vand.u32 %v2855, 4294901760
    %v2857 = vsub.f32 %v2855, %v2856
    %v2858 = vand.u32 %v2857, 4294901760
    %2859 = vmatpush1.msra.mxu0 %v2858
    %2860 = vmatprep.subr.mxu0 0.0
    %v2861 = vand.u32 %v2710, 4294901760
    %v2862 = vsub.f32 %v2710, %v2861
    %v2863 = vand.u32 %v2862, 4294901760
    %v2864 = vsub.f32 %v2862, %v2863
    %v2865 = vand.u32 %v2864, 4294901760
    %2866 = vmatpush1.msra.mxu0 %v2865
    %2867 = vmatprep.subr.mxu0 0.0
    %v2868 = vand.u32 %v2711, 4294901760
    %v2869 = vsub.f32 %v2711, %v2868
    %v2870 = vand.u32 %v2869, 4294901760
    %v2871 = vsub.f32 %v2869, %v2870
    %v2872 = vand.u32 %v2871, 4294901760
    %2873 = vmatpush1.msra.mxu0 %v2872
    %2874 = vmatprep.subr.mxu0 0.0
    %v2875 = vand.u32 %v2712, 4294901760
    %v2876 = vsub.f32 %v2712, %v2875
    %v2877 = vand.u32 %v2876, 4294901760
    %v2878 = vsub.f32 %v2876, %v2877
    %v2879 = vand.u32 %v2878, 4294901760
    %2880 = vmatpush1.msra.mxu0 %v2879
    %2881 = vmatprep.subr.mxu0 0.0
    %v2882 = vand.u32 %v2713, 4294901760
    %v2883 = vsub.f32 %v2713, %v2882
    %v2884 = vand.u32 %v2883, 4294901760
    %v2885 = vsub.f32 %v2883, %v2884
    %v2886 = vand.u32 %v2885, 4294901760
    %2887 = vmatpush1.msra.mxu0 %v2886
    %2888 = vmatprep.subr.mxu0 0.0
    %v2889 = vand.u32 %v2714, 4294901760
    %v2890 = vsub.f32 %v2714, %v2889
    %v2891 = vand.u32 %v2890, 4294901760
    %v2892 = vsub.f32 %v2890, %v2891
    %v2893 = vand.u32 %v2892, 4294901760
    %2894 = vmatpush1.msra.mxu0 %v2893
    %2895 = vmatprep.subr.mxu0 0.0
    %v2896 = vand.u32 %v2715, 4294901760
    %v2897 = vsub.f32 %v2715, %v2896
    %v2898 = vand.u32 %v2897, 4294901760
    %v2899 = vsub.f32 %v2897, %v2898
    %v2900 = vand.u32 %v2899, 4294901760
    %2901 = vmatpush1.msra.mxu0 %v2900
    %2902 = vmatprep.subr.mxu0 0.0
    %v2903 = vand.u32 %v2716, 4294901760
    %v2904 = vsub.f32 %v2716, %v2903
    %v2905 = vand.u32 %v2904, 4294901760
    %v2906 = vsub.f32 %v2904, %v2905
    %v2907 = vand.u32 %v2906, 4294901760
    %2908 = vmatpush1.msra.mxu0 %v2907
    %2909 = vmatprep.subr.mxu0 0.0
    %v2910 = vand.u32 %v2717, 4294901760
    %v2911 = vsub.f32 %v2717, %v2910
    %v2912 = vand.u32 %v2911, 4294901760
    %v2913 = vsub.f32 %v2911, %v2912
    %v2914 = vand.u32 %v2913, 4294901760
    %2915 = vmatpush1.msra.mxu0 %v2914
    %2916 = vmatprep.subr.mxu0 0.0
    %v2917 = vand.u32 %v2718, 4294901760
    %v2918 = vsub.f32 %v2718, %v2917
    %v2919 = vand.u32 %v2918, 4294901760
    %v2920 = vsub.f32 %v2918, %v2919
    %v2921 = vand.u32 %v2920, 4294901760
    %2922 = vmatpush1.msra.mxu0 %v2921
    %2923 = vmatprep.subr.mxu0 0.0
    %v2924 = vand.u32 %v2719, 4294901760
    %v2925 = vsub.f32 %v2719, %v2924
    %v2926 = vand.u32 %v2925, 4294901760
    %v2927 = vsub.f32 %v2925, %v2926
    %v2928 = vand.u32 %v2927, 4294901760
    %2929 = vmatpush1.msra.mxu0 %v2928
    %2930 = vmatprep.subr.mxu0 0.0
    %v2931 = vand.u32 %v2720, 4294901760
    %v2932 = vsub.f32 %v2720, %v2931
    %v2933 = vand.u32 %v2932, 4294901760
    %v2934 = vsub.f32 %v2932, %v2933
    %v2935 = vand.u32 %v2934, 4294901760
    %2936 = vmatpush1.msra.mxu0 %v2935
    %2937 = vmatprep.subr.mxu0 0.0
    %v2938 = vand.u32 %v2721, 4294901760
    %v2939 = vsub.f32 %v2721, %v2938
    %v2940 = vand.u32 %v2939, 4294901760
    %v2941 = vsub.f32 %v2939, %v2940
    %v2942 = vand.u32 %v2941, 4294901760
    %2943 = vmatpush1.msra.mxu0 %v2942
    %2944 = vmatprep.subr.mxu0 0.0
    %v2945 = vand.u32 %v2722, 4294901760
    %v2946 = vsub.f32 %v2722, %v2945
    %v2947 = vand.u32 %v2946, 4294901760
    %v2948 = vsub.f32 %v2946, %v2947
    %v2949 = vand.u32 %v2948, 4294901760
    %2950 = vmatpush1.msra.mxu0 %v2949
    %2951 = vmatprep.subr.mxu0 0.0
    %v2952 = vand.u32 %v2723, 4294901760
    %v2953 = vsub.f32 %v2723, %v2952
    %v2954 = vand.u32 %v2953, 4294901760
    %v2955 = vsub.f32 %v2953, %v2954
    %v2956 = vand.u32 %v2955, 4294901760
    %2957 = vmatpush1.msra.mxu0 %v2956
    %2958 = vmatprep.subr.mxu0 0.0
    %v2959 = vand.u32 %v2724, 4294901760
    %v2960 = vsub.f32 %v2724, %v2959
    %v2961 = vand.u32 %v2960, 4294901760
    %v2962 = vsub.f32 %v2960, %v2961
    %v2963 = vand.u32 %v2962, 4294901760
    %2964 = vmatpush1.msra.mxu0 %v2963
    %2965 = vmatprep.subr.mxu0 0.0
    %v2966 = vand.u32 %v2725, 4294901760
    %v2967 = vsub.f32 %v2725, %v2966
    %v2968 = vand.u32 %v2967, 4294901760
    %v2969 = vsub.f32 %v2967, %v2968
    %v2970 = vand.u32 %v2969, 4294901760
    %2971 = vmatpush1.msra.mxu0 %v2970
    %2972 = vmatprep.subr.mxu0 0.0
    %v2973 = vand.u32 %v2726, 4294901760
    %v2974 = vsub.f32 %v2726, %v2973
    %v2975 = vand.u32 %v2974, 4294901760
    %v2976 = vsub.f32 %v2974, %v2975
    %v2977 = vand.u32 %v2976, 4294901760
    %2978 = vmatpush1.msra.mxu0 %v2977
    %2979 = vmatprep.subr.mxu0 0.0
    %v2980 = vand.u32 %v2727, 4294901760
    %v2981 = vsub.f32 %v2727, %v2980
    %v2982 = vand.u32 %v2981, 4294901760
    %v2983 = vsub.f32 %v2981, %v2982
    %v2984 = vand.u32 %v2983, 4294901760
    %2985 = vmatpush1.msra.mxu0 %v2984
    %2986 = vmatprep.subr.mxu0 0.0
    %v2987 = vand.u32 %v2728, 4294901760
    %v2988 = vsub.f32 %v2728, %v2987
    %v2989 = vand.u32 %v2988, 4294901760
    %v2990 = vsub.f32 %v2988, %v2989
    %v2991 = vand.u32 %v2990, 4294901760
    %2992 = vmatpush1.msra.mxu0 %v2991
    %2993 = vmatprep.subr.mxu0 0.0
    %v2994 = vand.u32 %v2729, 4294901760
    %v2995 = vsub.f32 %v2729, %v2994
    %v2996 = vand.u32 %v2995, 4294901760
    %v2997 = vsub.f32 %v2995, %v2996
    %v2998 = vand.u32 %v2997, 4294901760
    %2999 = vmatpush1.msra.mxu0 %v2998
    %3000 = vmatprep.subr.mxu0 0.0
    %v3001 = vand.u32 %v2730, 4294901760
    %v3002 = vsub.f32 %v2730, %v3001
    %v3003 = vand.u32 %v3002, 4294901760
    %v3004 = vsub.f32 %v3002, %v3003
    %v3005 = vand.u32 %v3004, 4294901760
    %3006 = vmatpush1.msra.mxu0 %v3005
    %3007 = vmatprep.subr.mxu0 0.0
    %v3008 = vand.u32 %v2731, 4294901760
    %v3009 = vsub.f32 %v2731, %v3008
    %v3010 = vand.u32 %v3009, 4294901760
    %v3011 = vsub.f32 %v3009, %v3010
    %v3012 = vand.u32 %v3011, 4294901760
    %3013 = vmatpush1.msra.mxu0 %v3012
    %3014 = vmatprep.subr.mxu0 0.0
    %v3015 = vand.u32 %v2732, 4294901760
    %v3016 = vsub.f32 %v2732, %v3015
    %v3017 = vand.u32 %v3016, 4294901760
    %v3018 = vsub.f32 %v3016, %v3017
    %v3019 = vand.u32 %v3018, 4294901760
    %3020 = vmatpush1.msra.mxu0 %v3019
    %3021 = vmatprep.subr.mxu0 0.0
    %v3022 = vand.u32 %v2733, 4294901760
    %v3023 = vsub.f32 %v2733, %v3022
    %v3024 = vand.u32 %v3023, 4294901760
    %v3025 = vsub.f32 %v3023, %v3024
    %v3026 = vand.u32 %v3025, 4294901760
    %3027 = vmatpush1.msra.mxu0 %v3026
    %3028 = vmatprep.subr.mxu0 0.0
    %v3029 = vand.u32 %v2734, 4294901760
    %v3030 = vsub.f32 %v2734, %v3029
    %v3031 = vand.u32 %v3030, 4294901760
    %v3032 = vsub.f32 %v3030, %v3031
    %v3033 = vand.u32 %v3032, 4294901760
    %3034 = vmatpush1.msra.mxu0 %v3033
    %3035 = vmatprep.subr.mxu0 0.0
    %v3036 = vand.u32 %v2735, 4294901760
    %v3037 = vsub.f32 %v2735, %v3036
    %v3038 = vand.u32 %v3037, 4294901760
    %v3039 = vsub.f32 %v3037, %v3038
    %v3040 = vand.u32 %v3039, 4294901760
    %3041 = vmatpush1.msra.mxu0 %v3040
    %3042 = vmatprep.subr.mxu0 0.0
    %v3043 = vand.u32 %v2736, 4294901760
    %v3044 = vsub.f32 %v2736, %v3043
    %v3045 = vand.u32 %v3044, 4294901760
    %v3046 = vsub.f32 %v3044, %v3045
    %v3047 = vand.u32 %v3046, 4294901760
    %3048 = vmatpush1.msra.mxu0 %v3047
    %3049 = vmatprep.subr.mxu0 0.0
    %v3050 = vand.u32 %v2737, 4294901760
    %v3051 = vsub.f32 %v2737, %v3050
    %v3052 = vand.u32 %v3051, 4294901760
    %v3053 = vsub.f32 %v3051, %v3052
    %v3054 = vand.u32 %v3053, 4294901760
    %3055 = vmatpush1.msra.mxu0 %v3054
    %3056 = vmatprep.subr.mxu0 0.0
    %v3057 = vand.u32 %v2738, 4294901760
    %v3058 = vsub.f32 %v2738, %v3057
    %v3059 = vand.u32 %v3058, 4294901760
    %v3060 = vsub.f32 %v3058, %v3059
    %v3061 = vand.u32 %v3060, 4294901760
    %3062 = vmatpush1.msra.mxu0 %v3061
    %3063 = vmatprep.subr.mxu0 0.0
    %v3064 = vand.u32 %v2739, 4294901760
    %v3065 = vsub.f32 %v2739, %v3064
    %v3066 = vand.u32 %v3065, 4294901760
    %v3067 = vsub.f32 %v3065, %v3066
    %v3068 = vand.u32 %v3067, 4294901760
    %3069 = vmatpush1.msra.mxu0 %v3068
    %3070 = vmatprep.subr.mxu0 0.0
    %v3071 = vand.u32 %v2740, 4294901760
    %v3072 = vsub.f32 %v2740, %v3071
    %v3073 = vand.u32 %v3072, 4294901760
    %v3074 = vsub.f32 %v3072, %v3073
    %v3075 = vand.u32 %v3074, 4294901760
    %3076 = vmatpush1.msra.mxu0 %v3075
    %v3077 = vand.u32 %v16, 4294901760
    %3078 = vmatprep.mubr.f32.mxu0 %v3077
    %v3079 = vand.u32 %v15, 4294901760
    %3080 = vmatmul.mubr.f32.gmra.mrb[0].mxu0 %v3079
    %v3081 = vpop.f32.mrb[0].mxu0
    %v3082 = vadd.f32 %v2850, %v3081
    %v3083 = vpop.f32.mrb[0].mxu0
    %3084 = vdwg.mxu0
    %3085 = vmatprep.subr.mxu0 0.0
    %v3086 = vand.u32 %v2709, 4294901760
    %v3087 = vsub.f32 %v2709, %v3086
    %3088 = vmatpush1.msra.mxu0 %v3087
    %3089 = vmatprep.subr.mxu0 0.0
    %v3090 = vand.u32 %v2710, 4294901760
    %v3091 = vsub.f32 %v2710, %v3090
    %3092 = vmatpush1.msra.mxu0 %v3091
    %3093 = vmatprep.subr.mxu0 0.0
    %v3094 = vand.u32 %v2711, 4294901760
    %v3095 = vsub.f32 %v2711, %v3094
    %3096 = vmatpush1.msra.mxu0 %v3095
    %3097 = vmatprep.subr.mxu0 0.0
    %v3098 = vand.u32 %v2712, 4294901760
    %v3099 = vsub.f32 %v2712, %v3098
    %3100 = vmatpush1.msra.mxu0 %v3099
    %3101 = vmatprep.subr.mxu0 0.0
    %v3102 = vand.u32 %v2713, 4294901760
    %v3103 = vsub.f32 %v2713, %v3102
    %3104 = vmatpush1.msra.mxu0 %v3103
    %3105 = vmatprep.subr.mxu0 0.0
    %v3106 = vand.u32 %v2714, 4294901760
    %v3107 = vsub.f32 %v2714, %v3106
    %3108 = vmatpush1.msra.mxu0 %v3107
    %3109 = vmatprep.subr.mxu0 0.0
    %v3110 = vand.u32 %v2715, 4294901760
    %v3111 = vsub.f32 %v2715, %v3110
    %3112 = vmatpush1.msra.mxu0 %v3111
    %3113 = vmatprep.subr.mxu0 0.0
    %v3114 = vand.u32 %v2716, 4294901760
    %v3115 = vsub.f32 %v2716, %v3114
    %3116 = vmatpush1.msra.mxu0 %v3115
    %3117 = vmatprep.subr.mxu0 0.0
    %v3118 = vand.u32 %v2717, 4294901760
    %v3119 = vsub.f32 %v2717, %v3118
    %3120 = vmatpush1.msra.mxu0 %v3119
    %3121 = vmatprep.subr.mxu0 0.0
    %v3122 = vand.u32 %v2718, 4294901760
    %v3123 = vsub.f32 %v2718, %v3122
    %3124 = vmatpush1.msra.mxu0 %v3123
    %3125 = vmatprep.subr.mxu0 0.0
    %v3126 = vand.u32 %v2719, 4294901760
    %v3127 = vsub.f32 %v2719, %v3126
    %3128 = vmatpush1.msra.mxu0 %v3127
    %3129 = vmatprep.subr.mxu0 0.0
    %v3130 = vand.u32 %v2720, 4294901760
    %v3131 = vsub.f32 %v2720, %v3130
    %3132 = vmatpush1.msra.mxu0 %v3131
    %3133 = vmatprep.subr.mxu0 0.0
    %v3134 = vand.u32 %v2721, 4294901760
    %v3135 = vsub.f32 %v2721, %v3134
    %3136 = vmatpush1.msra.mxu0 %v3135
    %3137 = vmatprep.subr.mxu0 0.0
    %v3138 = vand.u32 %v2722, 4294901760
    %v3139 = vsub.f32 %v2722, %v3138
    %3140 = vmatpush1.msra.mxu0 %v3139
    %3141 = vmatprep.subr.mxu0 0.0
    %v3142 = vand.u32 %v2723, 4294901760
    %v3143 = vsub.f32 %v2723, %v3142
    %3144 = vmatpush1.msra.mxu0 %v3143
    %3145 = vmatprep.subr.mxu0 0.0
    %v3146 = vand.u32 %v2724, 4294901760
    %v3147 = vsub.f32 %v2724, %v3146
    %3148 = vmatpush1.msra.mxu0 %v3147
    %3149 = vmatprep.subr.mxu0 0.0
    %v3150 = vand.u32 %v2725, 4294901760
    %v3151 = vsub.f32 %v2725, %v3150
    %3152 = vmatpush1.msra.mxu0 %v3151
    %3153 = vmatprep.subr.mxu0 0.0
    %v3154 = vand.u32 %v2726, 4294901760
    %v3155 = vsub.f32 %v2726, %v3154
    %3156 = vmatpush1.msra.mxu0 %v3155
    %3157 = vmatprep.subr.mxu0 0.0
    %v3158 = vand.u32 %v2727, 4294901760
    %v3159 = vsub.f32 %v2727, %v3158
    %3160 = vmatpush1.msra.mxu0 %v3159
    %3161 = vmatprep.subr.mxu0 0.0
    %v3162 = vand.u32 %v2728, 4294901760
    %v3163 = vsub.f32 %v2728, %v3162
    %3164 = vmatpush1.msra.mxu0 %v3163
    %3165 = vmatprep.subr.mxu0 0.0
    %v3166 = vand.u32 %v2729, 4294901760
    %v3167 = vsub.f32 %v2729, %v3166
    %3168 = vmatpush1.msra.mxu0 %v3167
    %3169 = vmatprep.subr.mxu0 0.0
    %v3170 = vand.u32 %v2730, 4294901760
    %v3171 = vsub.f32 %v2730, %v3170
    %3172 = vmatpush1.msra.mxu0 %v3171
    %3173 = vmatprep.subr.mxu0 0.0
    %v3174 = vand.u32 %v2731, 4294901760
    %v3175 = vsub.f32 %v2731, %v3174
    %3176 = vmatpush1.msra.mxu0 %v3175
    %3177 = vmatprep.subr.mxu0 0.0
    %v3178 = vand.u32 %v2732, 4294901760
    %v3179 = vsub.f32 %v2732, %v3178
    %3180 = vmatpush1.msra.mxu0 %v3179
    %3181 = vmatprep.subr.mxu0 0.0
    %v3182 = vand.u32 %v2733, 4294901760
    %v3183 = vsub.f32 %v2733, %v3182
    %3184 = vmatpush1.msra.mxu0 %v3183
    %3185 = vmatprep.subr.mxu0 0.0
    %v3186 = vand.u32 %v2734, 4294901760
    %v3187 = vsub.f32 %v2734, %v3186
    %3188 = vmatpush1.msra.mxu0 %v3187
    %3189 = vmatprep.subr.mxu0 0.0
    %v3190 = vand.u32 %v2735, 4294901760
    %v3191 = vsub.f32 %v2735, %v3190
    %3192 = vmatpush1.msra.mxu0 %v3191
    %3193 = vmatprep.subr.mxu0 0.0
    %v3194 = vand.u32 %v2736, 4294901760
    %v3195 = vsub.f32 %v2736, %v3194
    %3196 = vmatpush1.msra.mxu0 %v3195
    %3197 = vmatprep.subr.mxu0 0.0
    %v3198 = vand.u32 %v2737, 4294901760
    %v3199 = vsub.f32 %v2737, %v3198
    %3200 = vmatpush1.msra.mxu0 %v3199
    %3201 = vmatprep.subr.mxu0 0.0
    %v3202 = vand.u32 %v2738, 4294901760
    %v3203 = vsub.f32 %v2738, %v3202
    %3204 = vmatpush1.msra.mxu0 %v3203
    %3205 = vmatprep.subr.mxu0 0.0
    %v3206 = vand.u32 %v2739, 4294901760
    %v3207 = vsub.f32 %v2739, %v3206
    %3208 = vmatpush1.msra.mxu0 %v3207
    %3209 = vmatprep.subr.mxu0 0.0
    %v3210 = vand.u32 %v2740, 4294901760
    %v3211 = vsub.f32 %v2740, %v3210
    %3212 = vmatpush1.msra.mxu0 %v3211
    %v3213 = vand.u32 %v16, 4294901760
    %v3214 = vsub.f32 %v16, %v3213
    %3215 = vmatprep.mubr.f32.mxu0 %v3214
    %v3216 = vand.u32 %v15, 4294901760
    %v3217 = vsub.f32 %v15, %v3216
    %3218 = vmatmul.mubr.f32.gmra.mrb[0].mxu0 %v3217
    %v3219 = vpop.f32.mrb[0].mxu0
    %v3220 = vadd.f32 %v3082, %v3219
    %v3221 = vpop.f32.mrb[0].mxu0
    %3222 = vdwg.mxu0
    %3223 = vmatprep.subr.mxu0 0.0
    %v3224 = vand.u32 %v2709, 4294901760
    %3225 = vmatpush1.msra.mxu0 %v3224
    %3226 = vmatprep.subr.mxu0 0.0
    %v3227 = vand.u32 %v2710, 4294901760
    %3228 = vmatpush1.msra.mxu0 %v3227
    %3229 = vmatprep.subr.mxu0 0.0
    %v3230 = vand.u32 %v2711, 4294901760
    %3231 = vmatpush1.msra.mxu0 %v3230
    %3232 = vmatprep.subr.mxu0 0.0
    %v3233 = vand.u32 %v2712, 4294901760
    %3234 = vmatpush1.msra.mxu0 %v3233
    %3235 = vmatprep.subr.mxu0 0.0
    %v3236 = vand.u32 %v2713, 4294901760
    %3237 = vmatpush1.msra.mxu0 %v3236
    %3238 = vmatprep.subr.mxu0 0.0
    %v3239 = vand.u32 %v2714, 4294901760
    %3240 = vmatpush1.msra.mxu0 %v3239
    %3241 = vmatprep.subr.mxu0 0.0
    %v3242 = vand.u32 %v2715, 4294901760
    %3243 = vmatpush1.msra.mxu0 %v3242
    %3244 = vmatprep.subr.mxu0 0.0
    %v3245 = vand.u32 %v2716, 4294901760
    %3246 = vmatpush1.msra.mxu0 %v3245
    %3247 = vmatprep.subr.mxu0 0.0
    %v3248 = vand.u32 %v2717, 4294901760
    %3249 = vmatpush1.msra.mxu0 %v3248
    %3250 = vmatprep.subr.mxu0 0.0
    %v3251 = vand.u32 %v2718, 4294901760
    %3252 = vmatpush1.msra.mxu0 %v3251
    %3253 = vmatprep.subr.mxu0 0.0
    %v3254 = vand.u32 %v2719, 4294901760
    %3255 = vmatpush1.msra.mxu0 %v3254
    %3256 = vmatprep.subr.mxu0 0.0
    %v3257 = vand.u32 %v2720, 4294901760
    %3258 = vmatpush1.msra.mxu0 %v3257
    %3259 = vmatprep.subr.mxu0 0.0
    %v3260 = vand.u32 %v2721, 4294901760
    %3261 = vmatpush1.msra.mxu0 %v3260
    %3262 = vmatprep.subr.mxu0 0.0
    %v3263 = vand.u32 %v2722, 4294901760
    %3264 = vmatpush1.msra.mxu0 %v3263
    %3265 = vmatprep.subr.mxu0 0.0
    %v3266 = vand.u32 %v2723, 4294901760
    %3267 = vmatpush1.msra.mxu0 %v3266
    %3268 = vmatprep.subr.mxu0 0.0
    %v3269 = vand.u32 %v2724, 4294901760
    %3270 = vmatpush1.msra.mxu0 %v3269
    %3271 = vmatprep.subr.mxu0 0.0
    %v3272 = vand.u32 %v2725, 4294901760
    %3273 = vmatpush1.msra.mxu0 %v3272
    %3274 = vmatprep.subr.mxu0 0.0
    %v3275 = vand.u32 %v2726, 4294901760
    %3276 = vmatpush1.msra.mxu0 %v3275
    %3277 = vmatprep.subr.mxu0 0.0
    %v3278 = vand.u32 %v2727, 4294901760
    %3279 = vmatpush1.msra.mxu0 %v3278
    %3280 = vmatprep.subr.mxu0 0.0
    %v3281 = vand.u32 %v2728, 4294901760
    %3282 = vmatpush1.msra.mxu0 %v3281
    %3283 = vmatprep.subr.mxu0 0.0
    %v3284 = vand.u32 %v2729, 4294901760
    %3285 = vmatpush1.msra.mxu0 %v3284
    %3286 = vmatprep.subr.mxu0 0.0
    %v3287 = vand.u32 %v2730, 4294901760
    %3288 = vmatpush1.msra.mxu0 %v3287
    %3289 = vmatprep.subr.mxu0 0.0
    %v3290 = vand.u32 %v2731, 4294901760
    %3291 = vmatpush1.msra.mxu0 %v3290
    %3292 = vmatprep.subr.mxu0 0.0
    %v3293 = vand.u32 %v2732, 4294901760
    %3294 = vmatpush1.msra.mxu0 %v3293
    %3295 = vmatprep.subr.mxu0 0.0
    %v3296 = vand.u32 %v2733, 4294901760
    %3297 = vmatpush1.msra.mxu0 %v3296
    %3298 = vmatprep.subr.mxu0 0.0
    %v3299 = vand.u32 %v2734, 4294901760
    %3300 = vmatpush1.msra.mxu0 %v3299
    %3301 = vmatprep.subr.mxu0 0.0
    %v3302 = vand.u32 %v2735, 4294901760
    %3303 = vmatpush1.msra.mxu0 %v3302
    %3304 = vmatprep.subr.mxu0 0.0
    %v3305 = vand.u32 %v2736, 4294901760
    %3306 = vmatpush1.msra.mxu0 %v3305
    %3307 = vmatprep.subr.mxu0 0.0
    %v3308 = vand.u32 %v2737, 4294901760
    %3309 = vmatpush1.msra.mxu0 %v3308
    %3310 = vmatprep.subr.mxu0 0.0
    %v3311 = vand.u32 %v2738, 4294901760
    %3312 = vmatpush1.msra.mxu0 %v3311
    %3313 = vmatprep.subr.mxu0 0.0
    %v3314 = vand.u32 %v2739, 4294901760
    %3315 = vmatpush1.msra.mxu0 %v3314
    %3316 = vmatprep.subr.mxu0 0.0
    %v3317 = vand.u32 %v2740, 4294901760
    %3318 = vmatpush1.msra.mxu0 %v3317
    %v3319 = vand.u32 %v16, 4294901760
    %v3320 = vsub.f32 %v16, %v3319
    %v3321 = vand.u32 %v3320, 4294901760
    %3322 = vmatprep.mubr.f32.mxu0 %v3321
    %v3323 = vand.u32 %v15, 4294901760
    %v3324 = vsub.f32 %v15, %v3323
    %v3325 = vand.u32 %v3324, 4294901760
    %3326 = vmatmul.mubr.f32.gmra.mrb[0].mxu0 %v3325
    %v3327 = vpop.f32.mrb[0].mxu0
    %v3328 = vadd.f32 %v3220, %v3327
    %v3329 = vpop.f32.mrb[0].mxu0
    %3330 = vdwg.mxu0
    %3331 = vmatprep.subr.mxu0 0.0
    %v3332 = vand.u32 %v2709, 4294901760
    %v3333 = vsub.f32 %v2709, %v3332
    %v3334 = vand.u32 %v3333, 4294901760
    %3335 = vmatpush1.msra.mxu0 %v3334
    %3336 = vmatprep.subr.mxu0 0.0
    %v3337 = vand.u32 %v2710, 4294901760
    %v3338 = vsub.f32 %v2710, %v3337
    %v3339 = vand.u32 %v3338, 4294901760
    %3340 = vmatpush1.msra.mxu0 %v3339
    %3341 = vmatprep.subr.mxu0 0.0
    %v3342 = vand.u32 %v2711, 4294901760
    %v3343 = vsub.f32 %v2711, %v3342
    %v3344 = vand.u32 %v3343, 4294901760
    %3345 = vmatpush1.msra.mxu0 %v3344
    %3346 = vmatprep.subr.mxu0 0.0
    %v3347 = vand.u32 %v2712, 4294901760
    %v3348 = vsub.f32 %v2712, %v3347
    %v3349 = vand.u32 %v3348, 4294901760
    %3350 = vmatpush1.msra.mxu0 %v3349
    %3351 = vmatprep.subr.mxu0 0.0
    %v3352 = vand.u32 %v2713, 4294901760
    %v3353 = vsub.f32 %v2713, %v3352
    %v3354 = vand.u32 %v3353, 4294901760
    %3355 = vmatpush1.msra.mxu0 %v3354
    %3356 = vmatprep.subr.mxu0 0.0
    %v3357 = vand.u32 %v2714, 4294901760
    %v3358 = vsub.f32 %v2714, %v3357
    %v3359 = vand.u32 %v3358, 4294901760
    %3360 = vmatpush1.msra.mxu0 %v3359
    %3361 = vmatprep.subr.mxu0 0.0
    %v3362 = vand.u32 %v2715, 4294901760
    %v3363 = vsub.f32 %v2715, %v3362
    %v3364 = vand.u32 %v3363, 4294901760
    %3365 = vmatpush1.msra.mxu0 %v3364
    %3366 = vmatprep.subr.mxu0 0.0
    %v3367 = vand.u32 %v2716, 4294901760
    %v3368 = vsub.f32 %v2716, %v3367
    %v3369 = vand.u32 %v3368, 4294901760
    %3370 = vmatpush1.msra.mxu0 %v3369
    %3371 = vmatprep.subr.mxu0 0.0
    %v3372 = vand.u32 %v2717, 4294901760
    %v3373 = vsub.f32 %v2717, %v3372
    %v3374 = vand.u32 %v3373, 4294901760
    %3375 = vmatpush1.msra.mxu0 %v3374
    %3376 = vmatprep.subr.mxu0 0.0
    %v3377 = vand.u32 %v2718, 4294901760
    %v3378 = vsub.f32 %v2718, %v3377
    %v3379 = vand.u32 %v3378, 4294901760
    %3380 = vmatpush1.msra.mxu0 %v3379
    %3381 = vmatprep.subr.mxu0 0.0
    %v3382 = vand.u32 %v2719, 4294901760
    %v3383 = vsub.f32 %v2719, %v3382
    %v3384 = vand.u32 %v3383, 4294901760
    %3385 = vmatpush1.msra.mxu0 %v3384
    %3386 = vmatprep.subr.mxu0 0.0
    %v3387 = vand.u32 %v2720, 4294901760
    %v3388 = vsub.f32 %v2720, %v3387
    %v3389 = vand.u32 %v3388, 4294901760
    %3390 = vmatpush1.msra.mxu0 %v3389
    %3391 = vmatprep.subr.mxu0 0.0
    %v3392 = vand.u32 %v2721, 4294901760
    %v3393 = vsub.f32 %v2721, %v3392
    %v3394 = vand.u32 %v3393, 4294901760
    %3395 = vmatpush1.msra.mxu0 %v3394
    %3396 = vmatprep.subr.mxu0 0.0
    %v3397 = vand.u32 %v2722, 4294901760
    %v3398 = vsub.f32 %v2722, %v3397
    %v3399 = vand.u32 %v3398, 4294901760
    %3400 = vmatpush1.msra.mxu0 %v3399
    %3401 = vmatprep.subr.mxu0 0.0
    %v3402 = vand.u32 %v2723, 4294901760
    %v3403 = vsub.f32 %v2723, %v3402
    %v3404 = vand.u32 %v3403, 4294901760
    %3405 = vmatpush1.msra.mxu0 %v3404
    %3406 = vmatprep.subr.mxu0 0.0
    %v3407 = vand.u32 %v2724, 4294901760
    %v3408 = vsub.f32 %v2724, %v3407
    %v3409 = vand.u32 %v3408, 4294901760
    %3410 = vmatpush1.msra.mxu0 %v3409
    %3411 = vmatprep.subr.mxu0 0.0
    %v3412 = vand.u32 %v2725, 4294901760
    %v3413 = vsub.f32 %v2725, %v3412
    %v3414 = vand.u32 %v3413, 4294901760
    %3415 = vmatpush1.msra.mxu0 %v3414
    %3416 = vmatprep.subr.mxu0 0.0
    %v3417 = vand.u32 %v2726, 4294901760
    %v3418 = vsub.f32 %v2726, %v3417
    %v3419 = vand.u32 %v3418, 4294901760
    %3420 = vmatpush1.msra.mxu0 %v3419
    %3421 = vmatprep.subr.mxu0 0.0
    %v3422 = vand.u32 %v2727, 4294901760
    %v3423 = vsub.f32 %v2727, %v3422
    %v3424 = vand.u32 %v3423, 4294901760
    %3425 = vmatpush1.msra.mxu0 %v3424
    %3426 = vmatprep.subr.mxu0 0.0
    %v3427 = vand.u32 %v2728, 4294901760
    %v3428 = vsub.f32 %v2728, %v3427
    %v3429 = vand.u32 %v3428, 4294901760
    %3430 = vmatpush1.msra.mxu0 %v3429
    %3431 = vmatprep.subr.mxu0 0.0
    %v3432 = vand.u32 %v2729, 4294901760
    %v3433 = vsub.f32 %v2729, %v3432
    %v3434 = vand.u32 %v3433, 4294901760
    %3435 = vmatpush1.msra.mxu0 %v3434
    %3436 = vmatprep.subr.mxu0 0.0
    %v3437 = vand.u32 %v2730, 4294901760
    %v3438 = vsub.f32 %v2730, %v3437
    %v3439 = vand.u32 %v3438, 4294901760
    %3440 = vmatpush1.msra.mxu0 %v3439
    %3441 = vmatprep.subr.mxu0 0.0
    %v3442 = vand.u32 %v2731, 4294901760
    %v3443 = vsub.f32 %v2731, %v3442
    %v3444 = vand.u32 %v3443, 4294901760
    %3445 = vmatpush1.msra.mxu0 %v3444
    %3446 = vmatprep.subr.mxu0 0.0
    %v3447 = vand.u32 %v2732, 4294901760
    %v3448 = vsub.f32 %v2732, %v3447
    %v3449 = vand.u32 %v3448, 4294901760
    %3450 = vmatpush1.msra.mxu0 %v3449
    %3451 = vmatprep.subr.mxu0 0.0
    %v3452 = vand.u32 %v2733, 4294901760
    %v3453 = vsub.f32 %v2733, %v3452
    %v3454 = vand.u32 %v3453, 4294901760
    %3455 = vmatpush1.msra.mxu0 %v3454
    %3456 = vmatprep.subr.mxu0 0.0
    %v3457 = vand.u32 %v2734, 4294901760
    %v3458 = vsub.f32 %v2734, %v3457
    %v3459 = vand.u32 %v3458, 4294901760
    %3460 = vmatpush1.msra.mxu0 %v3459
    %3461 = vmatprep.subr.mxu0 0.0
    %v3462 = vand.u32 %v2735, 4294901760
    %v3463 = vsub.f32 %v2735, %v3462
    %v3464 = vand.u32 %v3463, 4294901760
    %3465 = vmatpush1.msra.mxu0 %v3464
    %3466 = vmatprep.subr.mxu0 0.0
    %v3467 = vand.u32 %v2736, 4294901760
    %v3468 = vsub.f32 %v2736, %v3467
    %v3469 = vand.u32 %v3468, 4294901760
    %3470 = vmatpush1.msra.mxu0 %v3469
    %3471 = vmatprep.subr.mxu0 0.0
    %v3472 = vand.u32 %v2737, 4294901760
    %v3473 = vsub.f32 %v2737, %v3472
    %v3474 = vand.u32 %v3473, 4294901760
    %3475 = vmatpush1.msra.mxu0 %v3474
    %3476 = vmatprep.subr.mxu0 0.0
    %v3477 = vand.u32 %v2738, 4294901760
    %v3478 = vsub.f32 %v2738, %v3477
    %v3479 = vand.u32 %v3478, 4294901760
    %3480 = vmatpush1.msra.mxu0 %v3479
    %3481 = vmatprep.subr.mxu0 0.0
    %v3482 = vand.u32 %v2739, 4294901760
    %v3483 = vsub.f32 %v2739, %v3482
    %v3484 = vand.u32 %v3483, 4294901760
    %3485 = vmatpush1.msra.mxu0 %v3484
    %3486 = vmatprep.subr.mxu0 0.0
    %v3487 = vand.u32 %v2740, 4294901760
    %v3488 = vsub.f32 %v2740, %v3487
    %v3489 = vand.u32 %v3488, 4294901760
    %3490 = vmatpush1.msra.mxu0 %v3489
    %v3491 = vand.u32 %v16, 4294901760
    %3492 = vmatprep.mubr.f32.mxu0 %v3491
    %v3493 = vand.u32 %v15, 4294901760
    %3494 = vmatmul.mubr.f32.gmra.mrb[0].mxu0 %v3493
    %v3495 = vpop.f32.mrb[0].mxu0
    %v3496 = vadd.f32 %v3328, %v3495
    %v3497 = vpop.f32.mrb[0].mxu0
    %3498 = vdwg.mxu0
    %3499 = vmatprep.subr.mxu0 0.0
    %v3500 = vand.u32 %v2709, 4294901760
    %3501 = vmatpush1.msra.mxu0 %v3500
    %3502 = vmatprep.subr.mxu0 0.0
    %v3503 = vand.u32 %v2710, 4294901760
    %3504 = vmatpush1.msra.mxu0 %v3503
    %3505 = vmatprep.subr.mxu0 0.0
    %v3506 = vand.u32 %v2711, 4294901760
    %3507 = vmatpush1.msra.mxu0 %v3506
    %3508 = vmatprep.subr.mxu0 0.0
    %v3509 = vand.u32 %v2712, 4294901760
    %3510 = vmatpush1.msra.mxu0 %v3509
    %3511 = vmatprep.subr.mxu0 0.0
    %v3512 = vand.u32 %v2713, 4294901760
    %3513 = vmatpush1.msra.mxu0 %v3512
    %3514 = vmatprep.subr.mxu0 0.0
    %v3515 = vand.u32 %v2714, 4294901760
    %3516 = vmatpush1.msra.mxu0 %v3515
    %3517 = vmatprep.subr.mxu0 0.0
    %v3518 = vand.u32 %v2715, 4294901760
    %3519 = vmatpush1.msra.mxu0 %v3518
    %3520 = vmatprep.subr.mxu0 0.0
    %v3521 = vand.u32 %v2716, 4294901760
    %3522 = vmatpush1.msra.mxu0 %v3521
    %3523 = vmatprep.subr.mxu0 0.0
    %v3524 = vand.u32 %v2717, 4294901760
    %3525 = vmatpush1.msra.mxu0 %v3524
    %3526 = vmatprep.subr.mxu0 0.0
    %v3527 = vand.u32 %v2718, 4294901760
    %3528 = vmatpush1.msra.mxu0 %v3527
    %3529 = vmatprep.subr.mxu0 0.0
    %v3530 = vand.u32 %v2719, 4294901760
    %3531 = vmatpush1.msra.mxu0 %v3530
    %3532 = vmatprep.subr.mxu0 0.0
    %v3533 = vand.u32 %v2720, 4294901760
    %3534 = vmatpush1.msra.mxu0 %v3533
    %3535 = vmatprep.subr.mxu0 0.0
    %v3536 = vand.u32 %v2721, 4294901760
    %3537 = vmatpush1.msra.mxu0 %v3536
    %3538 = vmatprep.subr.mxu0 0.0
    %v3539 = vand.u32 %v2722, 4294901760
    %3540 = vmatpush1.msra.mxu0 %v3539
    %3541 = vmatprep.subr.mxu0 0.0
    %v3542 = vand.u32 %v2723, 4294901760
    %3543 = vmatpush1.msra.mxu0 %v3542
    %3544 = vmatprep.subr.mxu0 0.0
    %v3545 = vand.u32 %v2724, 4294901760
    %3546 = vmatpush1.msra.mxu0 %v3545
    %3547 = vmatprep.subr.mxu0 0.0
    %v3548 = vand.u32 %v2725, 4294901760
    %3549 = vmatpush1.msra.mxu0 %v3548
    %3550 = vmatprep.subr.mxu0 0.0
    %v3551 = vand.u32 %v2726, 4294901760
    %3552 = vmatpush1.msra.mxu0 %v3551
    %3553 = vmatprep.subr.mxu0 0.0
    %v3554 = vand.u32 %v2727, 4294901760
    %3555 = vmatpush1.msra.mxu0 %v3554
    %3556 = vmatprep.subr.mxu0 0.0
    %v3557 = vand.u32 %v2728, 4294901760
    %3558 = vmatpush1.msra.mxu0 %v3557
    %3559 = vmatprep.subr.mxu0 0.0
    %v3560 = vand.u32 %v2729, 4294901760
    %3561 = vmatpush1.msra.mxu0 %v3560
    %3562 = vmatprep.subr.mxu0 0.0
    %v3563 = vand.u32 %v2730, 4294901760
    %3564 = vmatpush1.msra.mxu0 %v3563
    %3565 = vmatprep.subr.mxu0 0.0
    %v3566 = vand.u32 %v2731, 4294901760
    %3567 = vmatpush1.msra.mxu0 %v3566
    %3568 = vmatprep.subr.mxu0 0.0
    %v3569 = vand.u32 %v2732, 4294901760
    %3570 = vmatpush1.msra.mxu0 %v3569
    %3571 = vmatprep.subr.mxu0 0.0
    %v3572 = vand.u32 %v2733, 4294901760
    %3573 = vmatpush1.msra.mxu0 %v3572
    %3574 = vmatprep.subr.mxu0 0.0
    %v3575 = vand.u32 %v2734, 4294901760
    %3576 = vmatpush1.msra.mxu0 %v3575
    %3577 = vmatprep.subr.mxu0 0.0
    %v3578 = vand.u32 %v2735, 4294901760
    %3579 = vmatpush1.msra.mxu0 %v3578
    %3580 = vmatprep.subr.mxu0 0.0
    %v3581 = vand.u32 %v2736, 4294901760
    %3582 = vmatpush1.msra.mxu0 %v3581
    %3583 = vmatprep.subr.mxu0 0.0
    %v3584 = vand.u32 %v2737, 4294901760
    %3585 = vmatpush1.msra.mxu0 %v3584
    %3586 = vmatprep.subr.mxu0 0.0
    %v3587 = vand.u32 %v2738, 4294901760
    %3588 = vmatpush1.msra.mxu0 %v3587
    %3589 = vmatprep.subr.mxu0 0.0
    %v3590 = vand.u32 %v2739, 4294901760
    %3591 = vmatpush1.msra.mxu0 %v3590
    %3592 = vmatprep.subr.mxu0 0.0
    %v3593 = vand.u32 %v2740, 4294901760
    %3594 = vmatpush1.msra.mxu0 %v3593
    %v3595 = vand.u32 %v16, 4294901760
    %3596 = vmatprep.mubr.f32.mxu0 %v3595
    %v3597 = vand.u32 %v15, 4294901760
    %3598 = vmatmul.mubr.f32.gmra.mrb[0].mxu0 %v3597
    %v3599 = vpop.f32.mrb[0].mxu0
    %v3600 = vadd.f32 %v3496, %v3599
    %v3601 = vpop.f32.mrb[0].mxu0
    %3602 = vdwg.mxu0
    %vm3603 = vcmp.gt.f32.partialorder %v3600, %v2705
    %v3604 = vsel %vm3603, %v3600, %v2705
    %v3605 = vsel %vm3603, 1.0, %v2706
    %v3606 = vsel %vm3603, 1.0, %v2707
    %v3607 = vld [vmem:[%s2] sm:$0x1]
    %v3608 = vld [vmem:[%s2 + $0x1] sm:$0x1]
    %v3609 = vlaneseq
    %v3610 = vshrl.u32 %v3609, 7
    %v3611 = vsub.s32 0, %v3610
    %v3612 = vrot.slane %v3607, %v3611
    %v3613 = vadd.f32 %v3612, %v3605
    %v3614 = vmul.f32 %v3613, 0.13333334
    %v3615 = vsub.f32 %v3614, 1.0
    %v3616 = vlaneseq
    %v3617 = vshrl.u32 %v3616, 7
    %v3618 = vsub.s32 0, %v3617
    %v3619 = vrot.slane %v3608, %v3618
    %v3620 = vadd.f32 %v3619, %v3606
    %v3621 = vmul.f32 %v3620, 0.13333334
    %v3622 = vsub.f32 %v3621, 1.0
    %vm3623 = vcmask 523264
    %3624 = vst.msk [vmem:[#allocation2] sm:$0xff] %vm3623, %v3604
    %3626 = vrot.lane.b32.xlu0 %v3615, 64
    %v3627 = vpop.permute.xlu0 %3626
    %vm3629 = vcmask 1048064
    %3630 = vst.msk [vmem:[#allocation2] sm:$0xff] %vm3629, %v3627
    %3631 = vst.msk [vmem:[#allocation2 + $0x8] sm:$0xff] %vm3623, %v3622
    %v3632 = vmul.f32 %v3615, %v3615
    %v3633 = vmul.f32 %v3622, %v3622
    %v3634 = vadd.f32 %v3632, %v3633
    %v3635 = vrsqrt.pop %v3634
    %v3636 = vmul.f32 %v3634, %v3635
    %vm3637 = vcmp.eq.f32.partialorder %v3634, inf
    %v3638 = vsel %vm3637, %v3634, %v3636
    %vm3639 = vcmp.eq.f32.partialorder %v3634, 0.0
    %v3640 = vand.u32 %v3634, 2147483648
    %v3641 = vsel %vm3639, %v3640, %v3638
    %3643 = vrot.lane.b32.xlu0 %v3641, 64
    %v3644 = vpop.permute.xlu0 %3643
    %3646 = vst.msk [vmem:[#allocation2 + $0x8] sm:$0xff] %vm3629, %v3644
    // Predicated region
    $region14: #{tpu_custom_call.1} parent=1 // pred_check
      _
    $region15: #{tpu_custom_call.1} parent=1 // pred_check_branch
      %3648 = sbr.rel (0) target = $region17
    $region16: #{tpu_custom_call.1} parent=1 // pred_region
      %s3650 = ssub.s32 256, 256
      %3651 = vsyncadd [#allocation3], %s3650
      %s3653 = sshll.u32 [#allocation2], 4
      %s3654 = int_to_ptr.vmem [resolvable:$true] %s3653
      %3656 = dma.vmem_to_hbm [thread:$0]  %s3654, 256, %s3, [#allocation3]
    $region17: #{tpu_custom_call.1} parent=1 // pred_fallthru
      _
    // Predicated region
    $region18: #{tpu_custom_call.1} parent=1 // pred_check
      _
    $region19: #{tpu_custom_call.1} parent=1 // pred_check_branch
      %3658 = sbr.rel (0) target = $region21
    $region20: #{tpu_custom_call.1} parent=1 // pred_region
      %3659 = dma.done [#allocation3], 256
    $region21: #{tpu_custom_call.1} parent=1 // pred_fallthru
      _
    %3660 = vsyncpa [#allocation3], 1

</llo_original>
